<compile_context>
chip_gen: v6e
topology: v6e:2x2x1
jax: 0.10.0
libtpu: 0.0.40
codegen_flags: <defaults>
</compile_context>

<pallas_src>
import jax
import jax.numpy as jnp
from jax import lax
from jax.experimental import pallas as pl
from jax.experimental.pallas import tpu as pltpu


def cbam_kernel(
    x_ref,       # (1, H, W, C)  VMEM  input tile (one batch element), NHWC
    fw1_ref,     # (C, Cr)       VMEM  bf16  fc1 weight
    fb1_ref,     # (1, Cr)       VMEM  f32   fc1 bias
    fw2_ref,     # (Cr, C)       VMEM  bf16  fc2 weight
    fb2_ref,     # (1, C)        VMEM  f32   fc2 bias
    w7_ref,      # (98,)         SMEM  f32   7x7 conv, idx = (ky*7+kx)*2 + {0:avg,1:max}
    b7_ref,      # (1,)          SMEM  f32   7x7 conv bias
    out_ref,     # (1, H, W, C)  VMEM
    pad_ref,     # (2, H+6, W+6) VMEM  f32 scratch: zero-padded [mean_c, max_c]
):
    _, H, W, C = x_ref.shape

    # ---------------- channel attention ----------------
    xm = x_ref[0].astype(jnp.float32).reshape(H * W, C)
    avg_c = jnp.mean(xm, axis=0, keepdims=True)              # (1, C)
    max_c = jnp.max(xm, axis=0, keepdims=True)               # (1, C)
    pooled = jnp.concatenate([avg_c, max_c], axis=0)         # (2, C) -> one MLP pass

    a = jnp.dot(pooled.astype(jnp.bfloat16), fw1_ref[...],
                preferred_element_type=jnp.float32) + fb1_ref[...]
    a = jnp.maximum(a, 0.0)
    b = jnp.dot(a.astype(jnp.bfloat16), fw2_ref[...],
                preferred_element_type=jnp.float32) + fb2_ref[...]
    # avg-branch + max-branch (bias applied in both branches, matching the
    # PyTorch module which runs fc1/fc2 with bias on each branch).
    att_c = jax.nn.sigmoid(b[0:1, :] + b[1:2, :])            # (1, C)

    # Re-read x (already VMEM resident) instead of holding it live from the top.
    h = x_ref[0].astype(jnp.float32) * att_c[None, :, :]     # (H, W, C)

    # ---------------- spatial attention (7x7 conv, zero pad 3) ----------------
    pad_ref[...] = jnp.zeros_like(pad_ref)
    pad_ref[0, 3:3 + H, 3:3 + W] = jnp.mean(h, axis=-1)      # (H, W)
    pad_ref[1, 3:3 + H, 3:3 + W] = jnp.max(h, axis=-1)       # (H, W)

    sp = jnp.zeros((H, W), jnp.float32)
    for ky in range(7):
        for kx in range(7):
            k = ky * 7 + kx
            sp = (sp
                  + pad_ref[0, ky:ky + H, kx:kx + W] * w7_ref[2 * k]
                  + pad_ref[1, ky:ky + H, kx:kx + W] * w7_ref[2 * k + 1])
    att_s = jax.nn.sigmoid(sp + b7_ref[0])                   # (H, W)

    out_ref[0] = (h * att_s[:, :, None]).astype(out_ref.dtype)


def cbam(x_nchw, params):
    """CBAMModule forward. x_nchw: (N, C, H, W) float32. params: see make_params."""
    fw1, fb1, fw2, fb2, w7, b7 = params
    N, C, H, W = x_nchw.shape
    x = jnp.transpose(x_nchw, (0, 2, 3, 1)).astype(jnp.float32)   # NHWC

    vmem = pltpu.MemorySpace.VMEM
    smem = pltpu.MemorySpace.SMEM
    out = pl.pallas_call(
        cbam_kernel,
        out_shape=jax.ShapeDtypeStruct((N, H, W, C), jnp.float32),
        grid=(N,),
        in_specs=[
            pl.BlockSpec((1, H, W, C), lambda n: (n, 0, 0, 0)),   # x (pipelined)
            pl.BlockSpec(memory_space=vmem),                       # fw1 (bf16)
            pl.BlockSpec(memory_space=vmem),                       # fb1
            pl.BlockSpec(memory_space=vmem),                       # fw2 (bf16)
            pl.BlockSpec(memory_space=vmem),                       # fb2
            pl.BlockSpec(memory_space=smem),                       # w7
            pl.BlockSpec(memory_space=smem),                       # b7
        ],
        out_specs=pl.BlockSpec((1, H, W, C), lambda n: (n, 0, 0, 0)),
        scratch_shapes=[pltpu.VMEM((2, H + 6, W + 6), jnp.float32)],
        compiler_params=pltpu.CompilerParams(
            dimension_semantics=("parallel",),        # megacore split over batch
            vmem_limit_bytes=48 * 1024 * 1024),       # explicit, fits v5e/v6e/v7x
    )(x, fw1.astype(jnp.bfloat16), fb1, fw2.astype(jnp.bfloat16), fb2, w7, b7)
    return jnp.transpose(out, (0, 3, 1, 2))           # back to NCHW


def make_params(key, channels, reduction):
    C = channels
    Cr = C // reduction
    ks = jax.random.split(key, 6)

    def nrm(k, shape, scale=0.1):
        return scale * jax.random.normal(k, shape, jnp.float32)

    fw1 = nrm(ks[0], (C, Cr))      # fc1: Conv2d(C, Cr, 1) weight as (C, Cr)
    fb1 = nrm(ks[1], (1, Cr))
    fw2 = nrm(ks[2], (Cr, C))      # fc2: Conv2d(Cr, C, 1) weight as (Cr, C)
    fb2 = nrm(ks[3], (1, C))
    w7 = nrm(ks[4], (98,))         # conv_after_concat: (7,7,2,1) HWIO, flattened
    b7 = nrm(ks[5], (1,))
    return (fw1, fb1, fw2, fb2, w7, b7)


def reference(x_nchw, params):
    """Pure-JAX (XLA) reference with identical parameterization, for validation."""
    fw1, fb1, fw2, fb2, w7, b7 = params
    with jax.default_matmul_precision("highest"):
        x = jnp.transpose(x_nchw, (0, 2, 3, 1)).astype(jnp.float32)   # NHWC
        avg = jnp.mean(x, axis=(1, 2))                                # (N, C)
        mx = jnp.max(x, axis=(1, 2))                                  # (N, C)

        def fc(v):
            a = jnp.maximum(v @ fw1 + fb1.reshape(-1), 0.0)
            return a @ fw2 + fb2.reshape(-1)

        att_c = jax.nn.sigmoid(fc(avg) + fc(mx))                      # (N, C)
        h = x * att_c[:, None, None, :]
        cat = jnp.concatenate([jnp.mean(h, axis=-1, keepdims=True),
                               jnp.max(h, axis=-1, keepdims=True)], axis=-1)
        sp = lax.conv_general_dilated(
            cat, w7.reshape(7, 7, 2, 1), (1, 1), "SAME",
            dimension_numbers=("NHWC", "HWIO", "NHWC")) + b7[0]
        out = h * jax.nn.sigmoid(sp)
        return jnp.transpose(out, (0, 3, 1, 2))


if __name__ == "__main__":
    key = jax.random.PRNGKey(0)
    kx, kp = jax.random.split(key)
    N, C, H, W = 2, 128, 16, 16     # channels lane-aligned (C=128)
    reduction = 16
    x = 0.5 * jax.random.normal(kx, (N, C, H, W), jnp.float32)
    params = make_params(kp, C, reduction)

    out = jax.block_until_ready(cbam(x, params))
    ref = reference(x, params)
    assert out.shape == ref.shape == (N, C, H, W)
    if not jnp.allclose(out, ref, rtol=2e-2, atol=2e-2):
        raise AssertionError(
            "Pallas kernel mismatch vs reference, max abs diff = %e"
            % float(jnp.max(jnp.abs(out - ref))))
    print("KERNEL_OK")
</pallas_src>

<mosaic_0001>
module attributes {stable_mosaic.version = 11 : i64} {
  func.func @cbam_kernel(%arg0: i32, %arg1: memref<1x16x16x128xf32, #tpu.memory_space<vmem>>, %arg2: memref<128x8xbf16, #tpu.memory_space<vmem>>, %arg3: memref<1x8xf32, #tpu.memory_space<vmem>>, %arg4: memref<8x128xbf16, #tpu.memory_space<vmem>>, %arg5: memref<1x128xf32, #tpu.memory_space<vmem>>, %arg6: memref<98xf32, #tpu.memory_space<smem>>, %arg7: memref<1xf32, #tpu.memory_space<smem>>, %arg8: memref<1x16x16x128xf32, #tpu.memory_space<vmem>>, %arg9: memref<2x22x22xf32, #tpu.memory_space<vmem>>) attributes {dimension_semantics = [#tpu.dimension_semantics<parallel>], iteration_bounds = array<i64: 2>, scalar_prefetch = 0 : i64, scratch_operands = 1 : i64, tpu.core_type = #tpu.core_type<tc>, window_params = [{transform_indices = @transform_0, window_bounds = array<i64: 1, 16, 16, 128>}, {pipeline_mode = #tpu.pipeline_mode<synchronous>, transform_indices = @transform_1, window_bounds = array<i64: 128, 8>}, {pipeline_mode = #tpu.pipeline_mode<synchronous>, transform_indices = @transform_2, window_bounds = array<i64: 1, 8>}, {pipeline_mode = #tpu.pipeline_mode<synchronous>, transform_indices = @transform_3, window_bounds = array<i64: 8, 128>}, {pipeline_mode = #tpu.pipeline_mode<synchronous>, transform_indices = @transform_4, window_bounds = array<i64: 1, 128>}, {transform_indices = @transform_5, window_bounds = array<i64: 98>}, {transform_indices = @transform_6, window_bounds = array<i64: 1>}, {transform_indices = @transform_7, window_bounds = array<i64: 1, 16, 16, 128>}]} {
    %c0 = arith.constant 0 : index
    %c0_0 = arith.constant 0 : index
    %c0_1 = arith.constant 0 : index
    %c0_2 = arith.constant 0 : index
    %0 = vector.load %arg1[%c0, %c0_0, %c0_1, %c0_2] : memref<1x16x16x128xf32, #tpu.memory_space<vmem>>, vector<1x16x16x128xf32>
    %1 = vector.shape_cast %0 : vector<1x16x16x128xf32> to vector<16x16x128xf32>
    %2 = vector.shape_cast %1 : vector<16x16x128xf32> to vector<256x128xf32>
    %cst = arith.constant dense<0.000000e+00> : vector<128xf32>
    %3 = vector.multi_reduction <add>, %2, %cst [0] : vector<256x128xf32> to vector<128xf32>
    %4 = vector.shape_cast %3 : vector<128xf32> to vector<1x128xf32>
    %cst_3 = arith.constant 2.560000e+02 : f32
    %5 = vector.broadcast %cst_3 : f32 to vector<1x128xf32>
    %6 = arith.divf %4, %5 : vector<1x128xf32>
    %cst_4 = arith.constant dense<0xFF800000> : vector<128xf32>
    %7 = vector.multi_reduction <maximumf>, %2, %cst_4 [0] : vector<256x128xf32> to vector<128xf32>
    %8 = vector.shape_cast %7 : vector<128xf32> to vector<1x128xf32>
    %9 = tpu.concatenate %6, %8 in 0 : vector<1x128xf32>, vector<1x128xf32> -> vector<2x128xf32>
    %10 = arith.truncf %9 : vector<2x128xf32> to vector<2x128xbf16>
    %c0_5 = arith.constant 0 : index
    %c0_6 = arith.constant 0 : index
    %11 = vector.load %arg2[%c0_5, %c0_6] : memref<128x8xbf16, #tpu.memory_space<vmem>>, vector<128x8xbf16>
    %cst_7 = arith.constant dense<0.000000e+00> : vector<2x8xf32>
    %12 = tpu.matmul %10, %11, %cst_7 {dimension_numbers = #tpu.dot_dimension_numbers<[1], [0], [0], [1], [0, 0, 1, 1], [], []>} : vector<2x128xbf16>, vector<128x8xbf16>, vector<2x8xf32> -> vector<2x8xf32>
    %c0_8 = arith.constant 0 : index
    %c0_9 = arith.constant 0 : index
    %13 = vector.load %arg3[%c0_8, %c0_9] : memref<1x8xf32, #tpu.memory_space<vmem>>, vector<1x8xf32>
    %14 = vector.broadcast %13 : vector<1x8xf32> to vector<2x8xf32>
    %15 = arith.addf %12, %14 : vector<2x8xf32>
    %cst_10 = arith.constant 0.000000e+00 : f32
    %16 = vector.broadcast %cst_10 : f32 to vector<2x8xf32>
    %17 = arith.maximumf %15, %16 : vector<2x8xf32>
    %18 = arith.truncf %17 : vector<2x8xf32> to vector<2x8xbf16>
    %c0_11 = arith.constant 0 : index
    %c0_12 = arith.constant 0 : index
    %19 = vector.load %arg4[%c0_11, %c0_12] : memref<8x128xbf16, #tpu.memory_space<vmem>>, vector<8x128xbf16>
    %cst_13 = arith.constant dense<0.000000e+00> : vector<2x128xf32>
    %20 = tpu.matmul %18, %19, %cst_13 {dimension_numbers = #tpu.dot_dimension_numbers<[1], [0], [0], [1], [0, 0, 1, 1], [], []>} : vector<2x8xbf16>, vector<8x128xbf16>, vector<2x128xf32> -> vector<2x128xf32>
    %c0_14 = arith.constant 0 : index
    %c0_15 = arith.constant 0 : index
    %21 = vector.load %arg5[%c0_14, %c0_15] : memref<1x128xf32, #tpu.memory_space<vmem>>, vector<1x128xf32>
    %22 = vector.broadcast %21 : vector<1x128xf32> to vector<2x128xf32>
    %23 = arith.addf %20, %22 : vector<2x128xf32>
    %24 = vector.extract_strided_slice %23 {offsets = [0, 0], sizes = [1, 128], strides = [1, 1]} : vector<2x128xf32> to vector<1x128xf32>
    %25 = vector.extract_strided_slice %23 {offsets = [1, 0], sizes = [1, 128], strides = [1, 1]} : vector<2x128xf32> to vector<1x128xf32>
    %26 = arith.addf %24, %25 : vector<1x128xf32>
    %27 = arith.negf %26 : vector<1x128xf32>
    %28 = math.exp %27 : vector<1x128xf32>
    %cst_16 = arith.constant 1.000000e+00 : f32
    %29 = vector.broadcast %cst_16 : f32 to vector<1x128xf32>
    %30 = arith.addf %29, %28 : vector<1x128xf32>
    %31 = arith.divf %29, %30 : vector<1x128xf32>
    %c0_17 = arith.constant 0 : index
    %c0_18 = arith.constant 0 : index
    %c0_19 = arith.constant 0 : index
    %c0_20 = arith.constant 0 : index
    %32 = vector.load %arg1[%c0_17, %c0_18, %c0_19, %c0_20] : memref<1x16x16x128xf32, #tpu.memory_space<vmem>>, vector<1x16x16x128xf32>
    %33 = vector.shape_cast %32 : vector<1x16x16x128xf32> to vector<16x16x128xf32>
    %34 = vector.shape_cast %31 : vector<1x128xf32> to vector<1x1x128xf32>
    %35 = vector.broadcast %34 : vector<1x1x128xf32> to vector<16x16x128xf32>
    %36 = arith.mulf %33, %35 : vector<16x16x128xf32>
    %cst_21 = arith.constant 0.000000e+00 : f32
    %37 = vector.broadcast %cst_21 : f32 to vector<2x22x22xf32>
    %c0_22 = arith.constant 0 : index
    %c0_23 = arith.constant 0 : index
    %c0_24 = arith.constant 0 : index
    %38 = vector.load %arg9[%c0_22, %c0_23, %c0_24] : memref<2x22x22xf32, #tpu.memory_space<vmem>>, vector<2x22x22xf32>
    tpu.vector_store %arg9[%c0_22, %c0_23, %c0_24], %37 {strides = array<i32>} : memref<2x22x22xf32, #tpu.memory_space<vmem>>, vector<2x22x22xf32>,
    %cst_25 = arith.constant dense<0.000000e+00> : vector<16x16xf32>
    %39 = vector.multi_reduction <add>, %36, %cst_25 [2] : vector<16x16x128xf32> to vector<16x16xf32>
    %cst_26 = arith.constant 1.280000e+02 : f32
    %40 = vector.broadcast %cst_26 : f32 to vector<16x16xf32>
    %41 = arith.divf %39, %40 : vector<16x16xf32>
    %c0_27 = arith.constant 0 : index
    %c3 = arith.constant 3 : index
    %c3_28 = arith.constant 3 : index
    %42 = vector.load %arg9[%c0_27, %c3, %c3_28] : memref<2x22x22xf32, #tpu.memory_space<vmem>>, vector<1x16x16xf32>
    %43 = vector.shape_cast %42 : vector<1x16x16xf32> to vector<16x16xf32>
    %44 = vector.shape_cast %41 : vector<16x16xf32> to vector<1x16x16xf32>
    tpu.vector_store %arg9[%c0_27, %c3, %c3_28], %44 {strides = array<i32>} : memref<2x22x22xf32, #tpu.memory_space<vmem>>, vector<1x16x16xf32>,
    %cst_29 = arith.constant dense<0xFF800000> : vector<16x16xf32>
    %45 = vector.multi_reduction <maximumf>, %36, %cst_29 [2] : vector<16x16x128xf32> to vector<16x16xf32>
    %c1 = arith.constant 1 : index
    %c3_30 = arith.constant 3 : index
    %c3_31 = arith.constant 3 : index
    %46 = vector.load %arg9[%c1, %c3_30, %c3_31] : memref<2x22x22xf32, #tpu.memory_space<vmem>>, vector<1x16x16xf32>
    %47 = vector.shape_cast %46 : vector<1x16x16xf32> to vector<16x16xf32>
    %48 = vector.shape_cast %45 : vector<16x16xf32> to vector<1x16x16xf32>
    tpu.vector_store %arg9[%c1, %c3_30, %c3_31], %48 {strides = array<i32>} : memref<2x22x22xf32, #tpu.memory_space<vmem>>, vector<1x16x16xf32>,
    %cst_32 = arith.constant 0.000000e+00 : f32
    %49 = vector.broadcast %cst_32 : f32 to vector<16x16xf32>
    %c0_33 = arith.constant 0 : index
    %c0_34 = arith.constant 0 : index
    %c0_35 = arith.constant 0 : index
    %50 = vector.load %arg9[%c0_33, %c0_34, %c0_35] : memref<2x22x22xf32, #tpu.memory_space<vmem>>, vector<1x16x16xf32>
    %51 = vector.shape_cast %50 : vector<1x16x16xf32> to vector<16x16xf32>
    %c0_36 = arith.constant 0 : index
    %52 = memref.load %arg6[%c0_36] : memref<98xf32, #tpu.memory_space<smem>>
    %53 = vector.broadcast %52 : f32 to vector<16x16xf32>
    %54 = arith.mulf %51, %53 : vector<16x16xf32>
    %55 = arith.addf %49, %54 : vector<16x16xf32>
    %c1_37 = arith.constant 1 : index
    %c0_38 = arith.constant 0 : index
    %c0_39 = arith.constant 0 : index
    %56 = vector.load %arg9[%c1_37, %c0_38, %c0_39] : memref<2x22x22xf32, #tpu.memory_space<vmem>>, vector<1x16x16xf32>
    %57 = vector.shape_cast %56 : vector<1x16x16xf32> to vector<16x16xf32>
    %c1_40 = arith.constant 1 : index
    %58 = memref.load %arg6[%c1_40] : memref<98xf32, #tpu.memory_space<smem>>
    %59 = vector.broadcast %58 : f32 to vector<16x16xf32>
    %60 = arith.mulf %57, %59 : vector<16x16xf32>
    %61 = arith.addf %55, %60 : vector<16x16xf32>
    %c0_41 = arith.constant 0 : index
    %c0_42 = arith.constant 0 : index
    %c1_43 = arith.constant 1 : index
    %62 = vector.load %arg9[%c0_41, %c0_42, %c1_43] : memref<2x22x22xf32, #tpu.memory_space<vmem>>, vector<1x16x16xf32>
    %63 = vector.shape_cast %62 : vector<1x16x16xf32> to vector<16x16xf32>
    %c2 = arith.constant 2 : index
    %64 = memref.load %arg6[%c2] : memref<98xf32, #tpu.memory_space<smem>>
    %65 = vector.broadcast %64 : f32 to vector<16x16xf32>
    %66 = arith.mulf %63, %65 : vector<16x16xf32>
    %67 = arith.addf %61, %66 : vector<16x16xf32>
    %c1_44 = arith.constant 1 : index
    %c0_45 = arith.constant 0 : index
    %c1_46 = arith.constant 1 : index
    %68 = vector.load %arg9[%c1_44, %c0_45, %c1_46] : memref<2x22x22xf32, #tpu.memory_space<vmem>>, vector<1x16x16xf32>
    %69 = vector.shape_cast %68 : vector<1x16x16xf32> to vector<16x16xf32>
    %c3_47 = arith.constant 3 : index
    %70 = memref.load %arg6[%c3_47] : memref<98xf32, #tpu.memory_space<smem>>
    %71 = vector.broadcast %70 : f32 to vector<16x16xf32>
    %72 = arith.mulf %69, %71 : vector<16x16xf32>
    %73 = arith.addf %67, %72 : vector<16x16xf32>
    %c0_48 = arith.constant 0 : index
    %c0_49 = arith.constant 0 : index
    %c2_50 = arith.constant 2 : index
    %74 = vector.load %arg9[%c0_48, %c0_49, %c2_50] : memref<2x22x22xf32, #tpu.memory_space<vmem>>, vector<1x16x16xf32>
    %75 = vector.shape_cast %74 : vector<1x16x16xf32> to vector<16x16xf32>
    %c4 = arith.constant 4 : index
    %76 = memref.load %arg6[%c4] : memref<98xf32, #tpu.memory_space<smem>>
    %77 = vector.broadcast %76 : f32 to vector<16x16xf32>
    %78 = arith.mulf %75, %77 : vector<16x16xf32>
    %79 = arith.addf %73, %78 : vector<16x16xf32>
    %c1_51 = arith.constant 1 : index
    %c0_52 = arith.constant 0 : index
    %c2_53 = arith.constant 2 : index
    %80 = vector.load %arg9[%c1_51, %c0_52, %c2_53] : memref<2x22x22xf32, #tpu.memory_space<vmem>>, vector<1x16x16xf32>
    %81 = vector.shape_cast %80 : vector<1x16x16xf32> to vector<16x16xf32>
    %c5 = arith.constant 5 : index
    %82 = memref.load %arg6[%c5] : memref<98xf32, #tpu.memory_space<smem>>
    %83 = vector.broadcast %82 : f32 to vector<16x16xf32>
    %84 = arith.mulf %81, %83 : vector<16x16xf32>
    %85 = arith.addf %79, %84 : vector<16x16xf32>
    %c0_54 = arith.constant 0 : index
    %c0_55 = arith.constant 0 : index
    %c3_56 = arith.constant 3 : index
    %86 = vector.load %arg9[%c0_54, %c0_55, %c3_56] : memref<2x22x22xf32, #tpu.memory_space<vmem>>, vector<1x16x16xf32>
    %87 = vector.shape_cast %86 : vector<1x16x16xf32> to vector<16x16xf32>
    %c6 = arith.constant 6 : index
    %88 = memref.load %arg6[%c6] : memref<98xf32, #tpu.memory_space<smem>>
    %89 = vector.broadcast %88 : f32 to vector<16x16xf32>
    %90 = arith.mulf %87, %89 : vector<16x16xf32>
    %91 = arith.addf %85, %90 : vector<16x16xf32>
    %c1_57 = arith.constant 1 : index
    %c0_58 = arith.constant 0 : index
    %c3_59 = arith.constant 3 : index
    %92 = vector.load %arg9[%c1_57, %c0_58, %c3_59] : memref<2x22x22xf32, #tpu.memory_space<vmem>>, vector<1x16x16xf32>
    %93 = vector.shape_cast %92 : vector<1x16x16xf32> to vector<16x16xf32>
    %c7 = arith.constant 7 : index
    %94 = memref.load %arg6[%c7] : memref<98xf32, #tpu.memory_space<smem>>
    %95 = vector.broadcast %94 : f32 to vector<16x16xf32>
    %96 = arith.mulf %93, %95 : vector<16x16xf32>
    %97 = arith.addf %91, %96 : vector<16x16xf32>
    %c0_60 = arith.constant 0 : index
    %c0_61 = arith.constant 0 : index
    %c4_62 = arith.constant 4 : index
    %98 = vector.load %arg9[%c0_60, %c0_61, %c4_62] : memref<2x22x22xf32, #tpu.memory_space<vmem>>, vector<1x16x16xf32>
    %99 = vector.shape_cast %98 : vector<1x16x16xf32> to vector<16x16xf32>
    %c8 = arith.constant 8 : index
    %100 = memref.load %arg6[%c8] : memref<98xf32, #tpu.memory_space<smem>>
    %101 = vector.broadcast %100 : f32 to vector<16x16xf32>
    %102 = arith.mulf %99, %101 : vector<16x16xf32>
    %103 = arith.addf %97, %102 : vector<16x16xf32>
    %c1_63 = arith.constant 1 : index
    %c0_64 = arith.constant 0 : index
    %c4_65 = arith.constant 4 : index
    %104 = vector.load %arg9[%c1_63, %c0_64, %c4_65] : memref<2x22x22xf32, #tpu.memory_space<vmem>>, vector<1x16x16xf32>
    %105 = vector.shape_cast %104 : vector<1x16x16xf32> to vector<16x16xf32>
    %c9 = arith.constant 9 : index
    %106 = memref.load %arg6[%c9] : memref<98xf32, #tpu.memory_space<smem>>
    %107 = vector.broadcast %106 : f32 to vector<16x16xf32>
    %108 = arith.mulf %105, %107 : vector<16x16xf32>
    %109 = arith.addf %103, %108 : vector<16x16xf32>
    %c0_66 = arith.constant 0 : index
    %c0_67 = arith.constant 0 : index
    %c5_68 = arith.constant 5 : index
    %110 = vector.load %arg9[%c0_66, %c0_67, %c5_68] : memref<2x22x22xf32, #tpu.memory_space<vmem>>, vector<1x16x16xf32>
    %111 = vector.shape_cast %110 : vector<1x16x16xf32> to vector<16x16xf32>
    %c10 = arith.constant 10 : index
    %112 = memref.load %arg6[%c10] : memref<98xf32, #tpu.memory_space<smem>>
    %113 = vector.broadcast %112 : f32 to vector<16x16xf32>
    %114 = arith.mulf %111, %113 : vector<16x16xf32>
    %115 = arith.addf %109, %114 : vector<16x16xf32>
    %c1_69 = arith.constant 1 : index
    %c0_70 = arith.constant 0 : index
    %c5_71 = arith.constant 5 : index
    %116 = vector.load %arg9[%c1_69, %c0_70, %c5_71] : memref<2x22x22xf32, #tpu.memory_space<vmem>>, vector<1x16x16xf32>
    %117 = vector.shape_cast %116 : vector<1x16x16xf32> to vector<16x16xf32>
    %c11 = arith.constant 11 : index
    %118 = memref.load %arg6[%c11] : memref<98xf32, #tpu.memory_space<smem>>
    %119 = vector.broadcast %118 : f32 to vector<16x16xf32>
    %120 = arith.mulf %117, %119 : vector<16x16xf32>
    %121 = arith.addf %115, %120 : vector<16x16xf32>
    %c0_72 = arith.constant 0 : index
    %c0_73 = arith.constant 0 : index
    %c6_74 = arith.constant 6 : index
    %122 = vector.load %arg9[%c0_72, %c0_73, %c6_74] : memref<2x22x22xf32, #tpu.memory_space<vmem>>, vector<1x16x16xf32>
    %123 = vector.shape_cast %122 : vector<1x16x16xf32> to vector<16x16xf32>
    %c12 = arith.constant 12 : index
    %124 = memref.load %arg6[%c12] : memref<98xf32, #tpu.memory_space<smem>>
    %125 = vector.broadcast %124 : f32 to vector<16x16xf32>
    %126 = arith.mulf %123, %125 : vector<16x16xf32>
    %127 = arith.addf %121, %126 : vector<16x16xf32>
    %c1_75 = arith.constant 1 : index
    %c0_76 = arith.constant 0 : index
    %c6_77 = arith.constant 6 : index
    %128 = vector.load %arg9[%c1_75, %c0_76, %c6_77] : memref<2x22x22xf32, #tpu.memory_space<vmem>>, vector<1x16x16xf32>
    %129 = vector.shape_cast %128 : vector<1x16x16xf32> to vector<16x16xf32>
    %c13 = arith.constant 13 : index
    %130 = memref.load %arg6[%c13] : memref<98xf32, #tpu.memory_space<smem>>
    %131 = vector.broadcast %130 : f32 to vector<16x16xf32>
    %132 = arith.mulf %129, %131 : vector<16x16xf32>
    %133 = arith.addf %127, %132 : vector<16x16xf32>
    %c0_78 = arith.constant 0 : index
    %c1_79 = arith.constant 1 : index
    %c0_80 = arith.constant 0 : index
    %134 = vector.load %arg9[%c0_78, %c1_79, %c0_80] : memref<2x22x22xf32, #tpu.memory_space<vmem>>, vector<1x16x16xf32>
    %135 = vector.shape_cast %134 : vector<1x16x16xf32> to vector<16x16xf32>
    %c14 = arith.constant 14 : index
    %136 = memref.load %arg6[%c14] : memref<98xf32, #tpu.memory_space<smem>>
    %137 = vector.broadcast %136 : f32 to vector<16x16xf32>
    %138 = arith.mulf %135, %137 : vector<16x16xf32>
    %139 = arith.addf %133, %138 : vector<16x16xf32>
    %c1_81 = arith.constant 1 : index
    %c1_82 = arith.constant 1 : index
    %c0_83 = arith.constant 0 : index
    %140 = vector.load %arg9[%c1_81, %c1_82, %c0_83] : memref<2x22x22xf32, #tpu.memory_space<vmem>>, vector<1x16x16xf32>
    %141 = vector.shape_cast %140 : vector<1x16x16xf32> to vector<16x16xf32>
    %c15 = arith.constant 15 : index
    %142 = memref.load %arg6[%c15] : memref<98xf32, #tpu.memory_space<smem>>
    %143 = vector.broadcast %142 : f32 to vector<16x16xf32>
    %144 = arith.mulf %141, %143 : vector<16x16xf32>
    %145 = arith.addf %139, %144 : vector<16x16xf32>
    %c0_84 = arith.constant 0 : index
    %c1_85 = arith.constant 1 : index
    %c1_86 = arith.constant 1 : index
    %146 = vector.load %arg9[%c0_84, %c1_85, %c1_86] : memref<2x22x22xf32, #tpu.memory_space<vmem>>, vector<1x16x16xf32>
    %147 = vector.shape_cast %146 : vector<1x16x16xf32> to vector<16x16xf32>
    %c16 = arith.constant 16 : index
    %148 = memref.load %arg6[%c16] : memref<98xf32, #tpu.memory_space<smem>>
    %149 = vector.broadcast %148 : f32 to vector<16x16xf32>
    %150 = arith.mulf %147, %149 : vector<16x16xf32>
    %151 = arith.addf %145, %150 : vector<16x16xf32>
    %c1_87 = arith.constant 1 : index
    %c1_88 = arith.constant 1 : index
    %c1_89 = arith.constant 1 : index
    %152 = vector.load %arg9[%c1_87, %c1_88, %c1_89] : memref<2x22x22xf32, #tpu.memory_space<vmem>>, vector<1x16x16xf32>
    %153 = vector.shape_cast %152 : vector<1x16x16xf32> to vector<16x16xf32>
    %c17 = arith.constant 17 : index
    %154 = memref.load %arg6[%c17] : memref<98xf32, #tpu.memory_space<smem>>
    %155 = vector.broadcast %154 : f32 to vector<16x16xf32>
    %156 = arith.mulf %153, %155 : vector<16x16xf32>
    %157 = arith.addf %151, %156 : vector<16x16xf32>
    %c0_90 = arith.constant 0 : index
    %c1_91 = arith.constant 1 : index
    %c2_92 = arith.constant 2 : index
    %158 = vector.load %arg9[%c0_90, %c1_91, %c2_92] : memref<2x22x22xf32, #tpu.memory_space<vmem>>, vector<1x16x16xf32>
    %159 = vector.shape_cast %158 : vector<1x16x16xf32> to vector<16x16xf32>
    %c18 = arith.constant 18 : index
    %160 = memref.load %arg6[%c18] : memref<98xf32, #tpu.memory_space<smem>>
    %161 = vector.broadcast %160 : f32 to vector<16x16xf32>
    %162 = arith.mulf %159, %161 : vector<16x16xf32>
    %163 = arith.addf %157, %162 : vector<16x16xf32>
    %c1_93 = arith.constant 1 : index
    %c1_94 = arith.constant 1 : index
    %c2_95 = arith.constant 2 : index
    %164 = vector.load %arg9[%c1_93, %c1_94, %c2_95] : memref<2x22x22xf32, #tpu.memory_space<vmem>>, vector<1x16x16xf32>
    %165 = vector.shape_cast %164 : vector<1x16x16xf32> to vector<16x16xf32>
    %c19 = arith.constant 19 : index
    %166 = memref.load %arg6[%c19] : memref<98xf32, #tpu.memory_space<smem>>
    %167 = vector.broadcast %166 : f32 to vector<16x16xf32>
    %168 = arith.mulf %165, %167 : vector<16x16xf32>
    %169 = arith.addf %163, %168 : vector<16x16xf32>
    %c0_96 = arith.constant 0 : index
    %c1_97 = arith.constant 1 : index
    %c3_98 = arith.constant 3 : index
    %170 = vector.load %arg9[%c0_96, %c1_97, %c3_98] : memref<2x22x22xf32, #tpu.memory_space<vmem>>, vector<1x16x16xf32>
    %171 = vector.shape_cast %170 : vector<1x16x16xf32> to vector<16x16xf32>
    %c20 = arith.constant 20 : index
    %172 = memref.load %arg6[%c20] : memref<98xf32, #tpu.memory_space<smem>>
    %173 = vector.broadcast %172 : f32 to vector<16x16xf32>
    %174 = arith.mulf %171, %173 : vector<16x16xf32>
    %175 = arith.addf %169, %174 : vector<16x16xf32>
    %c1_99 = arith.constant 1 : index
    %c1_100 = arith.constant 1 : index
    %c3_101 = arith.constant 3 : index
    %176 = vector.load %arg9[%c1_99, %c1_100, %c3_101] : memref<2x22x22xf32, #tpu.memory_space<vmem>>, vector<1x16x16xf32>
    %177 = vector.shape_cast %176 : vector<1x16x16xf32> to vector<16x16xf32>
    %c21 = arith.constant 21 : index
    %178 = memref.load %arg6[%c21] : memref<98xf32, #tpu.memory_space<smem>>
    %179 = vector.broadcast %178 : f32 to vector<16x16xf32>
    %180 = arith.mulf %177, %179 : vector<16x16xf32>
    %181 = arith.addf %175, %180 : vector<16x16xf32>
    %c0_102 = arith.constant 0 : index
    %c1_103 = arith.constant 1 : index
    %c4_104 = arith.constant 4 : index
    %182 = vector.load %arg9[%c0_102, %c1_103, %c4_104] : memref<2x22x22xf32, #tpu.memory_space<vmem>>, vector<1x16x16xf32>
    %183 = vector.shape_cast %182 : vector<1x16x16xf32> to vector<16x16xf32>
    %c22 = arith.constant 22 : index
    %184 = memref.load %arg6[%c22] : memref<98xf32, #tpu.memory_space<smem>>
    %185 = vector.broadcast %184 : f32 to vector<16x16xf32>
    %186 = arith.mulf %183, %185 : vector<16x16xf32>
    %187 = arith.addf %181, %186 : vector<16x16xf32>
    %c1_105 = arith.constant 1 : index
    %c1_106 = arith.constant 1 : index
    %c4_107 = arith.constant 4 : index
    %188 = vector.load %arg9[%c1_105, %c1_106, %c4_107] : memref<2x22x22xf32, #tpu.memory_space<vmem>>, vector<1x16x16xf32>
    %189 = vector.shape_cast %188 : vector<1x16x16xf32> to vector<16x16xf32>
    %c23 = arith.constant 23 : index
    %190 = memref.load %arg6[%c23] : memref<98xf32, #tpu.memory_space<smem>>
    %191 = vector.broadcast %190 : f32 to vector<16x16xf32>
    %192 = arith.mulf %189, %191 : vector<16x16xf32>
    %193 = arith.addf %187, %192 : vector<16x16xf32>
    %c0_108 = arith.constant 0 : index
    %c1_109 = arith.constant 1 : index
    %c5_110 = arith.constant 5 : index
    %194 = vector.load %arg9[%c0_108, %c1_109, %c5_110] : memref<2x22x22xf32, #tpu.memory_space<vmem>>, vector<1x16x16xf32>
    %195 = vector.shape_cast %194 : vector<1x16x16xf32> to vector<16x16xf32>
    %c24 = arith.constant 24 : index
    %196 = memref.load %arg6[%c24] : memref<98xf32, #tpu.memory_space<smem>>
    %197 = vector.broadcast %196 : f32 to vector<16x16xf32>
    %198 = arith.mulf %195, %197 : vector<16x16xf32>
    %199 = arith.addf %193, %198 : vector<16x16xf32>
    %c1_111 = arith.constant 1 : index
    %c1_112 = arith.constant 1 : index
    %c5_113 = arith.constant 5 : index
    %200 = vector.load %arg9[%c1_111, %c1_112, %c5_113] : memref<2x22x22xf32, #tpu.memory_space<vmem>>, vector<1x16x16xf32>
    %201 = vector.shape_cast %200 : vector<1x16x16xf32> to vector<16x16xf32>
    %c25 = arith.constant 25 : index
    %202 = memref.load %arg6[%c25] : memref<98xf32, #tpu.memory_space<smem>>
    %203 = vector.broadcast %202 : f32 to vector<16x16xf32>
    %204 = arith.mulf %201, %203 : vector<16x16xf32>
    %205 = arith.addf %199, %204 : vector<16x16xf32>
    %c0_114 = arith.constant 0 : index
    %c1_115 = arith.constant 1 : index
    %c6_116 = arith.constant 6 : index
    %206 = vector.load %arg9[%c0_114, %c1_115, %c6_116] : memref<2x22x22xf32, #tpu.memory_space<vmem>>, vector<1x16x16xf32>
    %207 = vector.shape_cast %206 : vector<1x16x16xf32> to vector<16x16xf32>
    %c26 = arith.constant 26 : index
    %208 = memref.load %arg6[%c26] : memref<98xf32, #tpu.memory_space<smem>>
    %209 = vector.broadcast %208 : f32 to vector<16x16xf32>
    %210 = arith.mulf %207, %209 : vector<16x16xf32>
    %211 = arith.addf %205, %210 : vector<16x16xf32>
    %c1_117 = arith.constant 1 : index
    %c1_118 = arith.constant 1 : index
    %c6_119 = arith.constant 6 : index
    %212 = vector.load %arg9[%c1_117, %c1_118, %c6_119] : memref<2x22x22xf32, #tpu.memory_space<vmem>>, vector<1x16x16xf32>
    %213 = vector.shape_cast %212 : vector<1x16x16xf32> to vector<16x16xf32>
    %c27 = arith.constant 27 : index
    %214 = memref.load %arg6[%c27] : memref<98xf32, #tpu.memory_space<smem>>
    %215 = vector.broadcast %214 : f32 to vector<16x16xf32>
    %216 = arith.mulf %213, %215 : vector<16x16xf32>
    %217 = arith.addf %211, %216 : vector<16x16xf32>
    %c0_120 = arith.constant 0 : index
    %c2_121 = arith.constant 2 : index
    %c0_122 = arith.constant 0 : index
    %218 = vector.load %arg9[%c0_120, %c2_121, %c0_122] : memref<2x22x22xf32, #tpu.memory_space<vmem>>, vector<1x16x16xf32>
    %219 = vector.shape_cast %218 : vector<1x16x16xf32> to vector<16x16xf32>
    %c28 = arith.constant 28 : index
    %220 = memref.load %arg6[%c28] : memref<98xf32, #tpu.memory_space<smem>>
    %221 = vector.broadcast %220 : f32 to vector<16x16xf32>
    %222 = arith.mulf %219, %221 : vector<16x16xf32>
    %223 = arith.addf %217, %222 : vector<16x16xf32>
    %c1_123 = arith.constant 1 : index
    %c2_124 = arith.constant 2 : index
    %c0_125 = arith.constant 0 : index
    %224 = vector.load %arg9[%c1_123, %c2_124, %c0_125] : memref<2x22x22xf32, #tpu.memory_space<vmem>>, vector<1x16x16xf32>
    %225 = vector.shape_cast %224 : vector<1x16x16xf32> to vector<16x16xf32>
    %c29 = arith.constant 29 : index
    %226 = memref.load %arg6[%c29] : memref<98xf32, #tpu.memory_space<smem>>
    %227 = vector.broadcast %226 : f32 to vector<16x16xf32>
    %228 = arith.mulf %225, %227 : vector<16x16xf32>
    %229 = arith.addf %223, %228 : vector<16x16xf32>
    %c0_126 = arith.constant 0 : index
    %c2_127 = arith.constant 2 : index
    %c1_128 = arith.constant 1 : index
    %230 = vector.load %arg9[%c0_126, %c2_127, %c1_128] : memref<2x22x22xf32, #tpu.memory_space<vmem>>, vector<1x16x16xf32>
    %231 = vector.shape_cast %230 : vector<1x16x16xf32> to vector<16x16xf32>
    %c30 = arith.constant 30 : index
    %232 = memref.load %arg6[%c30] : memref<98xf32, #tpu.memory_space<smem>>
    %233 = vector.broadcast %232 : f32 to vector<16x16xf32>
    %234 = arith.mulf %231, %233 : vector<16x16xf32>
    %235 = arith.addf %229, %234 : vector<16x16xf32>
    %c1_129 = arith.constant 1 : index
    %c2_130 = arith.constant 2 : index
    %c1_131 = arith.constant 1 : index
    %236 = vector.load %arg9[%c1_129, %c2_130, %c1_131] : memref<2x22x22xf32, #tpu.memory_space<vmem>>, vector<1x16x16xf32>
    %237 = vector.shape_cast %236 : vector<1x16x16xf32> to vector<16x16xf32>
    %c31 = arith.constant 31 : index
    %238 = memref.load %arg6[%c31] : memref<98xf32, #tpu.memory_space<smem>>
    %239 = vector.broadcast %238 : f32 to vector<16x16xf32>
    %240 = arith.mulf %237, %239 : vector<16x16xf32>
    %241 = arith.addf %235, %240 : vector<16x16xf32>
    %c0_132 = arith.constant 0 : index
    %c2_133 = arith.constant 2 : index
    %c2_134 = arith.constant 2 : index
    %242 = vector.load %arg9[%c0_132, %c2_133, %c2_134] : memref<2x22x22xf32, #tpu.memory_space<vmem>>, vector<1x16x16xf32>
    %243 = vector.shape_cast %242 : vector<1x16x16xf32> to vector<16x16xf32>
    %c32 = arith.constant 32 : index
    %244 = memref.load %arg6[%c32] : memref<98xf32, #tpu.memory_space<smem>>
    %245 = vector.broadcast %244 : f32 to vector<16x16xf32>
    %246 = arith.mulf %243, %245 : vector<16x16xf32>
    %247 = arith.addf %241, %246 : vector<16x16xf32>
    %c1_135 = arith.constant 1 : index
    %c2_136 = arith.constant 2 : index
    %c2_137 = arith.constant 2 : index
    %248 = vector.load %arg9[%c1_135, %c2_136, %c2_137] : memref<2x22x22xf32, #tpu.memory_space<vmem>>, vector<1x16x16xf32>
    %249 = vector.shape_cast %248 : vector<1x16x16xf32> to vector<16x16xf32>
    %c33 = arith.constant 33 : index
    %250 = memref.load %arg6[%c33] : memref<98xf32, #tpu.memory_space<smem>>
    %251 = vector.broadcast %250 : f32 to vector<16x16xf32>
    %252 = arith.mulf %249, %251 : vector<16x16xf32>
    %253 = arith.addf %247, %252 : vector<16x16xf32>
    %c0_138 = arith.constant 0 : index
    %c2_139 = arith.constant 2 : index
    %c3_140 = arith.constant 3 : index
    %254 = vector.load %arg9[%c0_138, %c2_139, %c3_140] : memref<2x22x22xf32, #tpu.memory_space<vmem>>, vector<1x16x16xf32>
    %255 = vector.shape_cast %254 : vector<1x16x16xf32> to vector<16x16xf32>
    %c34 = arith.constant 34 : index
    %256 = memref.load %arg6[%c34] : memref<98xf32, #tpu.memory_space<smem>>
    %257 = vector.broadcast %256 : f32 to vector<16x16xf32>
    %258 = arith.mulf %255, %257 : vector<16x16xf32>
    %259 = arith.addf %253, %258 : vector<16x16xf32>
    %c1_141 = arith.constant 1 : index
    %c2_142 = arith.constant 2 : index
    %c3_143 = arith.constant 3 : index
    %260 = vector.load %arg9[%c1_141, %c2_142, %c3_143] : memref<2x22x22xf32, #tpu.memory_space<vmem>>, vector<1x16x16xf32>
    %261 = vector.shape_cast %260 : vector<1x16x16xf32> to vector<16x16xf32>
    %c35 = arith.constant 35 : index
    %262 = memref.load %arg6[%c35] : memref<98xf32, #tpu.memory_space<smem>>
    %263 = vector.broadcast %262 : f32 to vector<16x16xf32>
    %264 = arith.mulf %261, %263 : vector<16x16xf32>
    %265 = arith.addf %259, %264 : vector<16x16xf32>
    %c0_144 = arith.constant 0 : index
    %c2_145 = arith.constant 2 : index
    %c4_146 = arith.constant 4 : index
    %266 = vector.load %arg9[%c0_144, %c2_145, %c4_146] : memref<2x22x22xf32, #tpu.memory_space<vmem>>, vector<1x16x16xf32>
    %267 = vector.shape_cast %266 : vector<1x16x16xf32> to vector<16x16xf32>
    %c36 = arith.constant 36 : index
    %268 = memref.load %arg6[%c36] : memref<98xf32, #tpu.memory_space<smem>>
    %269 = vector.broadcast %268 : f32 to vector<16x16xf32>
    %270 = arith.mulf %267, %269 : vector<16x16xf32>
    %271 = arith.addf %265, %270 : vector<16x16xf32>
    %c1_147 = arith.constant 1 : index
    %c2_148 = arith.constant 2 : index
    %c4_149 = arith.constant 4 : index
    %272 = vector.load %arg9[%c1_147, %c2_148, %c4_149] : memref<2x22x22xf32, #tpu.memory_space<vmem>>, vector<1x16x16xf32>
    %273 = vector.shape_cast %272 : vector<1x16x16xf32> to vector<16x16xf32>
    %c37 = arith.constant 37 : index
    %274 = memref.load %arg6[%c37] : memref<98xf32, #tpu.memory_space<smem>>
    %275 = vector.broadcast %274 : f32 to vector<16x16xf32>
    %276 = arith.mulf %273, %275 : vector<16x16xf32>
    %277 = arith.addf %271, %276 : vector<16x16xf32>
    %c0_150 = arith.constant 0 : index
    %c2_151 = arith.constant 2 : index
    %c5_152 = arith.constant 5 : index
    %278 = vector.load %arg9[%c0_150, %c2_151, %c5_152] : memref<2x22x22xf32, #tpu.memory_space<vmem>>, vector<1x16x16xf32>
    %279 = vector.shape_cast %278 : vector<1x16x16xf32> to vector<16x16xf32>
    %c38 = arith.constant 38 : index
    %280 = memref.load %arg6[%c38] : memref<98xf32, #tpu.memory_space<smem>>
    %281 = vector.broadcast %280 : f32 to vector<16x16xf32>
    %282 = arith.mulf %279, %281 : vector<16x16xf32>
    %283 = arith.addf %277, %282 : vector<16x16xf32>
    %c1_153 = arith.constant 1 : index
    %c2_154 = arith.constant 2 : index
    %c5_155 = arith.constant 5 : index
    %284 = vector.load %arg9[%c1_153, %c2_154, %c5_155] : memref<2x22x22xf32, #tpu.memory_space<vmem>>, vector<1x16x16xf32>
    %285 = vector.shape_cast %284 : vector<1x16x16xf32> to vector<16x16xf32>
    %c39 = arith.constant 39 : index
    %286 = memref.load %arg6[%c39] : memref<98xf32, #tpu.memory_space<smem>>
    %287 = vector.broadcast %286 : f32 to vector<16x16xf32>
    %288 = arith.mulf %285, %287 : vector<16x16xf32>
    %289 = arith.addf %283, %288 : vector<16x16xf32>
    %c0_156 = arith.constant 0 : index
    %c2_157 = arith.constant 2 : index
    %c6_158 = arith.constant 6 : index
    %290 = vector.load %arg9[%c0_156, %c2_157, %c6_158] : memref<2x22x22xf32, #tpu.memory_space<vmem>>, vector<1x16x16xf32>
    %291 = vector.shape_cast %290 : vector<1x16x16xf32> to vector<16x16xf32>
    %c40 = arith.constant 40 : index
    %292 = memref.load %arg6[%c40] : memref<98xf32, #tpu.memory_space<smem>>
    %293 = vector.broadcast %292 : f32 to vector<16x16xf32>
    %294 = arith.mulf %291, %293 : vector<16x16xf32>
    %295 = arith.addf %289, %294 : vector<16x16xf32>
    %c1_159 = arith.constant 1 : index
    %c2_160 = arith.constant 2 : index
    %c6_161 = arith.constant 6 : index
    %296 = vector.load %arg9[%c1_159, %c2_160, %c6_161] : memref<2x22x22xf32, #tpu.memory_space<vmem>>, vector<1x16x16xf32>
    %297 = vector.shape_cast %296 : vector<1x16x16xf32> to vector<16x16xf32>
    %c41 = arith.constant 41 : index
    %298 = memref.load %arg6[%c41] : memref<98xf32, #tpu.memory_space<smem>>
    %299 = vector.broadcast %298 : f32 to vector<16x16xf32>
    %300 = arith.mulf %297, %299 : vector<16x16xf32>
    %301 = arith.addf %295, %300 : vector<16x16xf32>
    %c0_162 = arith.constant 0 : index
    %c3_163 = arith.constant 3 : index
    %c0_164 = arith.constant 0 : index
    %302 = vector.load %arg9[%c0_162, %c3_163, %c0_164] : memref<2x22x22xf32, #tpu.memory_space<vmem>>, vector<1x16x16xf32>
    %303 = vector.shape_cast %302 : vector<1x16x16xf32> to vector<16x16xf32>
    %c42 = arith.constant 42 : index
    %304 = memref.load %arg6[%c42] : memref<98xf32, #tpu.memory_space<smem>>
    %305 = vector.broadcast %304 : f32 to vector<16x16xf32>
    %306 = arith.mulf %303, %305 : vector<16x16xf32>
    %307 = arith.addf %301, %306 : vector<16x16xf32>
    %c1_165 = arith.constant 1 : index
    %c3_166 = arith.constant 3 : index
    %c0_167 = arith.constant 0 : index
    %308 = vector.load %arg9[%c1_165, %c3_166, %c0_167] : memref<2x22x22xf32, #tpu.memory_space<vmem>>, vector<1x16x16xf32>
    %309 = vector.shape_cast %308 : vector<1x16x16xf32> to vector<16x16xf32>
    %c43 = arith.constant 43 : index
    %310 = memref.load %arg6[%c43] : memref<98xf32, #tpu.memory_space<smem>>
    %311 = vector.broadcast %310 : f32 to vector<16x16xf32>
    %312 = arith.mulf %309, %311 : vector<16x16xf32>
    %313 = arith.addf %307, %312 : vector<16x16xf32>
    %c0_168 = arith.constant 0 : index
    %c3_169 = arith.constant 3 : index
    %c1_170 = arith.constant 1 : index
    %314 = vector.load %arg9[%c0_168, %c3_169, %c1_170] : memref<2x22x22xf32, #tpu.memory_space<vmem>>, vector<1x16x16xf32>
    %315 = vector.shape_cast %314 : vector<1x16x16xf32> to vector<16x16xf32>
    %c44 = arith.constant 44 : index
    %316 = memref.load %arg6[%c44] : memref<98xf32, #tpu.memory_space<smem>>
    %317 = vector.broadcast %316 : f32 to vector<16x16xf32>
    %318 = arith.mulf %315, %317 : vector<16x16xf32>
    %319 = arith.addf %313, %318 : vector<16x16xf32>
    %c1_171 = arith.constant 1 : index
    %c3_172 = arith.constant 3 : index
    %c1_173 = arith.constant 1 : index
    %320 = vector.load %arg9[%c1_171, %c3_172, %c1_173] : memref<2x22x22xf32, #tpu.memory_space<vmem>>, vector<1x16x16xf32>
    %321 = vector.shape_cast %320 : vector<1x16x16xf32> to vector<16x16xf32>
    %c45 = arith.constant 45 : index
    %322 = memref.load %arg6[%c45] : memref<98xf32, #tpu.memory_space<smem>>
    %323 = vector.broadcast %322 : f32 to vector<16x16xf32>
    %324 = arith.mulf %321, %323 : vector<16x16xf32>
    %325 = arith.addf %319, %324 : vector<16x16xf32>
    %c0_174 = arith.constant 0 : index
    %c3_175 = arith.constant 3 : index
    %c2_176 = arith.constant 2 : index
    %326 = vector.load %arg9[%c0_174, %c3_175, %c2_176] : memref<2x22x22xf32, #tpu.memory_space<vmem>>, vector<1x16x16xf32>
    %327 = vector.shape_cast %326 : vector<1x16x16xf32> to vector<16x16xf32>
    %c46 = arith.constant 46 : index
    %328 = memref.load %arg6[%c46] : memref<98xf32, #tpu.memory_space<smem>>
    %329 = vector.broadcast %328 : f32 to vector<16x16xf32>
    %330 = arith.mulf %327, %329 : vector<16x16xf32>
    %331 = arith.addf %325, %330 : vector<16x16xf32>
    %c1_177 = arith.constant 1 : index
    %c3_178 = arith.constant 3 : index
    %c2_179 = arith.constant 2 : index
    %332 = vector.load %arg9[%c1_177, %c3_178, %c2_179] : memref<2x22x22xf32, #tpu.memory_space<vmem>>, vector<1x16x16xf32>
    %333 = vector.shape_cast %332 : vector<1x16x16xf32> to vector<16x16xf32>
    %c47 = arith.constant 47 : index
    %334 = memref.load %arg6[%c47] : memref<98xf32, #tpu.memory_space<smem>>
    %335 = vector.broadcast %334 : f32 to vector<16x16xf32>
    %336 = arith.mulf %333, %335 : vector<16x16xf32>
    %337 = arith.addf %331, %336 : vector<16x16xf32>
    %c0_180 = arith.constant 0 : index
    %c3_181 = arith.constant 3 : index
    %c3_182 = arith.constant 3 : index
    %338 = vector.load %arg9[%c0_180, %c3_181, %c3_182] : memref<2x22x22xf32, #tpu.memory_space<vmem>>, vector<1x16x16xf32>
    %339 = vector.shape_cast %338 : vector<1x16x16xf32> to vector<16x16xf32>
    %c48 = arith.constant 48 : index
    %340 = memref.load %arg6[%c48] : memref<98xf32, #tpu.memory_space<smem>>
    %341 = vector.broadcast %340 : f32 to vector<16x16xf32>
    %342 = arith.mulf %339, %341 : vector<16x16xf32>
    %343 = arith.addf %337, %342 : vector<16x16xf32>
    %c1_183 = arith.constant 1 : index
    %c3_184 = arith.constant 3 : index
    %c3_185 = arith.constant 3 : index
    %344 = vector.load %arg9[%c1_183, %c3_184, %c3_185] : memref<2x22x22xf32, #tpu.memory_space<vmem>>, vector<1x16x16xf32>
    %345 = vector.shape_cast %344 : vector<1x16x16xf32> to vector<16x16xf32>
    %c49 = arith.constant 49 : index
    %346 = memref.load %arg6[%c49] : memref<98xf32, #tpu.memory_space<smem>>
    %347 = vector.broadcast %346 : f32 to vector<16x16xf32>
    %348 = arith.mulf %345, %347 : vector<16x16xf32>
    %349 = arith.addf %343, %348 : vector<16x16xf32>
    %c0_186 = arith.constant 0 : index
    %c3_187 = arith.constant 3 : index
    %c4_188 = arith.constant 4 : index
    %350 = vector.load %arg9[%c0_186, %c3_187, %c4_188] : memref<2x22x22xf32, #tpu.memory_space<vmem>>, vector<1x16x16xf32>
    %351 = vector.shape_cast %350 : vector<1x16x16xf32> to vector<16x16xf32>
    %c50 = arith.constant 50 : index
    %352 = memref.load %arg6[%c50] : memref<98xf32, #tpu.memory_space<smem>>
    %353 = vector.broadcast %352 : f32 to vector<16x16xf32>
    %354 = arith.mulf %351, %353 : vector<16x16xf32>
    %355 = arith.addf %349, %354 : vector<16x16xf32>
    %c1_189 = arith.constant 1 : index
    %c3_190 = arith.constant 3 : index
    %c4_191 = arith.constant 4 : index
    %356 = vector.load %arg9[%c1_189, %c3_190, %c4_191] : memref<2x22x22xf32, #tpu.memory_space<vmem>>, vector<1x16x16xf32>
    %357 = vector.shape_cast %356 : vector<1x16x16xf32> to vector<16x16xf32>
    %c51 = arith.constant 51 : index
    %358 = memref.load %arg6[%c51] : memref<98xf32, #tpu.memory_space<smem>>
    %359 = vector.broadcast %358 : f32 to vector<16x16xf32>
    %360 = arith.mulf %357, %359 : vector<16x16xf32>
    %361 = arith.addf %355, %360 : vector<16x16xf32>
    %c0_192 = arith.constant 0 : index
    %c3_193 = arith.constant 3 : index
    %c5_194 = arith.constant 5 : index
    %362 = vector.load %arg9[%c0_192, %c3_193, %c5_194] : memref<2x22x22xf32, #tpu.memory_space<vmem>>, vector<1x16x16xf32>
    %363 = vector.shape_cast %362 : vector<1x16x16xf32> to vector<16x16xf32>
    %c52 = arith.constant 52 : index
    %364 = memref.load %arg6[%c52] : memref<98xf32, #tpu.memory_space<smem>>
    %365 = vector.broadcast %364 : f32 to vector<16x16xf32>
    %366 = arith.mulf %363, %365 : vector<16x16xf32>
    %367 = arith.addf %361, %366 : vector<16x16xf32>
    %c1_195 = arith.constant 1 : index
    %c3_196 = arith.constant 3 : index
    %c5_197 = arith.constant 5 : index
    %368 = vector.load %arg9[%c1_195, %c3_196, %c5_197] : memref<2x22x22xf32, #tpu.memory_space<vmem>>, vector<1x16x16xf32>
    %369 = vector.shape_cast %368 : vector<1x16x16xf32> to vector<16x16xf32>
    %c53 = arith.constant 53 : index
    %370 = memref.load %arg6[%c53] : memref<98xf32, #tpu.memory_space<smem>>
    %371 = vector.broadcast %370 : f32 to vector<16x16xf32>
    %372 = arith.mulf %369, %371 : vector<16x16xf32>
    %373 = arith.addf %367, %372 : vector<16x16xf32>
    %c0_198 = arith.constant 0 : index
    %c3_199 = arith.constant 3 : index
    %c6_200 = arith.constant 6 : index
    %374 = vector.load %arg9[%c0_198, %c3_199, %c6_200] : memref<2x22x22xf32, #tpu.memory_space<vmem>>, vector<1x16x16xf32>
    %375 = vector.shape_cast %374 : vector<1x16x16xf32> to vector<16x16xf32>
    %c54 = arith.constant 54 : index
    %376 = memref.load %arg6[%c54] : memref<98xf32, #tpu.memory_space<smem>>
    %377 = vector.broadcast %376 : f32 to vector<16x16xf32>
    %378 = arith.mulf %375, %377 : vector<16x16xf32>
    %379 = arith.addf %373, %378 : vector<16x16xf32>
    %c1_201 = arith.constant 1 : index
    %c3_202 = arith.constant 3 : index
    %c6_203 = arith.constant 6 : index
    %380 = vector.load %arg9[%c1_201, %c3_202, %c6_203] : memref<2x22x22xf32, #tpu.memory_space<vmem>>, vector<1x16x16xf32>
    %381 = vector.shape_cast %380 : vector<1x16x16xf32> to vector<16x16xf32>
    %c55 = arith.constant 55 : index
    %382 = memref.load %arg6[%c55] : memref<98xf32, #tpu.memory_space<smem>>
    %383 = vector.broadcast %382 : f32 to vector<16x16xf32>
    %384 = arith.mulf %381, %383 : vector<16x16xf32>
    %385 = arith.addf %379, %384 : vector<16x16xf32>
    %c0_204 = arith.constant 0 : index
    %c4_205 = arith.constant 4 : index
    %c0_206 = arith.constant 0 : index
    %386 = vector.load %arg9[%c0_204, %c4_205, %c0_206] : memref<2x22x22xf32, #tpu.memory_space<vmem>>, vector<1x16x16xf32>
    %387 = vector.shape_cast %386 : vector<1x16x16xf32> to vector<16x16xf32>
    %c56 = arith.constant 56 : index
    %388 = memref.load %arg6[%c56] : memref<98xf32, #tpu.memory_space<smem>>
    %389 = vector.broadcast %388 : f32 to vector<16x16xf32>
    %390 = arith.mulf %387, %389 : vector<16x16xf32>
    %391 = arith.addf %385, %390 : vector<16x16xf32>
    %c1_207 = arith.constant 1 : index
    %c4_208 = arith.constant 4 : index
    %c0_209 = arith.constant 0 : index
    %392 = vector.load %arg9[%c1_207, %c4_208, %c0_209] : memref<2x22x22xf32, #tpu.memory_space<vmem>>, vector<1x16x16xf32>
    %393 = vector.shape_cast %392 : vector<1x16x16xf32> to vector<16x16xf32>
    %c57 = arith.constant 57 : index
    %394 = memref.load %arg6[%c57] : memref<98xf32, #tpu.memory_space<smem>>
    %395 = vector.broadcast %394 : f32 to vector<16x16xf32>
    %396 = arith.mulf %393, %395 : vector<16x16xf32>
    %397 = arith.addf %391, %396 : vector<16x16xf32>
    %c0_210 = arith.constant 0 : index
    %c4_211 = arith.constant 4 : index
    %c1_212 = arith.constant 1 : index
    %398 = vector.load %arg9[%c0_210, %c4_211, %c1_212] : memref<2x22x22xf32, #tpu.memory_space<vmem>>, vector<1x16x16xf32>
    %399 = vector.shape_cast %398 : vector<1x16x16xf32> to vector<16x16xf32>
    %c58 = arith.constant 58 : index
    %400 = memref.load %arg6[%c58] : memref<98xf32, #tpu.memory_space<smem>>
    %401 = vector.broadcast %400 : f32 to vector<16x16xf32>
    %402 = arith.mulf %399, %401 : vector<16x16xf32>
    %403 = arith.addf %397, %402 : vector<16x16xf32>
    %c1_213 = arith.constant 1 : index
    %c4_214 = arith.constant 4 : index
    %c1_215 = arith.constant 1 : index
    %404 = vector.load %arg9[%c1_213, %c4_214, %c1_215] : memref<2x22x22xf32, #tpu.memory_space<vmem>>, vector<1x16x16xf32>
    %405 = vector.shape_cast %404 : vector<1x16x16xf32> to vector<16x16xf32>
    %c59 = arith.constant 59 : index
    %406 = memref.load %arg6[%c59] : memref<98xf32, #tpu.memory_space<smem>>
    %407 = vector.broadcast %406 : f32 to vector<16x16xf32>
    %408 = arith.mulf %405, %407 : vector<16x16xf32>
    %409 = arith.addf %403, %408 : vector<16x16xf32>
    %c0_216 = arith.constant 0 : index
    %c4_217 = arith.constant 4 : index
    %c2_218 = arith.constant 2 : index
    %410 = vector.load %arg9[%c0_216, %c4_217, %c2_218] : memref<2x22x22xf32, #tpu.memory_space<vmem>>, vector<1x16x16xf32>
    %411 = vector.shape_cast %410 : vector<1x16x16xf32> to vector<16x16xf32>
    %c60 = arith.constant 60 : index
    %412 = memref.load %arg6[%c60] : memref<98xf32, #tpu.memory_space<smem>>
    %413 = vector.broadcast %412 : f32 to vector<16x16xf32>
    %414 = arith.mulf %411, %413 : vector<16x16xf32>
    %415 = arith.addf %409, %414 : vector<16x16xf32>
    %c1_219 = arith.constant 1 : index
    %c4_220 = arith.constant 4 : index
    %c2_221 = arith.constant 2 : index
    %416 = vector.load %arg9[%c1_219, %c4_220, %c2_221] : memref<2x22x22xf32, #tpu.memory_space<vmem>>, vector<1x16x16xf32>
    %417 = vector.shape_cast %416 : vector<1x16x16xf32> to vector<16x16xf32>
    %c61 = arith.constant 61 : index
    %418 = memref.load %arg6[%c61] : memref<98xf32, #tpu.memory_space<smem>>
    %419 = vector.broadcast %418 : f32 to vector<16x16xf32>
    %420 = arith.mulf %417, %419 : vector<16x16xf32>
    %421 = arith.addf %415, %420 : vector<16x16xf32>
    %c0_222 = arith.constant 0 : index
    %c4_223 = arith.constant 4 : index
    %c3_224 = arith.constant 3 : index
    %422 = vector.load %arg9[%c0_222, %c4_223, %c3_224] : memref<2x22x22xf32, #tpu.memory_space<vmem>>, vector<1x16x16xf32>
    %423 = vector.shape_cast %422 : vector<1x16x16xf32> to vector<16x16xf32>
    %c62 = arith.constant 62 : index
    %424 = memref.load %arg6[%c62] : memref<98xf32, #tpu.memory_space<smem>>
    %425 = vector.broadcast %424 : f32 to vector<16x16xf32>
    %426 = arith.mulf %423, %425 : vector<16x16xf32>
    %427 = arith.addf %421, %426 : vector<16x16xf32>
    %c1_225 = arith.constant 1 : index
    %c4_226 = arith.constant 4 : index
    %c3_227 = arith.constant 3 : index
    %428 = vector.load %arg9[%c1_225, %c4_226, %c3_227] : memref<2x22x22xf32, #tpu.memory_space<vmem>>, vector<1x16x16xf32>
    %429 = vector.shape_cast %428 : vector<1x16x16xf32> to vector<16x16xf32>
    %c63 = arith.constant 63 : index
    %430 = memref.load %arg6[%c63] : memref<98xf32, #tpu.memory_space<smem>>
    %431 = vector.broadcast %430 : f32 to vector<16x16xf32>
    %432 = arith.mulf %429, %431 : vector<16x16xf32>
    %433 = arith.addf %427, %432 : vector<16x16xf32>
    %c0_228 = arith.constant 0 : index
    %c4_229 = arith.constant 4 : index
    %c4_230 = arith.constant 4 : index
    %434 = vector.load %arg9[%c0_228, %c4_229, %c4_230] : memref<2x22x22xf32, #tpu.memory_space<vmem>>, vector<1x16x16xf32>
    %435 = vector.shape_cast %434 : vector<1x16x16xf32> to vector<16x16xf32>
    %c64 = arith.constant 64 : index
    %436 = memref.load %arg6[%c64] : memref<98xf32, #tpu.memory_space<smem>>
    %437 = vector.broadcast %436 : f32 to vector<16x16xf32>
    %438 = arith.mulf %435, %437 : vector<16x16xf32>
    %439 = arith.addf %433, %438 : vector<16x16xf32>
    %c1_231 = arith.constant 1 : index
    %c4_232 = arith.constant 4 : index
    %c4_233 = arith.constant 4 : index
    %440 = vector.load %arg9[%c1_231, %c4_232, %c4_233] : memref<2x22x22xf32, #tpu.memory_space<vmem>>, vector<1x16x16xf32>
    %441 = vector.shape_cast %440 : vector<1x16x16xf32> to vector<16x16xf32>
    %c65 = arith.constant 65 : index
    %442 = memref.load %arg6[%c65] : memref<98xf32, #tpu.memory_space<smem>>
    %443 = vector.broadcast %442 : f32 to vector<16x16xf32>
    %444 = arith.mulf %441, %443 : vector<16x16xf32>
    %445 = arith.addf %439, %444 : vector<16x16xf32>
    %c0_234 = arith.constant 0 : index
    %c4_235 = arith.constant 4 : index
    %c5_236 = arith.constant 5 : index
    %446 = vector.load %arg9[%c0_234, %c4_235, %c5_236] : memref<2x22x22xf32, #tpu.memory_space<vmem>>, vector<1x16x16xf32>
    %447 = vector.shape_cast %446 : vector<1x16x16xf32> to vector<16x16xf32>
    %c66 = arith.constant 66 : index
    %448 = memref.load %arg6[%c66] : memref<98xf32, #tpu.memory_space<smem>>
    %449 = vector.broadcast %448 : f32 to vector<16x16xf32>
    %450 = arith.mulf %447, %449 : vector<16x16xf32>
    %451 = arith.addf %445, %450 : vector<16x16xf32>
    %c1_237 = arith.constant 1 : index
    %c4_238 = arith.constant 4 : index
    %c5_239 = arith.constant 5 : index
    %452 = vector.load %arg9[%c1_237, %c4_238, %c5_239] : memref<2x22x22xf32, #tpu.memory_space<vmem>>, vector<1x16x16xf32>
    %453 = vector.shape_cast %452 : vector<1x16x16xf32> to vector<16x16xf32>
    %c67 = arith.constant 67 : index
    %454 = memref.load %arg6[%c67] : memref<98xf32, #tpu.memory_space<smem>>
    %455 = vector.broadcast %454 : f32 to vector<16x16xf32>
    %456 = arith.mulf %453, %455 : vector<16x16xf32>
    %457 = arith.addf %451, %456 : vector<16x16xf32>
    %c0_240 = arith.constant 0 : index
    %c4_241 = arith.constant 4 : index
    %c6_242 = arith.constant 6 : index
    %458 = vector.load %arg9[%c0_240, %c4_241, %c6_242] : memref<2x22x22xf32, #tpu.memory_space<vmem>>, vector<1x16x16xf32>
    %459 = vector.shape_cast %458 : vector<1x16x16xf32> to vector<16x16xf32>
    %c68 = arith.constant 68 : index
    %460 = memref.load %arg6[%c68] : memref<98xf32, #tpu.memory_space<smem>>
    %461 = vector.broadcast %460 : f32 to vector<16x16xf32>
    %462 = arith.mulf %459, %461 : vector<16x16xf32>
    %463 = arith.addf %457, %462 : vector<16x16xf32>
    %c1_243 = arith.constant 1 : index
    %c4_244 = arith.constant 4 : index
    %c6_245 = arith.constant 6 : index
    %464 = vector.load %arg9[%c1_243, %c4_244, %c6_245] : memref<2x22x22xf32, #tpu.memory_space<vmem>>, vector<1x16x16xf32>
    %465 = vector.shape_cast %464 : vector<1x16x16xf32> to vector<16x16xf32>
    %c69 = arith.constant 69 : index
    %466 = memref.load %arg6[%c69] : memref<98xf32, #tpu.memory_space<smem>>
    %467 = vector.broadcast %466 : f32 to vector<16x16xf32>
    %468 = arith.mulf %465, %467 : vector<16x16xf32>
    %469 = arith.addf %463, %468 : vector<16x16xf32>
    %c0_246 = arith.constant 0 : index
    %c5_247 = arith.constant 5 : index
    %c0_248 = arith.constant 0 : index
    %470 = vector.load %arg9[%c0_246, %c5_247, %c0_248] : memref<2x22x22xf32, #tpu.memory_space<vmem>>, vector<1x16x16xf32>
    %471 = vector.shape_cast %470 : vector<1x16x16xf32> to vector<16x16xf32>
    %c70 = arith.constant 70 : index
    %472 = memref.load %arg6[%c70] : memref<98xf32, #tpu.memory_space<smem>>
    %473 = vector.broadcast %472 : f32 to vector<16x16xf32>
    %474 = arith.mulf %471, %473 : vector<16x16xf32>
    %475 = arith.addf %469, %474 : vector<16x16xf32>
    %c1_249 = arith.constant 1 : index
    %c5_250 = arith.constant 5 : index
    %c0_251 = arith.constant 0 : index
    %476 = vector.load %arg9[%c1_249, %c5_250, %c0_251] : memref<2x22x22xf32, #tpu.memory_space<vmem>>, vector<1x16x16xf32>
    %477 = vector.shape_cast %476 : vector<1x16x16xf32> to vector<16x16xf32>
    %c71 = arith.constant 71 : index
    %478 = memref.load %arg6[%c71] : memref<98xf32, #tpu.memory_space<smem>>
    %479 = vector.broadcast %478 : f32 to vector<16x16xf32>
    %480 = arith.mulf %477, %479 : vector<16x16xf32>
    %481 = arith.addf %475, %480 : vector<16x16xf32>
    %c0_252 = arith.constant 0 : index
    %c5_253 = arith.constant 5 : index
    %c1_254 = arith.constant 1 : index
    %482 = vector.load %arg9[%c0_252, %c5_253, %c1_254] : memref<2x22x22xf32, #tpu.memory_space<vmem>>, vector<1x16x16xf32>
    %483 = vector.shape_cast %482 : vector<1x16x16xf32> to vector<16x16xf32>
    %c72 = arith.constant 72 : index
    %484 = memref.load %arg6[%c72] : memref<98xf32, #tpu.memory_space<smem>>
    %485 = vector.broadcast %484 : f32 to vector<16x16xf32>
    %486 = arith.mulf %483, %485 : vector<16x16xf32>
    %487 = arith.addf %481, %486 : vector<16x16xf32>
    %c1_255 = arith.constant 1 : index
    %c5_256 = arith.constant 5 : index
    %c1_257 = arith.constant 1 : index
    %488 = vector.load %arg9[%c1_255, %c5_256, %c1_257] : memref<2x22x22xf32, #tpu.memory_space<vmem>>, vector<1x16x16xf32>
    %489 = vector.shape_cast %488 : vector<1x16x16xf32> to vector<16x16xf32>
    %c73 = arith.constant 73 : index
    %490 = memref.load %arg6[%c73] : memref<98xf32, #tpu.memory_space<smem>>
    %491 = vector.broadcast %490 : f32 to vector<16x16xf32>
    %492 = arith.mulf %489, %491 : vector<16x16xf32>
    %493 = arith.addf %487, %492 : vector<16x16xf32>
    %c0_258 = arith.constant 0 : index
    %c5_259 = arith.constant 5 : index
    %c2_260 = arith.constant 2 : index
    %494 = vector.load %arg9[%c0_258, %c5_259, %c2_260] : memref<2x22x22xf32, #tpu.memory_space<vmem>>, vector<1x16x16xf32>
    %495 = vector.shape_cast %494 : vector<1x16x16xf32> to vector<16x16xf32>
    %c74 = arith.constant 74 : index
    %496 = memref.load %arg6[%c74] : memref<98xf32, #tpu.memory_space<smem>>
    %497 = vector.broadcast %496 : f32 to vector<16x16xf32>
    %498 = arith.mulf %495, %497 : vector<16x16xf32>
    %499 = arith.addf %493, %498 : vector<16x16xf32>
    %c1_261 = arith.constant 1 : index
    %c5_262 = arith.constant 5 : index
    %c2_263 = arith.constant 2 : index
    %500 = vector.load %arg9[%c1_261, %c5_262, %c2_263] : memref<2x22x22xf32, #tpu.memory_space<vmem>>, vector<1x16x16xf32>
    %501 = vector.shape_cast %500 : vector<1x16x16xf32> to vector<16x16xf32>
    %c75 = arith.constant 75 : index
    %502 = memref.load %arg6[%c75] : memref<98xf32, #tpu.memory_space<smem>>
    %503 = vector.broadcast %502 : f32 to vector<16x16xf32>
    %504 = arith.mulf %501, %503 : vector<16x16xf32>
    %505 = arith.addf %499, %504 : vector<16x16xf32>
    %c0_264 = arith.constant 0 : index
    %c5_265 = arith.constant 5 : index
    %c3_266 = arith.constant 3 : index
    %506 = vector.load %arg9[%c0_264, %c5_265, %c3_266] : memref<2x22x22xf32, #tpu.memory_space<vmem>>, vector<1x16x16xf32>
    %507 = vector.shape_cast %506 : vector<1x16x16xf32> to vector<16x16xf32>
    %c76 = arith.constant 76 : index
    %508 = memref.load %arg6[%c76] : memref<98xf32, #tpu.memory_space<smem>>
    %509 = vector.broadcast %508 : f32 to vector<16x16xf32>
    %510 = arith.mulf %507, %509 : vector<16x16xf32>
    %511 = arith.addf %505, %510 : vector<16x16xf32>
    %c1_267 = arith.constant 1 : index
    %c5_268 = arith.constant 5 : index
    %c3_269 = arith.constant 3 : index
    %512 = vector.load %arg9[%c1_267, %c5_268, %c3_269] : memref<2x22x22xf32, #tpu.memory_space<vmem>>, vector<1x16x16xf32>
    %513 = vector.shape_cast %512 : vector<1x16x16xf32> to vector<16x16xf32>
    %c77 = arith.constant 77 : index
    %514 = memref.load %arg6[%c77] : memref<98xf32, #tpu.memory_space<smem>>
    %515 = vector.broadcast %514 : f32 to vector<16x16xf32>
    %516 = arith.mulf %513, %515 : vector<16x16xf32>
    %517 = arith.addf %511, %516 : vector<16x16xf32>
    %c0_270 = arith.constant 0 : index
    %c5_271 = arith.constant 5 : index
    %c4_272 = arith.constant 4 : index
    %518 = vector.load %arg9[%c0_270, %c5_271, %c4_272] : memref<2x22x22xf32, #tpu.memory_space<vmem>>, vector<1x16x16xf32>
    %519 = vector.shape_cast %518 : vector<1x16x16xf32> to vector<16x16xf32>
    %c78 = arith.constant 78 : index
    %520 = memref.load %arg6[%c78] : memref<98xf32, #tpu.memory_space<smem>>
    %521 = vector.broadcast %520 : f32 to vector<16x16xf32>
    %522 = arith.mulf %519, %521 : vector<16x16xf32>
    %523 = arith.addf %517, %522 : vector<16x16xf32>
    %c1_273 = arith.constant 1 : index
    %c5_274 = arith.constant 5 : index
    %c4_275 = arith.constant 4 : index
    %524 = vector.load %arg9[%c1_273, %c5_274, %c4_275] : memref<2x22x22xf32, #tpu.memory_space<vmem>>, vector<1x16x16xf32>
    %525 = vector.shape_cast %524 : vector<1x16x16xf32> to vector<16x16xf32>
    %c79 = arith.constant 79 : index
    %526 = memref.load %arg6[%c79] : memref<98xf32, #tpu.memory_space<smem>>
    %527 = vector.broadcast %526 : f32 to vector<16x16xf32>
    %528 = arith.mulf %525, %527 : vector<16x16xf32>
    %529 = arith.addf %523, %528 : vector<16x16xf32>
    %c0_276 = arith.constant 0 : index
    %c5_277 = arith.constant 5 : index
    %c5_278 = arith.constant 5 : index
    %530 = vector.load %arg9[%c0_276, %c5_277, %c5_278] : memref<2x22x22xf32, #tpu.memory_space<vmem>>, vector<1x16x16xf32>
    %531 = vector.shape_cast %530 : vector<1x16x16xf32> to vector<16x16xf32>
    %c80 = arith.constant 80 : index
    %532 = memref.load %arg6[%c80] : memref<98xf32, #tpu.memory_space<smem>>
    %533 = vector.broadcast %532 : f32 to vector<16x16xf32>
    %534 = arith.mulf %531, %533 : vector<16x16xf32>
    %535 = arith.addf %529, %534 : vector<16x16xf32>
    %c1_279 = arith.constant 1 : index
    %c5_280 = arith.constant 5 : index
    %c5_281 = arith.constant 5 : index
    %536 = vector.load %arg9[%c1_279, %c5_280, %c5_281] : memref<2x22x22xf32, #tpu.memory_space<vmem>>, vector<1x16x16xf32>
    %537 = vector.shape_cast %536 : vector<1x16x16xf32> to vector<16x16xf32>
    %c81 = arith.constant 81 : index
    %538 = memref.load %arg6[%c81] : memref<98xf32, #tpu.memory_space<smem>>
    %539 = vector.broadcast %538 : f32 to vector<16x16xf32>
    %540 = arith.mulf %537, %539 : vector<16x16xf32>
    %541 = arith.addf %535, %540 : vector<16x16xf32>
    %c0_282 = arith.constant 0 : index
    %c5_283 = arith.constant 5 : index
    %c6_284 = arith.constant 6 : index
    %542 = vector.load %arg9[%c0_282, %c5_283, %c6_284] : memref<2x22x22xf32, #tpu.memory_space<vmem>>, vector<1x16x16xf32>
    %543 = vector.shape_cast %542 : vector<1x16x16xf32> to vector<16x16xf32>
    %c82 = arith.constant 82 : index
    %544 = memref.load %arg6[%c82] : memref<98xf32, #tpu.memory_space<smem>>
    %545 = vector.broadcast %544 : f32 to vector<16x16xf32>
    %546 = arith.mulf %543, %545 : vector<16x16xf32>
    %547 = arith.addf %541, %546 : vector<16x16xf32>
    %c1_285 = arith.constant 1 : index
    %c5_286 = arith.constant 5 : index
    %c6_287 = arith.constant 6 : index
    %548 = vector.load %arg9[%c1_285, %c5_286, %c6_287] : memref<2x22x22xf32, #tpu.memory_space<vmem>>, vector<1x16x16xf32>
    %549 = vector.shape_cast %548 : vector<1x16x16xf32> to vector<16x16xf32>
    %c83 = arith.constant 83 : index
    %550 = memref.load %arg6[%c83] : memref<98xf32, #tpu.memory_space<smem>>
    %551 = vector.broadcast %550 : f32 to vector<16x16xf32>
    %552 = arith.mulf %549, %551 : vector<16x16xf32>
    %553 = arith.addf %547, %552 : vector<16x16xf32>
    %c0_288 = arith.constant 0 : index
    %c6_289 = arith.constant 6 : index
    %c0_290 = arith.constant 0 : index
    %554 = vector.load %arg9[%c0_288, %c6_289, %c0_290] : memref<2x22x22xf32, #tpu.memory_space<vmem>>, vector<1x16x16xf32>
    %555 = vector.shape_cast %554 : vector<1x16x16xf32> to vector<16x16xf32>
    %c84 = arith.constant 84 : index
    %556 = memref.load %arg6[%c84] : memref<98xf32, #tpu.memory_space<smem>>
    %557 = vector.broadcast %556 : f32 to vector<16x16xf32>
    %558 = arith.mulf %555, %557 : vector<16x16xf32>
    %559 = arith.addf %553, %558 : vector<16x16xf32>
    %c1_291 = arith.constant 1 : index
    %c6_292 = arith.constant 6 : index
    %c0_293 = arith.constant 0 : index
    %560 = vector.load %arg9[%c1_291, %c6_292, %c0_293] : memref<2x22x22xf32, #tpu.memory_space<vmem>>, vector<1x16x16xf32>
    %561 = vector.shape_cast %560 : vector<1x16x16xf32> to vector<16x16xf32>
    %c85 = arith.constant 85 : index
    %562 = memref.load %arg6[%c85] : memref<98xf32, #tpu.memory_space<smem>>
    %563 = vector.broadcast %562 : f32 to vector<16x16xf32>
    %564 = arith.mulf %561, %563 : vector<16x16xf32>
    %565 = arith.addf %559, %564 : vector<16x16xf32>
    %c0_294 = arith.constant 0 : index
    %c6_295 = arith.constant 6 : index
    %c1_296 = arith.constant 1 : index
    %566 = vector.load %arg9[%c0_294, %c6_295, %c1_296] : memref<2x22x22xf32, #tpu.memory_space<vmem>>, vector<1x16x16xf32>
    %567 = vector.shape_cast %566 : vector<1x16x16xf32> to vector<16x16xf32>
    %c86 = arith.constant 86 : index
    %568 = memref.load %arg6[%c86] : memref<98xf32, #tpu.memory_space<smem>>
    %569 = vector.broadcast %568 : f32 to vector<16x16xf32>
    %570 = arith.mulf %567, %569 : vector<16x16xf32>
    %571 = arith.addf %565, %570 : vector<16x16xf32>
    %c1_297 = arith.constant 1 : index
    %c6_298 = arith.constant 6 : index
    %c1_299 = arith.constant 1 : index
    %572 = vector.load %arg9[%c1_297, %c6_298, %c1_299] : memref<2x22x22xf32, #tpu.memory_space<vmem>>, vector<1x16x16xf32>
    %573 = vector.shape_cast %572 : vector<1x16x16xf32> to vector<16x16xf32>
    %c87 = arith.constant 87 : index
    %574 = memref.load %arg6[%c87] : memref<98xf32, #tpu.memory_space<smem>>
    %575 = vector.broadcast %574 : f32 to vector<16x16xf32>
    %576 = arith.mulf %573, %575 : vector<16x16xf32>
    %577 = arith.addf %571, %576 : vector<16x16xf32>
    %c0_300 = arith.constant 0 : index
    %c6_301 = arith.constant 6 : index
    %c2_302 = arith.constant 2 : index
    %578 = vector.load %arg9[%c0_300, %c6_301, %c2_302] : memref<2x22x22xf32, #tpu.memory_space<vmem>>, vector<1x16x16xf32>
    %579 = vector.shape_cast %578 : vector<1x16x16xf32> to vector<16x16xf32>
    %c88 = arith.constant 88 : index
    %580 = memref.load %arg6[%c88] : memref<98xf32, #tpu.memory_space<smem>>
    %581 = vector.broadcast %580 : f32 to vector<16x16xf32>
    %582 = arith.mulf %579, %581 : vector<16x16xf32>
    %583 = arith.addf %577, %582 : vector<16x16xf32>
    %c1_303 = arith.constant 1 : index
    %c6_304 = arith.constant 6 : index
    %c2_305 = arith.constant 2 : index
    %584 = vector.load %arg9[%c1_303, %c6_304, %c2_305] : memref<2x22x22xf32, #tpu.memory_space<vmem>>, vector<1x16x16xf32>
    %585 = vector.shape_cast %584 : vector<1x16x16xf32> to vector<16x16xf32>
    %c89 = arith.constant 89 : index
    %586 = memref.load %arg6[%c89] : memref<98xf32, #tpu.memory_space<smem>>
    %587 = vector.broadcast %586 : f32 to vector<16x16xf32>
    %588 = arith.mulf %585, %587 : vector<16x16xf32>
    %589 = arith.addf %583, %588 : vector<16x16xf32>
    %c0_306 = arith.constant 0 : index
    %c6_307 = arith.constant 6 : index
    %c3_308 = arith.constant 3 : index
    %590 = vector.load %arg9[%c0_306, %c6_307, %c3_308] : memref<2x22x22xf32, #tpu.memory_space<vmem>>, vector<1x16x16xf32>
    %591 = vector.shape_cast %590 : vector<1x16x16xf32> to vector<16x16xf32>
    %c90 = arith.constant 90 : index
    %592 = memref.load %arg6[%c90] : memref<98xf32, #tpu.memory_space<smem>>
    %593 = vector.broadcast %592 : f32 to vector<16x16xf32>
    %594 = arith.mulf %591, %593 : vector<16x16xf32>
    %595 = arith.addf %589, %594 : vector<16x16xf32>
    %c1_309 = arith.constant 1 : index
    %c6_310 = arith.constant 6 : index
    %c3_311 = arith.constant 3 : index
    %596 = vector.load %arg9[%c1_309, %c6_310, %c3_311] : memref<2x22x22xf32, #tpu.memory_space<vmem>>, vector<1x16x16xf32>
    %597 = vector.shape_cast %596 : vector<1x16x16xf32> to vector<16x16xf32>
    %c91 = arith.constant 91 : index
    %598 = memref.load %arg6[%c91] : memref<98xf32, #tpu.memory_space<smem>>
    %599 = vector.broadcast %598 : f32 to vector<16x16xf32>
    %600 = arith.mulf %597, %599 : vector<16x16xf32>
    %601 = arith.addf %595, %600 : vector<16x16xf32>
    %c0_312 = arith.constant 0 : index
    %c6_313 = arith.constant 6 : index
    %c4_314 = arith.constant 4 : index
    %602 = vector.load %arg9[%c0_312, %c6_313, %c4_314] : memref<2x22x22xf32, #tpu.memory_space<vmem>>, vector<1x16x16xf32>
    %603 = vector.shape_cast %602 : vector<1x16x16xf32> to vector<16x16xf32>
    %c92 = arith.constant 92 : index
    %604 = memref.load %arg6[%c92] : memref<98xf32, #tpu.memory_space<smem>>
    %605 = vector.broadcast %604 : f32 to vector<16x16xf32>
    %606 = arith.mulf %603, %605 : vector<16x16xf32>
    %607 = arith.addf %601, %606 : vector<16x16xf32>
    %c1_315 = arith.constant 1 : index
    %c6_316 = arith.constant 6 : index
    %c4_317 = arith.constant 4 : index
    %608 = vector.load %arg9[%c1_315, %c6_316, %c4_317] : memref<2x22x22xf32, #tpu.memory_space<vmem>>, vector<1x16x16xf32>
    %609 = vector.shape_cast %608 : vector<1x16x16xf32> to vector<16x16xf32>
    %c93 = arith.constant 93 : index
    %610 = memref.load %arg6[%c93] : memref<98xf32, #tpu.memory_space<smem>>
    %611 = vector.broadcast %610 : f32 to vector<16x16xf32>
    %612 = arith.mulf %609, %611 : vector<16x16xf32>
    %613 = arith.addf %607, %612 : vector<16x16xf32>
    %c0_318 = arith.constant 0 : index
    %c6_319 = arith.constant 6 : index
    %c5_320 = arith.constant 5 : index
    %614 = vector.load %arg9[%c0_318, %c6_319, %c5_320] : memref<2x22x22xf32, #tpu.memory_space<vmem>>, vector<1x16x16xf32>
    %615 = vector.shape_cast %614 : vector<1x16x16xf32> to vector<16x16xf32>
    %c94 = arith.constant 94 : index
    %616 = memref.load %arg6[%c94] : memref<98xf32, #tpu.memory_space<smem>>
    %617 = vector.broadcast %616 : f32 to vector<16x16xf32>
    %618 = arith.mulf %615, %617 : vector<16x16xf32>
    %619 = arith.addf %613, %618 : vector<16x16xf32>
    %c1_321 = arith.constant 1 : index
    %c6_322 = arith.constant 6 : index
    %c5_323 = arith.constant 5 : index
    %620 = vector.load %arg9[%c1_321, %c6_322, %c5_323] : memref<2x22x22xf32, #tpu.memory_space<vmem>>, vector<1x16x16xf32>
    %621 = vector.shape_cast %620 : vector<1x16x16xf32> to vector<16x16xf32>
    %c95 = arith.constant 95 : index
    %622 = memref.load %arg6[%c95] : memref<98xf32, #tpu.memory_space<smem>>
    %623 = vector.broadcast %622 : f32 to vector<16x16xf32>
    %624 = arith.mulf %621, %623 : vector<16x16xf32>
    %625 = arith.addf %619, %624 : vector<16x16xf32>
    %c0_324 = arith.constant 0 : index
    %c6_325 = arith.constant 6 : index
    %c6_326 = arith.constant 6 : index
    %626 = vector.load %arg9[%c0_324, %c6_325, %c6_326] : memref<2x22x22xf32, #tpu.memory_space<vmem>>, vector<1x16x16xf32>
    %627 = vector.shape_cast %626 : vector<1x16x16xf32> to vector<16x16xf32>
    %c96 = arith.constant 96 : index
    %628 = memref.load %arg6[%c96] : memref<98xf32, #tpu.memory_space<smem>>
    %629 = vector.broadcast %628 : f32 to vector<16x16xf32>
    %630 = arith.mulf %627, %629 : vector<16x16xf32>
    %631 = arith.addf %625, %630 : vector<16x16xf32>
    %c1_327 = arith.constant 1 : index
    %c6_328 = arith.constant 6 : index
    %c6_329 = arith.constant 6 : index
    %632 = vector.load %arg9[%c1_327, %c6_328, %c6_329] : memref<2x22x22xf32, #tpu.memory_space<vmem>>, vector<1x16x16xf32>
    %633 = vector.shape_cast %632 : vector<1x16x16xf32> to vector<16x16xf32>
    %c97 = arith.constant 97 : index
    %634 = memref.load %arg6[%c97] : memref<98xf32, #tpu.memory_space<smem>>
    %635 = vector.broadcast %634 : f32 to vector<16x16xf32>
    %636 = arith.mulf %633, %635 : vector<16x16xf32>
    %637 = arith.addf %631, %636 : vector<16x16xf32>
    %c0_330 = arith.constant 0 : index
    %638 = memref.load %arg7[%c0_330] : memref<1xf32, #tpu.memory_space<smem>>
    %639 = vector.broadcast %638 : f32 to vector<16x16xf32>
    %640 = arith.addf %637, %639 : vector<16x16xf32>
    %641 = arith.negf %640 : vector<16x16xf32>
    %642 = math.exp %641 : vector<16x16xf32>
    %cst_331 = arith.constant 1.000000e+00 : f32
    %643 = vector.broadcast %cst_331 : f32 to vector<16x16xf32>
    %644 = arith.addf %643, %642 : vector<16x16xf32>
    %645 = arith.divf %643, %644 : vector<16x16xf32>
    %646 = vector.shape_cast %645 : vector<16x16xf32> to vector<16x16x1xf32>
    %647 = vector.broadcast %646 : vector<16x16x1xf32> to vector<16x16x128xf32>
    %648 = arith.mulf %36, %647 : vector<16x16x128xf32>
    %c0_332 = arith.constant 0 : index
    %c0_333 = arith.constant 0 : index
    %c0_334 = arith.constant 0 : index
    %c0_335 = arith.constant 0 : index
    %649 = vector.load %arg8[%c0_332, %c0_333, %c0_334, %c0_335] : memref<1x16x16x128xf32, #tpu.memory_space<vmem>>, vector<1x16x16x128xf32>
    %650 = vector.shape_cast %649 : vector<1x16x16x128xf32> to vector<16x16x128xf32>
    %651 = vector.shape_cast %648 : vector<16x16x128xf32> to vector<1x16x16x128xf32>
    tpu.vector_store %arg8[%c0_332, %c0_333, %c0_334, %c0_335], %651 {strides = array<i32>} : memref<1x16x16x128xf32, #tpu.memory_space<vmem>>, vector<1x16x16x128xf32>,
    return
  }
  func.func @transform_0(%arg0: i32) -> (i32, i32, i32, i32) {
    %c0_i32 = arith.constant 0 : i32
    %c0_i32_0 = arith.constant 0 : i32
    %c0_i32_1 = arith.constant 0 : i32
    %c0_i32_2 = arith.constant 0 : i32
    return %arg0, %c0_i32, %c0_i32_0, %c0_i32_1 : i32, i32, i32, i32
  }
  func.func @transform_1(%arg0: i32) -> (i32, i32) {
    %c0_i32 = arith.constant 0 : i32
    %c0_i32_0 = arith.constant 0 : i32
    %c0_i32_1 = arith.constant 0 : i32
    return %c0_i32, %c0_i32_0 : i32, i32
  }
  func.func @transform_2(%arg0: i32) -> (i32, i32) {
    %c0_i32 = arith.constant 0 : i32
    %c0_i32_0 = arith.constant 0 : i32
    %c0_i32_1 = arith.constant 0 : i32
    return %c0_i32, %c0_i32_0 : i32, i32
  }
  func.func @transform_3(%arg0: i32) -> (i32, i32) {
    %c0_i32 = arith.constant 0 : i32
    %c0_i32_0 = arith.constant 0 : i32
    %c0_i32_1 = arith.constant 0 : i32
    return %c0_i32, %c0_i32_0 : i32, i32
  }
  func.func @transform_4(%arg0: i32) -> (i32, i32) {
    %c0_i32 = arith.constant 0 : i32
    %c0_i32_0 = arith.constant 0 : i32
    %c0_i32_1 = arith.constant 0 : i32
    return %c0_i32, %c0_i32_0 : i32, i32
  }
  func.func @transform_5(%arg0: i32) -> i32 {
    %c0_i32 = arith.constant 0 : i32
    %c0_i32_0 = arith.constant 0 : i32
    return %c0_i32 : i32
  }
  func.func @transform_6(%arg0: i32) -> i32 {
    %c0_i32 = arith.constant 0 : i32
    %c0_i32_0 = arith.constant 0 : i32
    return %c0_i32 : i32
  }
  func.func @transform_7(%arg0: i32) -> (i32, i32, i32, i32) {
    %c0_i32 = arith.constant 0 : i32
    %c0_i32_0 = arith.constant 0 : i32
    %c0_i32_1 = arith.constant 0 : i32
    %c0_i32_2 = arith.constant 0 : i32
    return %arg0, %c0_i32, %c0_i32_0, %c0_i32_1 : i32, i32, i32, i32
  }
}

</mosaic_0001>

<llo_original>
// kernel: tpu_custom_call.1
$region0: #{tpu_custom_call.1}
  #allocation0 [shape = 'u32[]', space=smem, size = 0x4, offset = 0x4, fixed_abs, tag = 'smem constant byte address 0x4 - core index']
  #allocation1 [shape = 'u32[144,128]{1,0:T(1,128)}', space=vmem, size = 0x12000, scoped, tag = 'internal scratch']
  #allocation2 [shape = 'f32[2,22,22]{2,1,0:T(8,128)}', space=vmem, size = 0x6000, scoped, tag = 'scratch operand']
  #allocation3 [shape = 'f32[1]{0:T(128)S(6)}', space=smem, size = 0x200, scoped, tag = 'scoped memory for tpu_custom_call.1']
  %s0 = inlined_call_operand.hbm [shape: f32[2,16,16,128], index: 0, kind: input, shape index: {}]
  %s1 = inlined_call_operand.vmem [shape: bf16[128,8], index: 1, kind: input, shape index: {}]
  %s2 = inlined_call_operand.vmem [shape: f32[1,8], index: 2, kind: input, shape index: {}]
  %s3 = inlined_call_operand.vmem [shape: bf16[8,128], index: 3, kind: input, shape index: {}]
  %s4 = inlined_call_operand.vmem [shape: f32[1,128], index: 4, kind: input, shape index: {}]
  %s5 = inlined_call_operand.vmem [shape: f32[98], index: 5, kind: input, shape index: {}]
  %s6 = inlined_call_operand.<no memory space> [shape: f32[1], index: 6, kind: input, shape index: {}]
  %s7 = inlined_call_operand.hbm [shape: f32[2,16,16,128], index: 7, kind: output, shape index: {}]
  %s8 = sld [smem:[#allocation0]]
  $region69: #{tpu_custom_call.1} parent=0
    _
  %s10 = ssub.s32 1, %s8
  %s11 = scalar_select 0, %s10, %s8
  %12 = sst [smem:[#allocation3]] %s6
  $region1: #{tpu_custom_call.1} parent=0
    #allocation4 [shape = 'u8[262144]{0}', space=vmem, size = 0x40000, scoped, tag = 'input window, operand 0']
    #allocation5 [shape = 's32[2]{0}', space=sflag, size = 0x8, scoped, tag = 'scoped memory for tpu_custom_call.1']
    #allocation6 [shape = 's32[2]{0}', space=sflag, size = 0x8, scoped, tag = 'scoped memory for tpu_custom_call.1']
    #allocation7 [shape = 's32[2]{0}', space=sflag, size = 0x8, scoped, tag = 'scoped memory for tpu_custom_call.1']
    #allocation8 [shape = 'u8[512]{0}', space=smem, size = 0x200, scoped, tag = 'input window, operand 5, single buffered']
    #allocation9 [shape = 'u8[262144]{0}', space=vmem, size = 0x40000, scoped, tag = 'output window, operand 0']
    %13 = vsyncpa [#allocation5], 0
    %s14 = scalar_lea.sflag [#allocation5], 1
    %15 = vsyncpa %s14, 0
    %16 = vsyncpa [#allocation7], 0
    %17 = vsyncpa [#allocation6], 0
    %s18 = scalar_lea.sflag [#allocation6], 1
    %19 = vsyncpa %s18, 0
    loop: start=0, step=1, limit=4
    $region2: #{tpu_custom_call.1} parent=1 // loop_pre_header
      _
    $region3: #{tpu_custom_call.1} parent=1 // loop_header
      %s21 = sphi 0, %s25
      %p22 = scmp.ge.s32.totalorder %s21, 4
      %s31 = sphi 0, %s33
      %s34 = sphi 0, %s31
      %s35 = sphi 0, %s34
      %s51 = sphi 0, %s35
      %s55 = sphi 0, %s55
      %s57 = sphi 0, %s55
      %s58 = sphi 0, %s57
      %s72 = sphi 0, %s58
      %s76 = sphi 0, %s76
      %s78 = sphi 0, %s76
      %s79 = sphi 0, %s78
      %s93 = sphi 0, %s79
      %s97 = sphi 0, %s97
      %s99 = sphi 0, %s97
      %s100 = sphi 0, %s99
      %s114 = sphi 0, %s100
      %s118 = sphi 0, %s118
      %s120 = sphi 0, %s118
      %s121 = sphi 0, %s120
      %s135 = sphi 0, %s121
      %s139 = sphi 0, %s139
      %s141 = sphi 0, %s139
      %s142 = sphi 0, %s141
      %s156 = sphi 0, %s142
      %s160 = sphi 0, %s160
      %s162 = sphi 0, %s160
      %s163 = sphi 0, %s162
      %s177 = sphi 0, %s163
      %s183 = sphi 0, %s185
      %s186 = sphi 0, %s183
      %s187 = sphi 0, %s186
      %s203 = sphi 0, %s187
    $region4: #{tpu_custom_call.1} parent=1 // loop_header_branch
      %24 = sbr.rel (%p22) target = $region8
    $region5: #{tpu_custom_call.1} parent=1 // loop_body
      %s26 = ssub.s32 %s21, 1
      %s27 = ssub.s32 %s21, 2
      %s28 = sadd.s32 %s21, 1
      %s29 = ssub.s32 %s21, %s28
      %p30 = scmp.eq.s32.totalorder %s29, 0
      %s32 = sadd.s32 %s31, 1
      %s33 = scalar_select %p30, %s31, %s32
      %p36 = pneg %p30
      %p37 = scmp.eq.s32.totalorder %s21, 1
      %p38 = por %p36, %p37
      %p39 = scmp.ne.s32.totalorder %s31, %s34
      %p40 = scmp.eq.s32.totalorder %s21, 0
      %p41 = por %p39, %p40
      %p42 = scmp.ne.s32.totalorder %s31, %s34
      %p43 = scmp.eq.s32.totalorder %s26, 1
      %p44 = por %p42, %p43
      %p45 = scmp.ne.s32.totalorder %s34, %s35
      %p46 = scmp.eq.s32.totalorder %s26, 0
      %p47 = por %p45, %p46
      %p48 = scmp.ne.s32.totalorder %s34, %s35
      %p49 = scmp.eq.s32.totalorder %s27, 1
      %p50 = por %p48, %p49
      %p52 = scmp.ne.s32.totalorder %s35, %s51
      %p53 = scmp.eq.s32.totalorder %s27, 0
      %p54 = por %p52, %p53
      %s56 = sadd.s32 %s55, 1
      %p59 = scmp.eq.s32.totalorder %s21, 1
      %p60 = scmp.ne.s32.totalorder %s55, %s57
      %p61 = scmp.eq.s32.totalorder %s21, 0
      %p62 = por %p60, %p61
      %p63 = scmp.ne.s32.totalorder %s55, %s57
      %p64 = scmp.eq.s32.totalorder %s26, 1
      %p65 = por %p63, %p64
      %p66 = scmp.ne.s32.totalorder %s57, %s58
      %p67 = scmp.eq.s32.totalorder %s26, 0
      %p68 = por %p66, %p67
      %p69 = scmp.ne.s32.totalorder %s57, %s58
      %p70 = scmp.eq.s32.totalorder %s27, 1
      %p71 = por %p69, %p70
      %p73 = scmp.ne.s32.totalorder %s58, %s72
      %p74 = scmp.eq.s32.totalorder %s27, 0
      %p75 = por %p73, %p74
      %s77 = sadd.s32 %s76, 1
      %p80 = scmp.eq.s32.totalorder %s21, 1
      %p81 = scmp.ne.s32.totalorder %s76, %s78
      %p82 = scmp.eq.s32.totalorder %s21, 0
      %p83 = por %p81, %p82
      %p84 = scmp.ne.s32.totalorder %s76, %s78
      %p85 = scmp.eq.s32.totalorder %s26, 1
      %p86 = por %p84, %p85
      %p87 = scmp.ne.s32.totalorder %s78, %s79
      %p88 = scmp.eq.s32.totalorder %s26, 0
      %p89 = por %p87, %p88
      %p90 = scmp.ne.s32.totalorder %s78, %s79
      %p91 = scmp.eq.s32.totalorder %s27, 1
      %p92 = por %p90, %p91
      %p94 = scmp.ne.s32.totalorder %s79, %s93
      %p95 = scmp.eq.s32.totalorder %s27, 0
      %p96 = por %p94, %p95
      %s98 = sadd.s32 %s97, 1
      %p101 = scmp.eq.s32.totalorder %s21, 1
      %p102 = scmp.ne.s32.totalorder %s97, %s99
      %p103 = scmp.eq.s32.totalorder %s21, 0
      %p104 = por %p102, %p103
      %p105 = scmp.ne.s32.totalorder %s97, %s99
      %p106 = scmp.eq.s32.totalorder %s26, 1
      %p107 = por %p105, %p106
      %p108 = scmp.ne.s32.totalorder %s99, %s100
      %p109 = scmp.eq.s32.totalorder %s26, 0
      %p110 = por %p108, %p109
      %p111 = scmp.ne.s32.totalorder %s99, %s100
      %p112 = scmp.eq.s32.totalorder %s27, 1
      %p113 = por %p111, %p112
      %p115 = scmp.ne.s32.totalorder %s100, %s114
      %p116 = scmp.eq.s32.totalorder %s27, 0
      %p117 = por %p115, %p116
      %s119 = sadd.s32 %s118, 1
      %p122 = scmp.eq.s32.totalorder %s21, 1
      %p123 = scmp.ne.s32.totalorder %s118, %s120
      %p124 = scmp.eq.s32.totalorder %s21, 0
      %p125 = por %p123, %p124
      %p126 = scmp.ne.s32.totalorder %s118, %s120
      %p127 = scmp.eq.s32.totalorder %s26, 1
      %p128 = por %p126, %p127
      %p129 = scmp.ne.s32.totalorder %s120, %s121
      %p130 = scmp.eq.s32.totalorder %s26, 0
      %p131 = por %p129, %p130
      %p132 = scmp.ne.s32.totalorder %s120, %s121
      %p133 = scmp.eq.s32.totalorder %s27, 1
      %p134 = por %p132, %p133
      %p136 = scmp.ne.s32.totalorder %s121, %s135
      %p137 = scmp.eq.s32.totalorder %s27, 0
      %p138 = por %p136, %p137
      %s140 = sadd.s32 %s139, 1
      %p143 = scmp.eq.s32.totalorder %s21, 1
      %p144 = scmp.ne.s32.totalorder %s139, %s141
      %p145 = scmp.eq.s32.totalorder %s21, 0
      %p146 = por %p144, %p145
      %p147 = scmp.ne.s32.totalorder %s139, %s141
      %p148 = scmp.eq.s32.totalorder %s26, 1
      %p149 = por %p147, %p148
      %p150 = scmp.ne.s32.totalorder %s141, %s142
      %p151 = scmp.eq.s32.totalorder %s26, 0
      %p152 = por %p150, %p151
      %p153 = scmp.ne.s32.totalorder %s141, %s142
      %p154 = scmp.eq.s32.totalorder %s27, 1
      %p155 = por %p153, %p154
      %p157 = scmp.ne.s32.totalorder %s142, %s156
      %p158 = scmp.eq.s32.totalorder %s27, 0
      %p159 = por %p157, %p158
      %s161 = sadd.s32 %s160, 1
      %p164 = scmp.eq.s32.totalorder %s21, 1
      %p165 = scmp.ne.s32.totalorder %s160, %s162
      %p166 = scmp.eq.s32.totalorder %s21, 0
      %p167 = por %p165, %p166
      %p168 = scmp.ne.s32.totalorder %s160, %s162
      %p169 = scmp.eq.s32.totalorder %s26, 1
      %p170 = por %p168, %p169
      %p171 = scmp.ne.s32.totalorder %s162, %s163
      %p172 = scmp.eq.s32.totalorder %s26, 0
      %p173 = por %p171, %p172
      %p174 = scmp.ne.s32.totalorder %s162, %s163
      %p175 = scmp.eq.s32.totalorder %s27, 1
      %p176 = por %p174, %p175
      %p178 = scmp.ne.s32.totalorder %s163, %s177
      %p179 = scmp.eq.s32.totalorder %s27, 0
      %p180 = por %p178, %p179
      %s181 = ssub.s32 %s21, %s28
      %p182 = scmp.eq.s32.totalorder %s181, 0
      %s184 = sadd.s32 %s183, 1
      %s185 = scalar_select %p182, %s183, %s184
      %p188 = pneg %p182
      %p189 = scmp.eq.s32.totalorder %s21, 1
      %p190 = por %p188, %p189
      %p191 = scmp.ne.s32.totalorder %s183, %s186
      %p192 = scmp.eq.s32.totalorder %s21, 0
      %p193 = por %p191, %p192
      %p194 = scmp.ne.s32.totalorder %s183, %s186
      %p195 = scmp.eq.s32.totalorder %s26, 1
      %p196 = por %p194, %p195
      %p197 = scmp.ne.s32.totalorder %s186, %s187
      %p198 = scmp.eq.s32.totalorder %s26, 0
      %p199 = por %p197, %p198
      %p200 = scmp.ne.s32.totalorder %s186, %s187
      %p201 = scmp.eq.s32.totalorder %s27, 1
      %p202 = por %p200, %p201
      %p204 = scmp.ne.s32.totalorder %s187, %s203
      %p205 = scmp.eq.s32.totalorder %s27, 0
      %p206 = por %p204, %p205
      %p207 = scmp.le.s32.totalorder 1, %s21
      %p208 = scmp.lt.s32.totalorder %s21, 3
      %p209 = pnand %p207, %p208
      %p210 = pneg %p209
      // Predicated region
      $region9: #{tpu_custom_call.1} parent=5 // pred_check
        _
      $region10: #{tpu_custom_call.1} parent=5 // pred_check_branch
        %212 = sbr.rel (%p209) target = $region12
      $region11: #{tpu_custom_call.1} parent=5 // pred_region
        %s213 = ssub.s32 %s21, 1
        // Predicated region
        $region13: #{tpu_custom_call.1} parent=11 // pred_check
          %p214 = pneg %p68
        $region14: #{tpu_custom_call.1} parent=11 // pred_check_branch
          %216 = sbr.rel (%p214) target = $region16
        $region15: #{tpu_custom_call.1} parent=11 // pred_region
          _
        $region16: #{tpu_custom_call.1} parent=11 // pred_fallthru
          _
        // Predicated region
        $region17: #{tpu_custom_call.1} parent=11 // pred_check
          %p217 = pneg %p89
        $region18: #{tpu_custom_call.1} parent=11 // pred_check_branch
          %219 = sbr.rel (%p217) target = $region20
        $region19: #{tpu_custom_call.1} parent=11 // pred_region
          _
        $region20: #{tpu_custom_call.1} parent=11 // pred_fallthru
          _
        // Predicated region
        $region21: #{tpu_custom_call.1} parent=11 // pred_check
          %p220 = pneg %p110
        $region22: #{tpu_custom_call.1} parent=11 // pred_check_branch
          %222 = sbr.rel (%p220) target = $region24
        $region23: #{tpu_custom_call.1} parent=11 // pred_region
          _
        $region24: #{tpu_custom_call.1} parent=11 // pred_fallthru
          _
        // Predicated region
        $region25: #{tpu_custom_call.1} parent=11 // pred_check
          %p223 = pneg %p131
        $region26: #{tpu_custom_call.1} parent=11 // pred_check_branch
          %225 = sbr.rel (%p223) target = $region28
        $region27: #{tpu_custom_call.1} parent=11 // pred_region
          _
        $region28: #{tpu_custom_call.1} parent=11 // pred_fallthru
          _
        // Predicated region
        $region29: #{tpu_custom_call.1} parent=11 // pred_check
          %p226 = pneg %p152
        $region30: #{tpu_custom_call.1} parent=11 // pred_check_branch
          %228 = sbr.rel (%p226) target = $region32
        $region31: #{tpu_custom_call.1} parent=11 // pred_region
          %s230 = ssub.s32 16, 16
          %231 = vsyncadd [#allocation7], %s230
          %s233 = sshll.u32 %s5, 4
          %s234 = int_to_ptr.vmem [resolvable:$true] %s233
          %236 = dma.vmem_to_smem %s234, 16, [#allocation8], [#allocation7]
        $region32: #{tpu_custom_call.1} parent=11 // pred_fallthru
          _
        // Predicated region
        $region33: #{tpu_custom_call.1} parent=11 // pred_check
          %p237 = pneg %p173
        $region34: #{tpu_custom_call.1} parent=11 // pred_check_branch
          %239 = sbr.rel (%p237) target = $region36
        $region35: #{tpu_custom_call.1} parent=11 // pred_region
          _
        $region36: #{tpu_custom_call.1} parent=11 // pred_fallthru
          _
      $region12: #{tpu_custom_call.1} parent=5 // pred_fallthru
        _
      %p240 = scmp.lt.s32.totalorder %s21, 2
      // Predicated region
      $region37: #{tpu_custom_call.1} parent=5 // pred_check
        %p241 = pneg %p240
      $region38: #{tpu_custom_call.1} parent=5 // pred_check_branch
        %243 = sbr.rel (%p241) target = $region40
      $region39: #{tpu_custom_call.1} parent=5 // pred_region
        // Predicated region
        $region41: #{tpu_custom_call.1} parent=39 // pred_check
          %p244 = pneg %p41
        $region42: #{tpu_custom_call.1} parent=39 // pred_check_branch
          %246 = sbr.rel (%p244) target = $region44
        $region43: #{tpu_custom_call.1} parent=39 // pred_region
          %s247 = sand.u32 %s31, 1
          %s248 = scalar_lea.sflag [#allocation5], %s247
          %s249 = sand.u32 %s31, 1
          %s250 = smul.addr %s249, 256
          %s251 = scalar_lea.vmem [#allocation4], %s250
          %s253 = ssub.s32 4096, 4096
          %254 = vsyncadd %s248, %s253
          %s255 = smul.addr %s21, 32
          %s256 = smul.addr %s255, 128
          %s257 = scalar_lea.hbm %s0, %s256
          %s258 = sshll.u32 %s251, 4
          %s259 = int_to_ptr.vmem [resolvable:$true] %s258
          %264 = dma.hbm_to_vmem [thread:$0]  %s257, 4096, %s259, %s248, 128, 128, 8
        $region44: #{tpu_custom_call.1} parent=39 // pred_fallthru
          _
      $region40: #{tpu_custom_call.1} parent=5 // pred_fallthru
        _
      %p265 = scmp.le.s32.totalorder 1, %s21
      %p266 = scmp.lt.s32.totalorder %s21, 3
      %p267 = pnand %p265, %p266
      %p268 = pneg %p267
      // Predicated region
      $region45: #{tpu_custom_call.1} parent=5 // pred_check
        _
      $region46: #{tpu_custom_call.1} parent=5 // pred_check_branch
        %270 = sbr.rel (%p267) target = $region48
      $region47: #{tpu_custom_call.1} parent=5 // pred_region
        %s271 = ssub.s32 %s21, 1
        %s272 = sand.u32 %s34, 1
        %s273 = scalar_lea.sflag [#allocation5], %s272
        %s274 = sand.u32 %s34, 1
        %s275 = smul.addr %s274, 256
        %s276 = scalar_lea.vmem [#allocation4], %s275
        // Predicated region
        $region49: #{tpu_custom_call.1} parent=47 // pred_check
          %p277 = pneg %p47
        $region50: #{tpu_custom_call.1} parent=47 // pred_check_branch
          %279 = sbr.rel (%p277) target = $region52
        $region51: #{tpu_custom_call.1} parent=47 // pred_region
          %280 = dma.done %s273, 4096
        $region52: #{tpu_custom_call.1} parent=47 // pred_fallthru
          _
        // Predicated region
        $region53: #{tpu_custom_call.1} parent=47 // pred_check
          %p281 = pneg %p152
        $region54: #{tpu_custom_call.1} parent=47 // pred_check_branch
          %283 = sbr.rel (%p281) target = $region56
        $region55: #{tpu_custom_call.1} parent=47 // pred_region
          %284 = dma.done [#allocation7], 16
        $region56: #{tpu_custom_call.1} parent=47 // pred_fallthru
          _
        %285 = sfence
        %s286 = sand.u32 %s34, 1
        %s287 = scalar_lea.sflag [#allocation5], %s286
        %s288 = sand.u32 %s34, 1
        %s289 = smul.addr %s288, 256
        %s290 = scalar_lea.vmem [#allocation4], %s289
        %p291 = pneg %p47
        %p292 = pneg %p44
        %p293 = pneg %p68
        %p294 = pneg %p65
        %p295 = pneg %p89
        %p296 = pneg %p86
        %p297 = pneg %p110
        %p298 = pneg %p107
        %p299 = pneg %p131
        %p300 = pneg %p128
        %p301 = pneg %p152
        %p302 = pneg %p149
        %p303 = pneg %p173
        %p304 = pneg %p170
        %p305 = pneg %p199
        %p306 = pneg %p196
        %s307 = sand.u32 %s186, 1
        %s308 = scalar_lea.sflag [#allocation6], %s307
        %s309 = sand.u32 %s186, 1
        %s310 = smul.addr %s309, 256
        %s311 = scalar_lea.vmem [#allocation9], %s310
        %v313 = vld [vmem:[%s276] sm:$0xff]
        %v314 = vld [vmem:[%s276 + $0x8] sm:$0xff]
        %v315 = vld [vmem:[%s276 + $0x10] sm:$0xff]
        %v316 = vld [vmem:[%s276 + $0x18] sm:$0xff]
        %v317 = vld [vmem:[%s276 + $0x20] sm:$0xff]
        %v318 = vld [vmem:[%s276 + $0x28] sm:$0xff]
        %v319 = vld [vmem:[%s276 + $0x30] sm:$0xff]
        %v320 = vld [vmem:[%s276 + $0x38] sm:$0xff]
        %v321 = vld [vmem:[%s276 + $0x40] sm:$0xff]
        %v322 = vld [vmem:[%s276 + $0x48] sm:$0xff]
        %v323 = vld [vmem:[%s276 + $0x50] sm:$0xff]
        %v324 = vld [vmem:[%s276 + $0x58] sm:$0xff]
        %v325 = vld [vmem:[%s276 + $0x60] sm:$0xff]
        %v326 = vld [vmem:[%s276 + $0x68] sm:$0xff]
        %v327 = vld [vmem:[%s276 + $0x70] sm:$0xff]
        %v328 = vld [vmem:[%s276 + $0x78] sm:$0xff]
        %v329 = vld [vmem:[%s276 + $0x80] sm:$0xff]
        %v330 = vld [vmem:[%s276 + $0x88] sm:$0xff]
        %v331 = vld [vmem:[%s276 + $0x90] sm:$0xff]
        %v332 = vld [vmem:[%s276 + $0x98] sm:$0xff]
        %v333 = vld [vmem:[%s276 + $0xa0] sm:$0xff]
        %v334 = vld [vmem:[%s276 + $0xa8] sm:$0xff]
        %v335 = vld [vmem:[%s276 + $0xb0] sm:$0xff]
        %v336 = vld [vmem:[%s276 + $0xb8] sm:$0xff]
        %v337 = vld [vmem:[%s276 + $0xc0] sm:$0xff]
        %v338 = vld [vmem:[%s276 + $0xc8] sm:$0xff]
        %v339 = vld [vmem:[%s276 + $0xd0] sm:$0xff]
        %v340 = vld [vmem:[%s276 + $0xd8] sm:$0xff]
        %v341 = vld [vmem:[%s276 + $0xe0] sm:$0xff]
        %v342 = vld [vmem:[%s276 + $0xe8] sm:$0xff]
        %v343 = vld [vmem:[%s276 + $0xf0] sm:$0xff]
        %v344 = vld [vmem:[%s276 + $0xf8] sm:$0xff]
        %v345 = vadd.f32 %v313, %v314
        %v346 = vadd.f32 %v345, %v315
        %v347 = vadd.f32 %v346, %v316
        %v348 = vadd.f32 %v347, %v317
        %v349 = vadd.f32 %v348, %v318
        %v350 = vadd.f32 %v349, %v319
        %v351 = vadd.f32 %v350, %v320
        %v352 = vadd.f32 %v351, %v321
        %v353 = vadd.f32 %v352, %v322
        %v354 = vadd.f32 %v353, %v323
        %v355 = vadd.f32 %v354, %v324
        %v356 = vadd.f32 %v355, %v325
        %v357 = vadd.f32 %v356, %v326
        %v358 = vadd.f32 %v357, %v327
        %v359 = vadd.f32 %v358, %v328
        %v360 = vadd.f32 %v359, %v329
        %v361 = vadd.f32 %v360, %v330
        %v362 = vadd.f32 %v361, %v331
        %v363 = vadd.f32 %v362, %v332
        %v364 = vadd.f32 %v363, %v333
        %v365 = vadd.f32 %v364, %v334
        %v366 = vadd.f32 %v365, %v335
        %v367 = vadd.f32 %v366, %v336
        %v368 = vadd.f32 %v367, %v337
        %v369 = vadd.f32 %v368, %v338
        %v370 = vadd.f32 %v369, %v339
        %v371 = vadd.f32 %v370, %v340
        %v372 = vadd.f32 %v371, %v341
        %v373 = vadd.f32 %v372, %v342
        %v374 = vadd.f32 %v373, %v343
        %v375 = vadd.f32 %v374, %v344
        %v376 = vrot.slane %v375, 4
        %v377 = vadd.f32 %v375, %v376
        %v378 = vrot.slane %v377, 2
        %v379 = vadd.f32 %v377, %v378
        %v380 = vrot.slane %v379, 1
        %v381 = vadd.f32 %v379, %v380
        %v382 = vrcp.pop 256.0
        %v383 = vmul.f32 %v381, %v382
        %v384 = vmax.f32 %v313, %v317
        %v385 = vmax.f32 %v314, %v318
        %v386 = vmax.f32 %v315, %v319
        %v387 = vmax.f32 %v316, %v320
        %v388 = vmax.f32 %v384, %v321
        %v389 = vmax.f32 %v385, %v322
        %v390 = vmax.f32 %v386, %v323
        %v391 = vmax.f32 %v387, %v324
        %v392 = vmax.f32 %v388, %v325
        %v393 = vmax.f32 %v389, %v326
        %v394 = vmax.f32 %v390, %v327
        %v395 = vmax.f32 %v391, %v328
        %v396 = vmax.f32 %v392, %v329
        %v397 = vmax.f32 %v393, %v330
        %v398 = vmax.f32 %v394, %v331
        %v399 = vmax.f32 %v395, %v332
        %v400 = vmax.f32 %v396, %v333
        %v401 = vmax.f32 %v397, %v334
        %v402 = vmax.f32 %v398, %v335
        %v403 = vmax.f32 %v399, %v336
        %v404 = vmax.f32 %v400, %v337
        %v405 = vmax.f32 %v401, %v338
        %v406 = vmax.f32 %v402, %v339
        %v407 = vmax.f32 %v403, %v340
        %v408 = vmax.f32 %v404, %v341
        %v409 = vmax.f32 %v405, %v342
        %v410 = vmax.f32 %v406, %v343
        %v411 = vmax.f32 %v407, %v344
        %v412 = vmax.f32 %v408, %v409
        %v413 = vmax.f32 %v410, %v411
        %v414 = vmax.f32 %v412, %v413
        %v415 = vrot.slane %v414, 4
        %v416 = vmax.f32 %v414, %v415
        %v417 = vrot.slane %v416, 2
        %v418 = vmax.f32 %v416, %v417
        %v419 = vrot.slane %v418, 1
        %v420 = vmax.f32 %v418, %v419
        %vm421 = vcmask 1040384
        %v422 = vsel %vm421, %v383, %v420
        %v423 = vpack.c.bf16 %v422, %v422
        %v424 = vld [vmem:[%s1] sm:$0xf]
        %v425 = vld [vmem:[%s1 + $0x4] sm:$0xf]
        %v426 = vld [vmem:[%s1 + $0x8] sm:$0xf]
        %v427 = vld [vmem:[%s1 + $0xc] sm:$0xf]
        %v428 = vld [vmem:[%s1 + $0x10] sm:$0xf]
        %v429 = vld [vmem:[%s1 + $0x14] sm:$0xf]
        %v430 = vld [vmem:[%s1 + $0x18] sm:$0xf]
        %v431 = vld [vmem:[%s1 + $0x1c] sm:$0xf]
        %v432 = vld [vmem:[%s1 + $0x20] sm:$0xf]
        %v433 = vld [vmem:[%s1 + $0x24] sm:$0xf]
        %v434 = vld [vmem:[%s1 + $0x28] sm:$0xf]
        %v435 = vld [vmem:[%s1 + $0x2c] sm:$0xf]
        %v436 = vld [vmem:[%s1 + $0x30] sm:$0xf]
        %v437 = vld [vmem:[%s1 + $0x34] sm:$0xf]
        %v438 = vld [vmem:[%s1 + $0x38] sm:$0xf]
        %v439 = vld [vmem:[%s1 + $0x3c] sm:$0xf]
        %v440 = vld [vmem:[%s2] sm:$0x1]
        %v442 = vlaneseq
        %v443 = vshrl.u32 %v442, 7
        %v444 = vsub.s32 0, %v443
        %v445 = vrot.slane %v440, %v444
        %v463 = vunpack.c.l.b16 %v424
        %v464 = vunpack.c.l.b16 %v425
        %v465 = vunpack.c.l.b16 %v426
        %v466 = vunpack.c.l.b16 %v427
        %v467 = vunpack.c.l.b16 %v428
        %v468 = vunpack.c.l.b16 %v429
        %v469 = vunpack.c.l.b16 %v430
        %v470 = vunpack.c.l.b16 %v431
        %v471 = vunpack.c.l.b16 %v432
        %v472 = vunpack.c.l.b16 %v433
        %v473 = vunpack.c.l.b16 %v434
        %v474 = vunpack.c.l.b16 %v435
        %v475 = vunpack.c.l.b16 %v436
        %v476 = vunpack.c.l.b16 %v437
        %v477 = vunpack.c.l.b16 %v438
        %v478 = vunpack.c.l.b16 %v439
        %v479 = vpack.c.b16 %v464, %v463
        %v480 = vpack.c.b16 %v466, %v465
        %v481 = vpack.c.b16 %v468, %v467
        %v482 = vpack.c.b16 %v470, %v469
        %v483 = vpack.c.b16 %v472, %v471
        %v484 = vpack.c.b16 %v474, %v473
        %v485 = vpack.c.b16 %v476, %v475
        %v486 = vpack.c.b16 %v478, %v477
        %495 = vmatprep.subr.bf16.mxu0 0
        %496 = vmatpush1.bf16.msra.mxu0 %v486
        %497 = vmatprep.subr.bf16.mxu0 0
        %498 = vmatpush1.bf16.msra.mxu0 %v485
        %499 = vmatprep.subr.bf16.mxu0 0
        %500 = vmatpush1.bf16.msra.mxu0 %v484
        %501 = vmatprep.subr.bf16.mxu0 0
        %502 = vmatpush1.bf16.msra.mxu0 %v483
        %503 = vmatprep.subr.bf16.mxu0 0
        %504 = vmatpush1.bf16.msra.mxu0 %v482
        %505 = vmatprep.subr.bf16.mxu0 0
        %506 = vmatpush1.bf16.msra.mxu0 %v481
        %507 = vmatprep.subr.bf16.mxu0 0
        %508 = vmatpush1.bf16.msra.mxu0 %v480
        %509 = vmatprep.subr.bf16.mxu0 0
        %510 = vmatpush1.bf16.msra.mxu0 %v479
        %511 = vmatprep.subr.bf16.mxu0 0
        %512 = vmatpush2.bf16.msra.mxu0 0
        %513 = vmatprep.subr.bf16.mxu0 0
        %514 = vmatpush2.bf16.msra.mxu0 0
        %515 = vmatprep.subr.bf16.mxu0 0
        %516 = vmatpush2.bf16.msra.mxu0 0
        %517 = vmatprep.subr.bf16.mxu0 0
        %518 = vmatpush2.bf16.msra.mxu0 0
        %519 = vmatprep.subr.bf16.mxu0 0
        %520 = vmatpush2.bf16.msra.mxu0 0
        %521 = vmatprep.subr.bf16.mxu0 0
        %522 = vmatpush2.bf16.msra.mxu0 0
        %523 = vmatprep.subr.bf16.mxu0 0
        %524 = vmatpush2.bf16.msra.mxu0 0
        %525 = vmatprep.subr.bf16.mxu0 0
        %526 = vmatpush2.bf16.msra.mxu0 0
        %527 = vmatprep.mubr.bf16.mxu0 0
        %528 = vmatmul.mubr.bf16.gmra.mxu0 %v423
        %v529 = vpop.f32.mrf.mxu0
        %v530 = vadd.f32 %v445, %v529
        %v531 = vpop.f32.mrf.mxu0
        %v532 = vpop.f32.mrf.mxu0
        %v533 = vpop.f32.mrf.mxu0
        %534 = vdwg.mxu0
        %v535 = vmax.f32 %v530, 0.0
        %v536 = vpack.c.bf16 %v535, %v535
        %v537 = vld [vmem:[%s3] sm:$0xf]
        %v538 = vld [vmem:[%s4] sm:$0x1]
        %v540 = vlaneseq
        %v541 = vshrl.u32 %v540, 7
        %v542 = vsub.s32 0, %v541
        %v543 = vrot.slane %v538, %v542
        %vm545 = vcmask 64512
        %v547 = vsel %vm545, %v536, 0
        %vm549 = vcmask 1043456
        %v551 = vsel %vm549, %v537, 0
        %553 = vmatprep.subr.bf16.mxu0 0
        %554 = vmatpush1.bf16.msra.mxu0 0
        %555 = vmatprep.subr.bf16.mxu0 0
        %556 = vmatpush1.bf16.msra.mxu0 0
        %557 = vmatprep.subr.bf16.mxu0 0
        %558 = vmatpush1.bf16.msra.mxu0 0
        %559 = vmatprep.subr.bf16.mxu0 0
        %560 = vmatpush1.bf16.msra.mxu0 0
        %561 = vmatprep.subr.bf16.mxu0 0
        %562 = vmatpush1.bf16.msra.mxu0 0
        %563 = vmatprep.subr.bf16.mxu0 0
        %564 = vmatpush1.bf16.msra.mxu0 0
        %565 = vmatprep.subr.bf16.mxu0 0
        %566 = vmatpush1.bf16.msra.mxu0 0
        %567 = vmatprep.subr.bf16.mxu0 0
        %568 = vmatpush1.bf16.msra.mxu0 %v551
        %569 = vmatprep.subr.bf16.mxu0 0
        %570 = vmatpush2.bf16.msra.mxu0 0
        %571 = vmatprep.subr.bf16.mxu0 0
        %572 = vmatpush2.bf16.msra.mxu0 0
        %573 = vmatprep.subr.bf16.mxu0 0
        %574 = vmatpush2.bf16.msra.mxu0 0
        %575 = vmatprep.subr.bf16.mxu0 0
        %576 = vmatpush2.bf16.msra.mxu0 0
        %577 = vmatprep.subr.bf16.mxu0 0
        %578 = vmatpush2.bf16.msra.mxu0 0
        %579 = vmatprep.subr.bf16.mxu0 0
        %580 = vmatpush2.bf16.msra.mxu0 0
        %581 = vmatprep.subr.bf16.mxu0 0
        %582 = vmatpush2.bf16.msra.mxu0 0
        %583 = vmatprep.subr.bf16.mxu0 0
        %584 = vmatpush2.bf16.msra.mxu0 0
        %585 = vmatprep.mubr.bf16.mxu0 0
        %586 = vmatmul.mubr.bf16.gmra.mxu0 %v547
        %v587 = vpop.f32.mrf.mxu0
        %v588 = vadd.f32 %v543, %v587
        %v589 = vpop.f32.mrf.mxu0
        %v590 = vpop.f32.mrf.mxu0
        %v591 = vpop.f32.mrf.mxu0
        %592 = vdwg.mxu0
        %v594 = vrot.slane %v588, 1
        %v596 = vadd.f32 %v588, %v594
        %v597 = vxor.u32 %v596, 2147483648
        %v598 = vmul.f32 %v597, 1.442695
        %v599 = vpow.pop %v598
        %v600 = vadd.f32 %v599, 1.0
        %v601 = vrcp.pop %v600
        %v602 = vmul.f32 1.0, %v601
        %v603 = vlaneseq
        %v604 = vshrl.u32 %v603, 7
        %v605 = vsub.s32 0, %v604
        %v606 = vrot.slane %v602, %v605
        %v607 = vmul.f32 %v313, %v606
        %v608 = vmul.f32 %v314, %v606
        %v609 = vmul.f32 %v315, %v606
        %v610 = vmul.f32 %v316, %v606
        %v611 = vmul.f32 %v317, %v606
        %v612 = vmul.f32 %v318, %v606
        %v613 = vmul.f32 %v319, %v606
        %v614 = vmul.f32 %v320, %v606
        %v615 = vmul.f32 %v321, %v606
        %v616 = vmul.f32 %v322, %v606
        %v617 = vmul.f32 %v323, %v606
        %v618 = vmul.f32 %v324, %v606
        %v619 = vmul.f32 %v325, %v606
        %v620 = vmul.f32 %v326, %v606
        %v621 = vmul.f32 %v327, %v606
        %v622 = vmul.f32 %v328, %v606
        %v623 = vmul.f32 %v329, %v606
        %v624 = vmul.f32 %v330, %v606
        %v625 = vmul.f32 %v331, %v606
        %v626 = vmul.f32 %v332, %v606
        %v627 = vmul.f32 %v333, %v606
        %v628 = vmul.f32 %v334, %v606
        %v629 = vmul.f32 %v335, %v606
        %v630 = vmul.f32 %v336, %v606
        %v631 = vmul.f32 %v337, %v606
        %v632 = vmul.f32 %v338, %v606
        %v633 = vmul.f32 %v339, %v606
        %v634 = vmul.f32 %v340, %v606
        %v635 = vmul.f32 %v341, %v606
        %v636 = vmul.f32 %v342, %v606
        %v637 = vmul.f32 %v343, %v606
        %v638 = vmul.f32 %v344, %v606
        %vm639 = vcmask 179200
        %640 = vst.msk [vmem:[#allocation2] sm:$0xff] %vm639, 0.0
        %641 = vst.msk [vmem:[#allocation2 + $0x8] sm:$0xff] %vm639, 0.0
        %vm642 = vcmask 177152
        %643 = vst.msk [vmem:[#allocation2 + $0x10] sm:$0x3f] %vm642, 0.0
        %644 = vst.msk [vmem:[#allocation2 + $0x18] sm:$0xff] %vm639, 0.0
        %645 = vst.msk [vmem:[#allocation2 + $0x20] sm:$0xff] %vm639, 0.0
        %646 = vst.msk [vmem:[#allocation2 + $0x28] sm:$0x3f] %vm642, 0.0
        %647 = vadd.xlane.f32.xlu0 %v607
        %v648 = vpop.xlane.xlu0 %647
        %649 = vadd.xlane.f32.xlu0 %v608
        %v650 = vpop.xlane.xlu0 %649
        %651 = vadd.xlane.f32.xlu0 %v609
        %v652 = vpop.xlane.xlu0 %651
        %653 = vadd.xlane.f32.xlu0 %v610
        %v654 = vpop.xlane.xlu0 %653
        %655 = vadd.xlane.f32.xlu0 %v611
        %v656 = vpop.xlane.xlu0 %655
        %657 = vadd.xlane.f32.xlu0 %v612
        %v658 = vpop.xlane.xlu0 %657
        %659 = vadd.xlane.f32.xlu0 %v613
        %v660 = vpop.xlane.xlu0 %659
        %661 = vadd.xlane.f32.xlu0 %v614
        %v662 = vpop.xlane.xlu0 %661
        %663 = vadd.xlane.f32.xlu0 %v615
        %v664 = vpop.xlane.xlu0 %663
        %665 = vadd.xlane.f32.xlu0 %v616
        %v666 = vpop.xlane.xlu0 %665
        %667 = vadd.xlane.f32.xlu0 %v617
        %v668 = vpop.xlane.xlu0 %667
        %669 = vadd.xlane.f32.xlu0 %v618
        %v670 = vpop.xlane.xlu0 %669
        %671 = vadd.xlane.f32.xlu0 %v619
        %v672 = vpop.xlane.xlu0 %671
        %673 = vadd.xlane.f32.xlu0 %v620
        %v674 = vpop.xlane.xlu0 %673
        %675 = vadd.xlane.f32.xlu0 %v621
        %v676 = vpop.xlane.xlu0 %675
        %677 = vadd.xlane.f32.xlu0 %v622
        %v678 = vpop.xlane.xlu0 %677
        %679 = vadd.xlane.f32.xlu0 %v623
        %v680 = vpop.xlane.xlu0 %679
        %681 = vadd.xlane.f32.xlu0 %v624
        %v682 = vpop.xlane.xlu0 %681
        %683 = vadd.xlane.f32.xlu0 %v625
        %v684 = vpop.xlane.xlu0 %683
        %685 = vadd.xlane.f32.xlu0 %v626
        %v686 = vpop.xlane.xlu0 %685
        %687 = vadd.xlane.f32.xlu0 %v627
        %v688 = vpop.xlane.xlu0 %687
        %689 = vadd.xlane.f32.xlu0 %v628
        %v690 = vpop.xlane.xlu0 %689
        %691 = vadd.xlane.f32.xlu0 %v629
        %v692 = vpop.xlane.xlu0 %691
        %693 = vadd.xlane.f32.xlu0 %v630
        %v694 = vpop.xlane.xlu0 %693
        %695 = vadd.xlane.f32.xlu0 %v631
        %v696 = vpop.xlane.xlu0 %695
        %697 = vadd.xlane.f32.xlu0 %v632
        %v698 = vpop.xlane.xlu0 %697
        %699 = vadd.xlane.f32.xlu0 %v633
        %v700 = vpop.xlane.xlu0 %699
        %701 = vadd.xlane.f32.xlu0 %v634
        %v702 = vpop.xlane.xlu0 %701
        %703 = vadd.xlane.f32.xlu0 %v635
        %v704 = vpop.xlane.xlu0 %703
        %705 = vadd.xlane.f32.xlu0 %v636
        %v706 = vpop.xlane.xlu0 %705
        %707 = vadd.xlane.f32.xlu0 %v637
        %v708 = vpop.xlane.xlu0 %707
        %709 = vadd.xlane.f32.xlu0 %v638
        %v710 = vpop.xlane.xlu0 %709
        %v711 = vrcp.pop 128.0
        %v712 = vmul.f32 %v648, %v711
        %v713 = vmul.f32 %v650, %v711
        %v714 = vmul.f32 %v652, %v711
        %v715 = vmul.f32 %v654, %v711
        %v716 = vmul.f32 %v656, %v711
        %v717 = vmul.f32 %v658, %v711
        %v718 = vmul.f32 %v660, %v711
        %v719 = vmul.f32 %v662, %v711
        %v720 = vmul.f32 %v664, %v711
        %v721 = vmul.f32 %v666, %v711
        %v722 = vmul.f32 %v668, %v711
        %v723 = vmul.f32 %v670, %v711
        %v724 = vmul.f32 %v672, %v711
        %v725 = vmul.f32 %v674, %v711
        %v726 = vmul.f32 %v676, %v711
        %v727 = vmul.f32 %v678, %v711
        %v728 = vmul.f32 %v680, %v711
        %v729 = vmul.f32 %v682, %v711
        %v730 = vmul.f32 %v684, %v711
        %v731 = vmul.f32 %v686, %v711
        %v732 = vmul.f32 %v688, %v711
        %v733 = vmul.f32 %v690, %v711
        %v734 = vmul.f32 %v692, %v711
        %v735 = vmul.f32 %v694, %v711
        %v736 = vmul.f32 %v696, %v711
        %v737 = vmul.f32 %v698, %v711
        %v738 = vmul.f32 %v700, %v711
        %v739 = vmul.f32 %v702, %v711
        %v740 = vmul.f32 %v704, %v711
        %v741 = vmul.f32 %v706, %v711
        %v742 = vmul.f32 %v708, %v711
        %v743 = vmul.f32 %v710, %v711
        %v776 = vlaneseq
        %v777 = vand.u32 %v776, 127
        %v778 = vadd.s32 %v777, 4294967293
        %v779 = vlaneseq
        %v780 = vshrl.u32 %v779, 7
        %v781 = vsub.s32 %v778, %v780
        %v782 = vrot.slane %v712, %v781
        %v783 = vadd.s32 %v777, 4294967285
        %v784 = vlaneseq
        %v785 = vshrl.u32 %v784, 7
        %v786 = vsub.s32 %v783, %v785
        %v787 = vrot.slane %v713, %v786
        %vm788 = vcmask 154712
        %v789 = vsel %vm788, %v787, %v782
        %v790 = vlaneseq
        %v791 = vshrl.u32 %v790, 7
        %v792 = vsub.s32 %v778, %v791
        %v793 = vrot.slane %v714, %v792
        %v794 = vlaneseq
        %v795 = vshrl.u32 %v794, 7
        %v796 = vsub.s32 %v783, %v795
        %v797 = vrot.slane %v715, %v796
        %v798 = vsel %vm788, %v797, %v793
        %v799 = vlaneseq
        %v800 = vshrl.u32 %v799, 7
        %v801 = vsub.s32 %v778, %v800
        %v802 = vrot.slane %v716, %v801
        %v803 = vlaneseq
        %v804 = vshrl.u32 %v803, 7
        %v805 = vsub.s32 %v783, %v804
        %v806 = vrot.slane %v717, %v805
        %v807 = vsel %vm788, %v806, %v802
        %v808 = vlaneseq
        %v809 = vshrl.u32 %v808, 7
        %v810 = vsub.s32 %v778, %v809
        %v811 = vrot.slane %v718, %v810
        %v812 = vlaneseq
        %v813 = vshrl.u32 %v812, 7
        %v814 = vsub.s32 %v783, %v813
        %v815 = vrot.slane %v719, %v814
        %v816 = vsel %vm788, %v815, %v811
        %v817 = vlaneseq
        %v818 = vshrl.u32 %v817, 7
        %v819 = vsub.s32 %v778, %v818
        %v820 = vrot.slane %v720, %v819
        %v821 = vlaneseq
        %v822 = vshrl.u32 %v821, 7
        %v823 = vsub.s32 %v783, %v822
        %v824 = vrot.slane %v721, %v823
        %v825 = vsel %vm788, %v824, %v820
        %v826 = vlaneseq
        %v827 = vshrl.u32 %v826, 7
        %v828 = vsub.s32 %v778, %v827
        %v829 = vrot.slane %v722, %v828
        %v830 = vlaneseq
        %v831 = vshrl.u32 %v830, 7
        %v832 = vsub.s32 %v783, %v831
        %v833 = vrot.slane %v723, %v832
        %v834 = vsel %vm788, %v833, %v829
        %v835 = vlaneseq
        %v836 = vshrl.u32 %v835, 7
        %v837 = vsub.s32 %v778, %v836
        %v838 = vrot.slane %v724, %v837
        %v839 = vlaneseq
        %v840 = vshrl.u32 %v839, 7
        %v841 = vsub.s32 %v783, %v840
        %v842 = vrot.slane %v725, %v841
        %v843 = vsel %vm788, %v842, %v838
        %v844 = vlaneseq
        %v845 = vshrl.u32 %v844, 7
        %v846 = vsub.s32 %v778, %v845
        %v847 = vrot.slane %v726, %v846
        %v848 = vlaneseq
        %v849 = vshrl.u32 %v848, 7
        %v850 = vsub.s32 %v783, %v849
        %v851 = vrot.slane %v727, %v850
        %v852 = vsel %vm788, %v851, %v847
        %v853 = vlaneseq
        %v854 = vshrl.u32 %v853, 7
        %v855 = vsub.s32 %v778, %v854
        %v856 = vrot.slane %v728, %v855
        %v857 = vlaneseq
        %v858 = vshrl.u32 %v857, 7
        %v859 = vsub.s32 %v783, %v858
        %v860 = vrot.slane %v729, %v859
        %v861 = vsel %vm788, %v860, %v856
        %v862 = vlaneseq
        %v863 = vshrl.u32 %v862, 7
        %v864 = vsub.s32 %v778, %v863
        %v865 = vrot.slane %v730, %v864
        %v866 = vlaneseq
        %v867 = vshrl.u32 %v866, 7
        %v868 = vsub.s32 %v783, %v867
        %v869 = vrot.slane %v731, %v868
        %v870 = vsel %vm788, %v869, %v865
        %v871 = vlaneseq
        %v872 = vshrl.u32 %v871, 7
        %v873 = vsub.s32 %v778, %v872
        %v874 = vrot.slane %v732, %v873
        %v875 = vlaneseq
        %v876 = vshrl.u32 %v875, 7
        %v877 = vsub.s32 %v783, %v876
        %v878 = vrot.slane %v733, %v877
        %v879 = vsel %vm788, %v878, %v874
        %v880 = vlaneseq
        %v881 = vshrl.u32 %v880, 7
        %v882 = vsub.s32 %v778, %v881
        %v883 = vrot.slane %v734, %v882
        %v884 = vlaneseq
        %v885 = vshrl.u32 %v884, 7
        %v886 = vsub.s32 %v783, %v885
        %v887 = vrot.slane %v735, %v886
        %v888 = vsel %vm788, %v887, %v883
        %v889 = vlaneseq
        %v890 = vshrl.u32 %v889, 7
        %v891 = vsub.s32 %v778, %v890
        %v892 = vrot.slane %v736, %v891
        %v893 = vlaneseq
        %v894 = vshrl.u32 %v893, 7
        %v895 = vsub.s32 %v783, %v894
        %v896 = vrot.slane %v737, %v895
        %v897 = vsel %vm788, %v896, %v892
        %v898 = vlaneseq
        %v899 = vshrl.u32 %v898, 7
        %v900 = vsub.s32 %v778, %v899
        %v901 = vrot.slane %v738, %v900
        %v902 = vlaneseq
        %v903 = vshrl.u32 %v902, 7
        %v904 = vsub.s32 %v783, %v903
        %v905 = vrot.slane %v739, %v904
        %v906 = vsel %vm788, %v905, %v901
        %v907 = vlaneseq
        %v908 = vshrl.u32 %v907, 7
        %v909 = vsub.s32 %v778, %v908
        %v910 = vrot.slane %v740, %v909
        %v911 = vlaneseq
        %v912 = vshrl.u32 %v911, 7
        %v913 = vsub.s32 %v783, %v912
        %v914 = vrot.slane %v741, %v913
        %v915 = vsel %vm788, %v914, %v910
        %v916 = vlaneseq
        %v917 = vshrl.u32 %v916, 7
        %v918 = vsub.s32 %v778, %v917
        %v919 = vrot.slane %v742, %v918
        %v920 = vlaneseq
        %v921 = vshrl.u32 %v920, 7
        %v922 = vsub.s32 %v783, %v921
        %v923 = vrot.slane %v743, %v922
        %v924 = vsel %vm788, %v923, %v919
        %vm925 = vcmask 1041409
        %v926 = vsel %vm925, %v798, %v789
        %vm927 = vcmask 1042434
        %v928 = vsel %vm927, %v807, %v926
        %vm929 = vcmask 1043459
        %v930 = vsel %vm929, %v816, %v928
        %vm931 = vcmask 1044484
        %v932 = vsel %vm931, %v825, %v930
        %vm933 = vcmask 1045509
        %v934 = vsel %vm933, %v834, %v932
        %vm935 = vcmask 1046534
        %v936 = vsel %vm935, %v843, %v934
        %vm937 = vcmask 1047559
        %v938 = vsel %vm937, %v852, %v936
        %v939 = vsel %vm925, %v870, %v861
        %v940 = vsel %vm927, %v879, %v939
        %v941 = vsel %vm929, %v888, %v940
        %v942 = vsel %vm931, %v897, %v941
        %v943 = vsel %vm933, %v906, %v942
        %v944 = vsel %vm935, %v915, %v943
        %v945 = vsel %vm937, %v924, %v944
        %vm948 = vcmask 154648
        %949 = vst.msk [vmem:[#allocation2 + $0x3] sm:$0xff] %vm948, %v938
        %950 = vst.msk [vmem:[#allocation2 + $0xb] sm:$0xff] %vm948, %v945
        %951 = vmax.xlane.f32.xlu0 %v607
        %v952 = vpop.xlane.xlu0 %951
        %953 = vmax.xlane.f32.xlu0 %v608
        %v954 = vpop.xlane.xlu0 %953
        %955 = vmax.xlane.f32.xlu0 %v609
        %v956 = vpop.xlane.xlu0 %955
        %957 = vmax.xlane.f32.xlu0 %v610
        %v958 = vpop.xlane.xlu0 %957
        %959 = vmax.xlane.f32.xlu0 %v611
        %v960 = vpop.xlane.xlu0 %959
        %961 = vmax.xlane.f32.xlu0 %v612
        %v962 = vpop.xlane.xlu0 %961
        %963 = vmax.xlane.f32.xlu0 %v613
        %v964 = vpop.xlane.xlu0 %963
        %965 = vmax.xlane.f32.xlu0 %v614
        %v966 = vpop.xlane.xlu0 %965
        %967 = vmax.xlane.f32.xlu0 %v615
        %v968 = vpop.xlane.xlu0 %967
        %969 = vmax.xlane.f32.xlu0 %v616
        %v970 = vpop.xlane.xlu0 %969
        %971 = vmax.xlane.f32.xlu0 %v617
        %v972 = vpop.xlane.xlu0 %971
        %973 = vmax.xlane.f32.xlu0 %v618
        %v974 = vpop.xlane.xlu0 %973
        %975 = vmax.xlane.f32.xlu0 %v619
        %v976 = vpop.xlane.xlu0 %975
        %977 = vmax.xlane.f32.xlu0 %v620
        %v978 = vpop.xlane.xlu0 %977
        %979 = vmax.xlane.f32.xlu0 %v621
        %v980 = vpop.xlane.xlu0 %979
        %981 = vmax.xlane.f32.xlu0 %v622
        %v982 = vpop.xlane.xlu0 %981
        %983 = vmax.xlane.f32.xlu0 %v623
        %v984 = vpop.xlane.xlu0 %983
        %985 = vmax.xlane.f32.xlu0 %v624
        %v986 = vpop.xlane.xlu0 %985
        %987 = vmax.xlane.f32.xlu0 %v625
        %v988 = vpop.xlane.xlu0 %987
        %989 = vmax.xlane.f32.xlu0 %v626
        %v990 = vpop.xlane.xlu0 %989
        %991 = vmax.xlane.f32.xlu0 %v627
        %v992 = vpop.xlane.xlu0 %991
        %993 = vmax.xlane.f32.xlu0 %v628
        %v994 = vpop.xlane.xlu0 %993
        %995 = vmax.xlane.f32.xlu0 %v629
        %v996 = vpop.xlane.xlu0 %995
        %997 = vmax.xlane.f32.xlu0 %v630
        %v998 = vpop.xlane.xlu0 %997
        %999 = vmax.xlane.f32.xlu0 %v631
        %v1000 = vpop.xlane.xlu0 %999
        %1001 = vmax.xlane.f32.xlu0 %v632
        %v1002 = vpop.xlane.xlu0 %1001
        %1003 = vmax.xlane.f32.xlu0 %v633
        %v1004 = vpop.xlane.xlu0 %1003
        %1005 = vmax.xlane.f32.xlu0 %v634
        %v1006 = vpop.xlane.xlu0 %1005
        %1007 = vmax.xlane.f32.xlu0 %v635
        %v1008 = vpop.xlane.xlu0 %1007
        %1009 = vmax.xlane.f32.xlu0 %v636
        %v1010 = vpop.xlane.xlu0 %1009
        %1011 = vmax.xlane.f32.xlu0 %v637
        %v1012 = vpop.xlane.xlu0 %1011
        %1013 = vmax.xlane.f32.xlu0 %v638
        %v1014 = vpop.xlane.xlu0 %1013
        %v1047 = vlaneseq
        %v1048 = vshrl.u32 %v1047, 7
        %v1049 = vsub.s32 %v778, %v1048
        %v1050 = vrot.slane %v952, %v1049
        %v1051 = vlaneseq
        %v1052 = vshrl.u32 %v1051, 7
        %v1053 = vsub.s32 %v783, %v1052
        %v1054 = vrot.slane %v954, %v1053
        %v1055 = vsel %vm788, %v1054, %v1050
        %v1056 = vlaneseq
        %v1057 = vshrl.u32 %v1056, 7
        %v1058 = vsub.s32 %v778, %v1057
        %v1059 = vrot.slane %v956, %v1058
        %v1060 = vlaneseq
        %v1061 = vshrl.u32 %v1060, 7
        %v1062 = vsub.s32 %v783, %v1061
        %v1063 = vrot.slane %v958, %v1062
        %v1064 = vsel %vm788, %v1063, %v1059
        %v1065 = vlaneseq
        %v1066 = vshrl.u32 %v1065, 7
        %v1067 = vsub.s32 %v778, %v1066
        %v1068 = vrot.slane %v960, %v1067
        %v1069 = vlaneseq
        %v1070 = vshrl.u32 %v1069, 7
        %v1071 = vsub.s32 %v783, %v1070
        %v1072 = vrot.slane %v962, %v1071
        %v1073 = vsel %vm788, %v1072, %v1068
        %v1074 = vlaneseq
        %v1075 = vshrl.u32 %v1074, 7
        %v1076 = vsub.s32 %v778, %v1075
        %v1077 = vrot.slane %v964, %v1076
        %v1078 = vlaneseq
        %v1079 = vshrl.u32 %v1078, 7
        %v1080 = vsub.s32 %v783, %v1079
        %v1081 = vrot.slane %v966, %v1080
        %v1082 = vsel %vm788, %v1081, %v1077
        %v1083 = vlaneseq
        %v1084 = vshrl.u32 %v1083, 7
        %v1085 = vsub.s32 %v778, %v1084
        %v1086 = vrot.slane %v968, %v1085
        %v1087 = vlaneseq
        %v1088 = vshrl.u32 %v1087, 7
        %v1089 = vsub.s32 %v783, %v1088
        %v1090 = vrot.slane %v970, %v1089
        %v1091 = vsel %vm788, %v1090, %v1086
        %v1092 = vlaneseq
        %v1093 = vshrl.u32 %v1092, 7
        %v1094 = vsub.s32 %v778, %v1093
        %v1095 = vrot.slane %v972, %v1094
        %v1096 = vlaneseq
        %v1097 = vshrl.u32 %v1096, 7
        %v1098 = vsub.s32 %v783, %v1097
        %v1099 = vrot.slane %v974, %v1098
        %v1100 = vsel %vm788, %v1099, %v1095
        %v1101 = vlaneseq
        %v1102 = vshrl.u32 %v1101, 7
        %v1103 = vsub.s32 %v778, %v1102
        %v1104 = vrot.slane %v976, %v1103
        %v1105 = vlaneseq
        %v1106 = vshrl.u32 %v1105, 7
        %v1107 = vsub.s32 %v783, %v1106
        %v1108 = vrot.slane %v978, %v1107
        %v1109 = vsel %vm788, %v1108, %v1104
        %v1110 = vlaneseq
        %v1111 = vshrl.u32 %v1110, 7
        %v1112 = vsub.s32 %v778, %v1111
        %v1113 = vrot.slane %v980, %v1112
        %v1114 = vlaneseq
        %v1115 = vshrl.u32 %v1114, 7
        %v1116 = vsub.s32 %v783, %v1115
        %v1117 = vrot.slane %v982, %v1116
        %v1118 = vsel %vm788, %v1117, %v1113
        %v1119 = vlaneseq
        %v1120 = vshrl.u32 %v1119, 7
        %v1121 = vsub.s32 %v778, %v1120
        %v1122 = vrot.slane %v984, %v1121
        %v1123 = vlaneseq
        %v1124 = vshrl.u32 %v1123, 7
        %v1125 = vsub.s32 %v783, %v1124
        %v1126 = vrot.slane %v986, %v1125
        %v1127 = vsel %vm788, %v1126, %v1122
        %v1128 = vlaneseq
        %v1129 = vshrl.u32 %v1128, 7
        %v1130 = vsub.s32 %v778, %v1129
        %v1131 = vrot.slane %v988, %v1130
        %v1132 = vlaneseq
        %v1133 = vshrl.u32 %v1132, 7
        %v1134 = vsub.s32 %v783, %v1133
        %v1135 = vrot.slane %v990, %v1134
        %v1136 = vsel %vm788, %v1135, %v1131
        %v1137 = vlaneseq
        %v1138 = vshrl.u32 %v1137, 7
        %v1139 = vsub.s32 %v778, %v1138
        %v1140 = vrot.slane %v992, %v1139
        %v1141 = vlaneseq
        %v1142 = vshrl.u32 %v1141, 7
        %v1143 = vsub.s32 %v783, %v1142
        %v1144 = vrot.slane %v994, %v1143
        %v1145 = vsel %vm788, %v1144, %v1140
        %v1146 = vlaneseq
        %v1147 = vshrl.u32 %v1146, 7
        %v1148 = vsub.s32 %v778, %v1147
        %v1149 = vrot.slane %v996, %v1148
        %v1150 = vlaneseq
        %v1151 = vshrl.u32 %v1150, 7
        %v1152 = vsub.s32 %v783, %v1151
        %v1153 = vrot.slane %v998, %v1152
        %v1154 = vsel %vm788, %v1153, %v1149
        %v1155 = vlaneseq
        %v1156 = vshrl.u32 %v1155, 7
        %v1157 = vsub.s32 %v778, %v1156
        %v1158 = vrot.slane %v1000, %v1157
        %v1159 = vlaneseq
        %v1160 = vshrl.u32 %v1159, 7
        %v1161 = vsub.s32 %v783, %v1160
        %v1162 = vrot.slane %v1002, %v1161
        %v1163 = vsel %vm788, %v1162, %v1158
        %v1164 = vlaneseq
        %v1165 = vshrl.u32 %v1164, 7
        %v1166 = vsub.s32 %v778, %v1165
        %v1167 = vrot.slane %v1004, %v1166
        %v1168 = vlaneseq
        %v1169 = vshrl.u32 %v1168, 7
        %v1170 = vsub.s32 %v783, %v1169
        %v1171 = vrot.slane %v1006, %v1170
        %v1172 = vsel %vm788, %v1171, %v1167
        %v1173 = vlaneseq
        %v1174 = vshrl.u32 %v1173, 7
        %v1175 = vsub.s32 %v778, %v1174
        %v1176 = vrot.slane %v1008, %v1175
        %v1177 = vlaneseq
        %v1178 = vshrl.u32 %v1177, 7
        %v1179 = vsub.s32 %v783, %v1178
        %v1180 = vrot.slane %v1010, %v1179
        %v1181 = vsel %vm788, %v1180, %v1176
        %v1182 = vlaneseq
        %v1183 = vshrl.u32 %v1182, 7
        %v1184 = vsub.s32 %v778, %v1183
        %v1185 = vrot.slane %v1012, %v1184
        %v1186 = vlaneseq
        %v1187 = vshrl.u32 %v1186, 7
        %v1188 = vsub.s32 %v783, %v1187
        %v1189 = vrot.slane %v1014, %v1188
        %v1190 = vsel %vm788, %v1189, %v1185
        %v1191 = vsel %vm925, %v1064, %v1055
        %v1192 = vsel %vm927, %v1073, %v1191
        %v1193 = vsel %vm929, %v1082, %v1192
        %v1194 = vsel %vm931, %v1091, %v1193
        %v1195 = vsel %vm933, %v1100, %v1194
        %v1196 = vsel %vm935, %v1109, %v1195
        %v1197 = vsel %vm937, %v1118, %v1196
        %v1198 = vsel %vm925, %v1136, %v1127
        %v1199 = vsel %vm927, %v1145, %v1198
        %v1200 = vsel %vm929, %v1154, %v1199
        %v1201 = vsel %vm931, %v1163, %v1200
        %v1202 = vsel %vm933, %v1172, %v1201
        %v1203 = vsel %vm935, %v1181, %v1202
        %v1204 = vsel %vm937, %v1190, %v1203
        %s1207 = scalar_lea.vmem [#allocation2], 24
        %1208 = vst.msk [vmem:[%s1207 + $0x3] sm:$0xff] %vm948, %v1197
        %1209 = vst.msk [vmem:[%s1207 + $0xb] sm:$0xff] %vm948, %v1204
        %v1210 = vld [vmem:[#allocation2] sm:$0xff]
        %v1211 = vld [vmem:[#allocation2 + $0x8] sm:$0xff]
        %s1212 = sld [smem:[#allocation8]]
        %v1213 = vstv %s1212
        %v1214 = vmul.f32 %v1210, %v1213
        %v1215 = vmul.f32 %v1211, %v1213
        %v1216 = vadd.f32 %v1214, 0.0
        %v1217 = vadd.f32 %v1215, 0.0
        %v1218 = vld [vmem:[%s1207] sm:$0xff]
        %v1219 = vld [vmem:[%s1207 + $0x8] sm:$0xff]
        %s1220 = sld [smem:[#allocation8 + $0x1]]
        %v1221 = vstv %s1220
        %v1222 = vmul.f32 %v1218, %v1221
        %v1223 = vmul.f32 %v1219, %v1221
        %v1224 = vadd.f32 %v1216, %v1222
        %v1225 = vadd.f32 %v1217, %v1223
        %s1226 = sld [smem:[#allocation8 + $0x2]]
        %v1227 = vstv %s1226
        %v1228 = vmul.f32 %v1210, %v1227
        %v1229 = vmul.f32 %v1211, %v1227
        %1232 = vrot.lane.b32.xlu0 %v1228, 127
        %v1233 = vpop.permute.xlu0 %1232
        %1234 = vrot.lane.b32.xlu0 %v1229, 127
        %v1235 = vpop.permute.xlu0 %1234
        %v1238 = vadd.f32 %v1224, %v1233
        %v1239 = vadd.f32 %v1225, %v1235
        %s1240 = sld [smem:[#allocation8 + $0x3]]
        %v1241 = vstv %s1240
        %v1242 = vmul.f32 %v1218, %v1241
        %v1243 = vmul.f32 %v1219, %v1241
        %1246 = vrot.lane.b32.xlu0 %v1242, 127
        %v1247 = vpop.permute.xlu0 %1246
        %1248 = vrot.lane.b32.xlu0 %v1243, 127
        %v1249 = vpop.permute.xlu0 %1248
        %v1252 = vadd.f32 %v1238, %v1247
        %v1253 = vadd.f32 %v1239, %v1249
        %s1254 = sld [smem:[#allocation8 + $0x4]]
        %v1255 = vstv %s1254
        %v1256 = vmul.f32 %v1210, %v1255
        %v1257 = vmul.f32 %v1211, %v1255
        %1260 = vrot.lane.b32.xlu0 %v1256, 126
        %v1261 = vpop.permute.xlu0 %1260
        %1262 = vrot.lane.b32.xlu0 %v1257, 126
        %v1263 = vpop.permute.xlu0 %1262
        %v1266 = vadd.f32 %v1252, %v1261
        %v1267 = vadd.f32 %v1253, %v1263
        %s1268 = sld [smem:[#allocation8 + $0x5]]
        %v1269 = vstv %s1268
        %v1270 = vmul.f32 %v1218, %v1269
        %v1271 = vmul.f32 %v1219, %v1269
        %1274 = vrot.lane.b32.xlu0 %v1270, 126
        %v1275 = vpop.permute.xlu0 %1274
        %1276 = vrot.lane.b32.xlu0 %v1271, 126
        %v1277 = vpop.permute.xlu0 %1276
        %v1280 = vadd.f32 %v1266, %v1275
        %v1281 = vadd.f32 %v1267, %v1277
        %s1282 = sld [smem:[#allocation8 + $0x6]]
        %v1283 = vstv %s1282
        %v1284 = vmul.f32 %v1210, %v1283
        %v1285 = vmul.f32 %v1211, %v1283
        %1288 = vrot.lane.b32.xlu0 %v1284, 125
        %v1289 = vpop.permute.xlu0 %1288
        %1290 = vrot.lane.b32.xlu0 %v1285, 125
        %v1291 = vpop.permute.xlu0 %1290
        %v1294 = vadd.f32 %v1280, %v1289
        %v1295 = vadd.f32 %v1281, %v1291
        %s1296 = sld [smem:[#allocation8 + $0x7]]
        %v1297 = vstv %s1296
        %v1298 = vmul.f32 %v1218, %v1297
        %v1299 = vmul.f32 %v1219, %v1297
        %1302 = vrot.lane.b32.xlu0 %v1298, 125
        %v1303 = vpop.permute.xlu0 %1302
        %1304 = vrot.lane.b32.xlu0 %v1299, 125
        %v1305 = vpop.permute.xlu0 %1304
        %v1308 = vadd.f32 %v1294, %v1303
        %v1309 = vadd.f32 %v1295, %v1305
        %s1310 = sld [smem:[#allocation8 + $0x8]]
        %v1311 = vstv %s1310
        %v1312 = vmul.f32 %v1210, %v1311
        %v1313 = vmul.f32 %v1211, %v1311
        %1316 = vrot.lane.b32.xlu0 %v1312, 124
        %v1317 = vpop.permute.xlu0 %1316
        %1318 = vrot.lane.b32.xlu0 %v1313, 124
        %v1319 = vpop.permute.xlu0 %1318
        %v1322 = vadd.f32 %v1308, %v1317
        %v1323 = vadd.f32 %v1309, %v1319
        %s1324 = sld [smem:[#allocation8 + $0x9]]
        %v1325 = vstv %s1324
        %v1326 = vmul.f32 %v1218, %v1325
        %v1327 = vmul.f32 %v1219, %v1325
        %1330 = vrot.lane.b32.xlu0 %v1326, 124
        %v1331 = vpop.permute.xlu0 %1330
        %1332 = vrot.lane.b32.xlu0 %v1327, 124
        %v1333 = vpop.permute.xlu0 %1332
        %v1336 = vadd.f32 %v1322, %v1331
        %v1337 = vadd.f32 %v1323, %v1333
        %s1338 = sld [smem:[#allocation8 + $0xa]]
        %v1339 = vstv %s1338
        %v1340 = vmul.f32 %v1210, %v1339
        %v1341 = vmul.f32 %v1211, %v1339
        %1344 = vrot.lane.b32.xlu0 %v1340, 123
        %v1345 = vpop.permute.xlu0 %1344
        %1346 = vrot.lane.b32.xlu0 %v1341, 123
        %v1347 = vpop.permute.xlu0 %1346
        %v1350 = vadd.f32 %v1336, %v1345
        %v1351 = vadd.f32 %v1337, %v1347
        %s1352 = sld [smem:[#allocation8 + $0xb]]
        %v1353 = vstv %s1352
        %v1354 = vmul.f32 %v1218, %v1353
        %v1355 = vmul.f32 %v1219, %v1353
        %1358 = vrot.lane.b32.xlu0 %v1354, 123
        %v1359 = vpop.permute.xlu0 %1358
        %1360 = vrot.lane.b32.xlu0 %v1355, 123
        %v1361 = vpop.permute.xlu0 %1360
        %v1364 = vadd.f32 %v1350, %v1359
        %v1365 = vadd.f32 %v1351, %v1361
        %s1366 = sld [smem:[#allocation8 + $0xc]]
        %v1367 = vstv %s1366
        %v1368 = vmul.f32 %v1210, %v1367
        %v1369 = vmul.f32 %v1211, %v1367
        %1372 = vrot.lane.b32.xlu0 %v1368, 122
        %v1373 = vpop.permute.xlu0 %1372
        %1374 = vrot.lane.b32.xlu0 %v1369, 122
        %v1375 = vpop.permute.xlu0 %1374
        %v1378 = vadd.f32 %v1364, %v1373
        %v1379 = vadd.f32 %v1365, %v1375
        %s1380 = sld [smem:[#allocation8 + $0xd]]
        %v1381 = vstv %s1380
        %v1382 = vmul.f32 %v1218, %v1381
        %v1383 = vmul.f32 %v1219, %v1381
        %1386 = vrot.lane.b32.xlu0 %v1382, 122
        %v1387 = vpop.permute.xlu0 %1386
        %1388 = vrot.lane.b32.xlu0 %v1383, 122
        %v1389 = vpop.permute.xlu0 %1388
        %v1392 = vadd.f32 %v1378, %v1387
        %v1393 = vadd.f32 %v1379, %v1389
        %v1394 = vld [vmem:[#allocation2 + $0x1] sm:$0xff]
        %v1395 = vld [vmem:[#allocation2 + $0x9] sm:$0xff]
        %s1396 = sld [smem:[#allocation8 + $0xe]]
        %v1397 = vstv %s1396
        %v1398 = vmul.f32 %v1394, %v1397
        %v1399 = vmul.f32 %v1395, %v1397
        %v1400 = vadd.f32 %v1392, %v1398
        %v1401 = vadd.f32 %v1393, %v1399
        %v1402 = vld [vmem:[%s1207 + $0x1] sm:$0xff]
        %v1403 = vld [vmem:[%s1207 + $0x9] sm:$0xff]
        %s1404 = sld [smem:[#allocation8 + $0xf]]
        %v1405 = vstv %s1404
        %v1406 = vmul.f32 %v1402, %v1405
        %v1407 = vmul.f32 %v1403, %v1405
        %v1408 = vadd.f32 %v1400, %v1406
        %v1409 = vadd.f32 %v1401, %v1407
        %s1410 = sld [smem:[#allocation8 + $0x10]]
        %v1411 = vstv %s1410
        %v1412 = vmul.f32 %v1394, %v1411
        %v1413 = vmul.f32 %v1395, %v1411
        %1416 = vrot.lane.b32.xlu0 %v1412, 127
        %v1417 = vpop.permute.xlu0 %1416
        %1418 = vrot.lane.b32.xlu0 %v1413, 127
        %v1419 = vpop.permute.xlu0 %1418
        %v1422 = vadd.f32 %v1408, %v1417
        %v1423 = vadd.f32 %v1409, %v1419
        %s1424 = sld [smem:[#allocation8 + $0x11]]
        %v1425 = vstv %s1424
        %v1426 = vmul.f32 %v1402, %v1425
        %v1427 = vmul.f32 %v1403, %v1425
        %1430 = vrot.lane.b32.xlu0 %v1426, 127
        %v1431 = vpop.permute.xlu0 %1430
        %1432 = vrot.lane.b32.xlu0 %v1427, 127
        %v1433 = vpop.permute.xlu0 %1432
        %v1436 = vadd.f32 %v1422, %v1431
        %v1437 = vadd.f32 %v1423, %v1433
        %s1438 = sld [smem:[#allocation8 + $0x12]]
        %v1439 = vstv %s1438
        %v1440 = vmul.f32 %v1394, %v1439
        %v1441 = vmul.f32 %v1395, %v1439
        %1444 = vrot.lane.b32.xlu0 %v1440, 126
        %v1445 = vpop.permute.xlu0 %1444
        %1446 = vrot.lane.b32.xlu0 %v1441, 126
        %v1447 = vpop.permute.xlu0 %1446
        %v1450 = vadd.f32 %v1436, %v1445
        %v1451 = vadd.f32 %v1437, %v1447
        %s1452 = sld [smem:[#allocation8 + $0x13]]
        %v1453 = vstv %s1452
        %v1454 = vmul.f32 %v1402, %v1453
        %v1455 = vmul.f32 %v1403, %v1453
        %1458 = vrot.lane.b32.xlu0 %v1454, 126
        %v1459 = vpop.permute.xlu0 %1458
        %1460 = vrot.lane.b32.xlu0 %v1455, 126
        %v1461 = vpop.permute.xlu0 %1460
        %v1464 = vadd.f32 %v1450, %v1459
        %v1465 = vadd.f32 %v1451, %v1461
        %s1466 = sld [smem:[#allocation8 + $0x14]]
        %v1467 = vstv %s1466
        %v1468 = vmul.f32 %v1394, %v1467
        %v1469 = vmul.f32 %v1395, %v1467
        %1472 = vrot.lane.b32.xlu0 %v1468, 125
        %v1473 = vpop.permute.xlu0 %1472
        %1474 = vrot.lane.b32.xlu0 %v1469, 125
        %v1475 = vpop.permute.xlu0 %1474
        %v1478 = vadd.f32 %v1464, %v1473
        %v1479 = vadd.f32 %v1465, %v1475
        %s1480 = sld [smem:[#allocation8 + $0x15]]
        %v1481 = vstv %s1480
        %v1482 = vmul.f32 %v1402, %v1481
        %v1483 = vmul.f32 %v1403, %v1481
        %1486 = vrot.lane.b32.xlu0 %v1482, 125
        %v1487 = vpop.permute.xlu0 %1486
        %1488 = vrot.lane.b32.xlu0 %v1483, 125
        %v1489 = vpop.permute.xlu0 %1488
        %v1492 = vadd.f32 %v1478, %v1487
        %v1493 = vadd.f32 %v1479, %v1489
        %s1494 = sld [smem:[#allocation8 + $0x16]]
        %v1495 = vstv %s1494
        %v1496 = vmul.f32 %v1394, %v1495
        %v1497 = vmul.f32 %v1395, %v1495
        %1500 = vrot.lane.b32.xlu0 %v1496, 124
        %v1501 = vpop.permute.xlu0 %1500
        %1502 = vrot.lane.b32.xlu0 %v1497, 124
        %v1503 = vpop.permute.xlu0 %1502
        %v1506 = vadd.f32 %v1492, %v1501
        %v1507 = vadd.f32 %v1493, %v1503
        %s1508 = sld [smem:[#allocation8 + $0x17]]
        %v1509 = vstv %s1508
        %v1510 = vmul.f32 %v1402, %v1509
        %v1511 = vmul.f32 %v1403, %v1509
        %1514 = vrot.lane.b32.xlu0 %v1510, 124
        %v1515 = vpop.permute.xlu0 %1514
        %1516 = vrot.lane.b32.xlu0 %v1511, 124
        %v1517 = vpop.permute.xlu0 %1516
        %v1520 = vadd.f32 %v1506, %v1515
        %v1521 = vadd.f32 %v1507, %v1517
        %s1522 = sld [smem:[#allocation8 + $0x18]]
        %v1523 = vstv %s1522
        %v1524 = vmul.f32 %v1394, %v1523
        %v1525 = vmul.f32 %v1395, %v1523
        %1528 = vrot.lane.b32.xlu0 %v1524, 123
        %v1529 = vpop.permute.xlu0 %1528
        %1530 = vrot.lane.b32.xlu0 %v1525, 123
        %v1531 = vpop.permute.xlu0 %1530
        %v1534 = vadd.f32 %v1520, %v1529
        %v1535 = vadd.f32 %v1521, %v1531
        %s1536 = sld [smem:[#allocation8 + $0x19]]
        %v1537 = vstv %s1536
        %v1538 = vmul.f32 %v1402, %v1537
        %v1539 = vmul.f32 %v1403, %v1537
        %1542 = vrot.lane.b32.xlu0 %v1538, 123
        %v1543 = vpop.permute.xlu0 %1542
        %1544 = vrot.lane.b32.xlu0 %v1539, 123
        %v1545 = vpop.permute.xlu0 %1544
        %v1548 = vadd.f32 %v1534, %v1543
        %v1549 = vadd.f32 %v1535, %v1545
        %s1550 = sld [smem:[#allocation8 + $0x1a]]
        %v1551 = vstv %s1550
        %v1552 = vmul.f32 %v1394, %v1551
        %v1553 = vmul.f32 %v1395, %v1551
        %1556 = vrot.lane.b32.xlu0 %v1552, 122
        %v1557 = vpop.permute.xlu0 %1556
        %1558 = vrot.lane.b32.xlu0 %v1553, 122
        %v1559 = vpop.permute.xlu0 %1558
        %v1562 = vadd.f32 %v1548, %v1557
        %v1563 = vadd.f32 %v1549, %v1559
        %s1564 = sld [smem:[#allocation8 + $0x1b]]
        %v1565 = vstv %s1564
        %v1566 = vmul.f32 %v1402, %v1565
        %v1567 = vmul.f32 %v1403, %v1565
        %1570 = vrot.lane.b32.xlu0 %v1566, 122
        %v1571 = vpop.permute.xlu0 %1570
        %1572 = vrot.lane.b32.xlu0 %v1567, 122
        %v1573 = vpop.permute.xlu0 %1572
        %v1576 = vadd.f32 %v1562, %v1571
        %v1577 = vadd.f32 %v1563, %v1573
        %v1578 = vld [vmem:[#allocation2 + $0x2] sm:$0xff]
        %v1579 = vld [vmem:[#allocation2 + $0xa] sm:$0xff]
        %s1580 = sld [smem:[#allocation8 + $0x1c]]
        %v1581 = vstv %s1580
        %v1582 = vmul.f32 %v1578, %v1581
        %v1583 = vmul.f32 %v1579, %v1581
        %v1584 = vadd.f32 %v1576, %v1582
        %v1585 = vadd.f32 %v1577, %v1583
        %v1586 = vld [vmem:[%s1207 + $0x2] sm:$0xff]
        %v1587 = vld [vmem:[%s1207 + $0xa] sm:$0xff]
        %s1588 = sld [smem:[#allocation8 + $0x1d]]
        %v1589 = vstv %s1588
        %v1590 = vmul.f32 %v1586, %v1589
        %v1591 = vmul.f32 %v1587, %v1589
        %v1592 = vadd.f32 %v1584, %v1590
        %v1593 = vadd.f32 %v1585, %v1591
        %s1594 = sld [smem:[#allocation8 + $0x1e]]
        %v1595 = vstv %s1594
        %v1596 = vmul.f32 %v1578, %v1595
        %v1597 = vmul.f32 %v1579, %v1595
        %1600 = vrot.lane.b32.xlu0 %v1596, 127
        %v1601 = vpop.permute.xlu0 %1600
        %1602 = vrot.lane.b32.xlu0 %v1597, 127
        %v1603 = vpop.permute.xlu0 %1602
        %v1606 = vadd.f32 %v1592, %v1601
        %v1607 = vadd.f32 %v1593, %v1603
        %s1608 = sld [smem:[#allocation8 + $0x1f]]
        %v1609 = vstv %s1608
        %v1610 = vmul.f32 %v1586, %v1609
        %v1611 = vmul.f32 %v1587, %v1609
        %1614 = vrot.lane.b32.xlu0 %v1610, 127
        %v1615 = vpop.permute.xlu0 %1614
        %1616 = vrot.lane.b32.xlu0 %v1611, 127
        %v1617 = vpop.permute.xlu0 %1616
        %v1620 = vadd.f32 %v1606, %v1615
        %v1621 = vadd.f32 %v1607, %v1617
        %s1622 = sld [smem:[#allocation8 + $0x20]]
        %v1623 = vstv %s1622
        %v1624 = vmul.f32 %v1578, %v1623
        %v1625 = vmul.f32 %v1579, %v1623
        %1628 = vrot.lane.b32.xlu0 %v1624, 126
        %v1629 = vpop.permute.xlu0 %1628
        %1630 = vrot.lane.b32.xlu0 %v1625, 126
        %v1631 = vpop.permute.xlu0 %1630
        %v1634 = vadd.f32 %v1620, %v1629
        %v1635 = vadd.f32 %v1621, %v1631
        %s1636 = sld [smem:[#allocation8 + $0x21]]
        %v1637 = vstv %s1636
        %v1638 = vmul.f32 %v1586, %v1637
        %v1639 = vmul.f32 %v1587, %v1637
        %1642 = vrot.lane.b32.xlu0 %v1638, 126
        %v1643 = vpop.permute.xlu0 %1642
        %1644 = vrot.lane.b32.xlu0 %v1639, 126
        %v1645 = vpop.permute.xlu0 %1644
        %v1648 = vadd.f32 %v1634, %v1643
        %v1649 = vadd.f32 %v1635, %v1645
        %s1650 = sld [smem:[#allocation8 + $0x22]]
        %v1651 = vstv %s1650
        %v1652 = vmul.f32 %v1578, %v1651
        %v1653 = vmul.f32 %v1579, %v1651
        %1656 = vrot.lane.b32.xlu0 %v1652, 125
        %v1657 = vpop.permute.xlu0 %1656
        %1658 = vrot.lane.b32.xlu0 %v1653, 125
        %v1659 = vpop.permute.xlu0 %1658
        %v1662 = vadd.f32 %v1648, %v1657
        %v1663 = vadd.f32 %v1649, %v1659
        %s1664 = sld [smem:[#allocation8 + $0x23]]
        %v1665 = vstv %s1664
        %v1666 = vmul.f32 %v1586, %v1665
        %v1667 = vmul.f32 %v1587, %v1665
        %1670 = vrot.lane.b32.xlu0 %v1666, 125
        %v1671 = vpop.permute.xlu0 %1670
        %1672 = vrot.lane.b32.xlu0 %v1667, 125
        %v1673 = vpop.permute.xlu0 %1672
        %v1676 = vadd.f32 %v1662, %v1671
        %v1677 = vadd.f32 %v1663, %v1673
        %s1678 = sld [smem:[#allocation8 + $0x24]]
        %v1679 = vstv %s1678
        %v1680 = vmul.f32 %v1578, %v1679
        %v1681 = vmul.f32 %v1579, %v1679
        %1684 = vrot.lane.b32.xlu0 %v1680, 124
        %v1685 = vpop.permute.xlu0 %1684
        %1686 = vrot.lane.b32.xlu0 %v1681, 124
        %v1687 = vpop.permute.xlu0 %1686
        %v1690 = vadd.f32 %v1676, %v1685
        %v1691 = vadd.f32 %v1677, %v1687
        %s1692 = sld [smem:[#allocation8 + $0x25]]
        %v1693 = vstv %s1692
        %v1694 = vmul.f32 %v1586, %v1693
        %v1695 = vmul.f32 %v1587, %v1693
        %1698 = vrot.lane.b32.xlu0 %v1694, 124
        %v1699 = vpop.permute.xlu0 %1698
        %1700 = vrot.lane.b32.xlu0 %v1695, 124
        %v1701 = vpop.permute.xlu0 %1700
        %v1704 = vadd.f32 %v1690, %v1699
        %v1705 = vadd.f32 %v1691, %v1701
        %s1706 = sld [smem:[#allocation8 + $0x26]]
        %v1707 = vstv %s1706
        %v1708 = vmul.f32 %v1578, %v1707
        %v1709 = vmul.f32 %v1579, %v1707
        %1712 = vrot.lane.b32.xlu0 %v1708, 123
        %v1713 = vpop.permute.xlu0 %1712
        %1714 = vrot.lane.b32.xlu0 %v1709, 123
        %v1715 = vpop.permute.xlu0 %1714
        %v1718 = vadd.f32 %v1704, %v1713
        %v1719 = vadd.f32 %v1705, %v1715
        %s1720 = sld [smem:[#allocation8 + $0x27]]
        %v1721 = vstv %s1720
        %v1722 = vmul.f32 %v1586, %v1721
        %v1723 = vmul.f32 %v1587, %v1721
        %1726 = vrot.lane.b32.xlu0 %v1722, 123
        %v1727 = vpop.permute.xlu0 %1726
        %1728 = vrot.lane.b32.xlu0 %v1723, 123
        %v1729 = vpop.permute.xlu0 %1728
        %v1732 = vadd.f32 %v1718, %v1727
        %v1733 = vadd.f32 %v1719, %v1729
        %s1734 = sld [smem:[#allocation8 + $0x28]]
        %v1735 = vstv %s1734
        %v1736 = vmul.f32 %v1578, %v1735
        %v1737 = vmul.f32 %v1579, %v1735
        %1740 = vrot.lane.b32.xlu0 %v1736, 122
        %v1741 = vpop.permute.xlu0 %1740
        %1742 = vrot.lane.b32.xlu0 %v1737, 122
        %v1743 = vpop.permute.xlu0 %1742
        %v1746 = vadd.f32 %v1732, %v1741
        %v1747 = vadd.f32 %v1733, %v1743
        %s1748 = sld [smem:[#allocation8 + $0x29]]
        %v1749 = vstv %s1748
        %v1750 = vmul.f32 %v1586, %v1749
        %v1751 = vmul.f32 %v1587, %v1749
        %1754 = vrot.lane.b32.xlu0 %v1750, 122
        %v1755 = vpop.permute.xlu0 %1754
        %1756 = vrot.lane.b32.xlu0 %v1751, 122
        %v1757 = vpop.permute.xlu0 %1756
        %v1760 = vadd.f32 %v1746, %v1755
        %v1761 = vadd.f32 %v1747, %v1757
        %v1762 = vld [vmem:[#allocation2 + $0x3] sm:$0xff]
        %v1763 = vld [vmem:[#allocation2 + $0xb] sm:$0xff]
        %s1764 = sld [smem:[#allocation8 + $0x2a]]
        %v1765 = vstv %s1764
        %v1766 = vmul.f32 %v1762, %v1765
        %v1767 = vmul.f32 %v1763, %v1765
        %v1768 = vadd.f32 %v1760, %v1766
        %v1769 = vadd.f32 %v1761, %v1767
        %v1770 = vld [vmem:[%s1207 + $0x3] sm:$0xff]
        %v1771 = vld [vmem:[%s1207 + $0xb] sm:$0xff]
        %s1772 = sld [smem:[#allocation8 + $0x2b]]
        %v1773 = vstv %s1772
        %v1774 = vmul.f32 %v1770, %v1773
        %v1775 = vmul.f32 %v1771, %v1773
        %v1776 = vadd.f32 %v1768, %v1774
        %v1777 = vadd.f32 %v1769, %v1775
        %s1778 = sld [smem:[#allocation8 + $0x2c]]
        %v1779 = vstv %s1778
        %v1780 = vmul.f32 %v1762, %v1779
        %v1781 = vmul.f32 %v1763, %v1779
        %1784 = vrot.lane.b32.xlu0 %v1780, 127
        %v1785 = vpop.permute.xlu0 %1784
        %1786 = vrot.lane.b32.xlu0 %v1781, 127
        %v1787 = vpop.permute.xlu0 %1786
        %v1790 = vadd.f32 %v1776, %v1785
        %v1791 = vadd.f32 %v1777, %v1787
        %s1792 = sld [smem:[#allocation8 + $0x2d]]
        %v1793 = vstv %s1792
        %v1794 = vmul.f32 %v1770, %v1793
        %v1795 = vmul.f32 %v1771, %v1793
        %1798 = vrot.lane.b32.xlu0 %v1794, 127
        %v1799 = vpop.permute.xlu0 %1798
        %1800 = vrot.lane.b32.xlu0 %v1795, 127
        %v1801 = vpop.permute.xlu0 %1800
        %v1804 = vadd.f32 %v1790, %v1799
        %v1805 = vadd.f32 %v1791, %v1801
        %s1806 = sld [smem:[#allocation8 + $0x2e]]
        %v1807 = vstv %s1806
        %v1808 = vmul.f32 %v1762, %v1807
        %v1809 = vmul.f32 %v1763, %v1807
        %1812 = vrot.lane.b32.xlu0 %v1808, 126
        %v1813 = vpop.permute.xlu0 %1812
        %1814 = vrot.lane.b32.xlu0 %v1809, 126
        %v1815 = vpop.permute.xlu0 %1814
        %v1818 = vadd.f32 %v1804, %v1813
        %v1819 = vadd.f32 %v1805, %v1815
        %s1820 = sld [smem:[#allocation8 + $0x2f]]
        %v1821 = vstv %s1820
        %v1822 = vmul.f32 %v1770, %v1821
        %v1823 = vmul.f32 %v1771, %v1821
        %1826 = vrot.lane.b32.xlu0 %v1822, 126
        %v1827 = vpop.permute.xlu0 %1826
        %1828 = vrot.lane.b32.xlu0 %v1823, 126
        %v1829 = vpop.permute.xlu0 %1828
        %v1832 = vadd.f32 %v1818, %v1827
        %v1833 = vadd.f32 %v1819, %v1829
        %s1834 = sld [smem:[#allocation8 + $0x30]]
        %v1835 = vstv %s1834
        %v1836 = vmul.f32 %v1762, %v1835
        %v1837 = vmul.f32 %v1763, %v1835
        %1840 = vrot.lane.b32.xlu0 %v1836, 125
        %v1841 = vpop.permute.xlu0 %1840
        %1842 = vrot.lane.b32.xlu0 %v1837, 125
        %v1843 = vpop.permute.xlu0 %1842
        %v1846 = vadd.f32 %v1832, %v1841
        %v1847 = vadd.f32 %v1833, %v1843
        %s1848 = sld [smem:[#allocation8 + $0x31]]
        %v1849 = vstv %s1848
        %v1850 = vmul.f32 %v1770, %v1849
        %v1851 = vmul.f32 %v1771, %v1849
        %1854 = vrot.lane.b32.xlu0 %v1850, 125
        %v1855 = vpop.permute.xlu0 %1854
        %1856 = vrot.lane.b32.xlu0 %v1851, 125
        %v1857 = vpop.permute.xlu0 %1856
        %v1860 = vadd.f32 %v1846, %v1855
        %v1861 = vadd.f32 %v1847, %v1857
        %s1862 = sld [smem:[#allocation8 + $0x32]]
        %v1863 = vstv %s1862
        %v1864 = vmul.f32 %v1762, %v1863
        %v1865 = vmul.f32 %v1763, %v1863
        %1868 = vrot.lane.b32.xlu0 %v1864, 124
        %v1869 = vpop.permute.xlu0 %1868
        %1870 = vrot.lane.b32.xlu0 %v1865, 124
        %v1871 = vpop.permute.xlu0 %1870
        %v1874 = vadd.f32 %v1860, %v1869
        %v1875 = vadd.f32 %v1861, %v1871
        %s1876 = sld [smem:[#allocation8 + $0x33]]
        %v1877 = vstv %s1876
        %v1878 = vmul.f32 %v1770, %v1877
        %v1879 = vmul.f32 %v1771, %v1877
        %1882 = vrot.lane.b32.xlu0 %v1878, 124
        %v1883 = vpop.permute.xlu0 %1882
        %1884 = vrot.lane.b32.xlu0 %v1879, 124
        %v1885 = vpop.permute.xlu0 %1884
        %v1888 = vadd.f32 %v1874, %v1883
        %v1889 = vadd.f32 %v1875, %v1885
        %s1890 = sld [smem:[#allocation8 + $0x34]]
        %v1891 = vstv %s1890
        %v1892 = vmul.f32 %v1762, %v1891
        %v1893 = vmul.f32 %v1763, %v1891
        %1896 = vrot.lane.b32.xlu0 %v1892, 123
        %v1897 = vpop.permute.xlu0 %1896
        %1898 = vrot.lane.b32.xlu0 %v1893, 123
        %v1899 = vpop.permute.xlu0 %1898
        %v1902 = vadd.f32 %v1888, %v1897
        %v1903 = vadd.f32 %v1889, %v1899
        %s1904 = sld [smem:[#allocation8 + $0x35]]
        %v1905 = vstv %s1904
        %v1906 = vmul.f32 %v1770, %v1905
        %v1907 = vmul.f32 %v1771, %v1905
        %1910 = vrot.lane.b32.xlu0 %v1906, 123
        %v1911 = vpop.permute.xlu0 %1910
        %1912 = vrot.lane.b32.xlu0 %v1907, 123
        %v1913 = vpop.permute.xlu0 %1912
        %v1916 = vadd.f32 %v1902, %v1911
        %v1917 = vadd.f32 %v1903, %v1913
        %s1918 = sld [smem:[#allocation8 + $0x36]]
        %v1919 = vstv %s1918
        %v1920 = vmul.f32 %v1762, %v1919
        %v1921 = vmul.f32 %v1763, %v1919
        %1924 = vrot.lane.b32.xlu0 %v1920, 122
        %v1925 = vpop.permute.xlu0 %1924
        %1926 = vrot.lane.b32.xlu0 %v1921, 122
        %v1927 = vpop.permute.xlu0 %1926
        %v1930 = vadd.f32 %v1916, %v1925
        %v1931 = vadd.f32 %v1917, %v1927
        %s1932 = sld [smem:[#allocation8 + $0x37]]
        %v1933 = vstv %s1932
        %v1934 = vmul.f32 %v1770, %v1933
        %v1935 = vmul.f32 %v1771, %v1933
        %1938 = vrot.lane.b32.xlu0 %v1934, 122
        %v1939 = vpop.permute.xlu0 %1938
        %1940 = vrot.lane.b32.xlu0 %v1935, 122
        %v1941 = vpop.permute.xlu0 %1940
        %v1944 = vadd.f32 %v1930, %v1939
        %v1945 = vadd.f32 %v1931, %v1941
        %v1946 = vld [vmem:[#allocation2 + $0x4] sm:$0xff]
        %v1947 = vld [vmem:[#allocation2 + $0xc] sm:$0xff]
        %s1948 = sld [smem:[#allocation8 + $0x38]]
        %v1949 = vstv %s1948
        %v1950 = vmul.f32 %v1946, %v1949
        %v1951 = vmul.f32 %v1947, %v1949
        %v1952 = vadd.f32 %v1944, %v1950
        %v1953 = vadd.f32 %v1945, %v1951
        %v1954 = vld [vmem:[%s1207 + $0x4] sm:$0xff]
        %v1955 = vld [vmem:[%s1207 + $0xc] sm:$0xff]
        %s1956 = sld [smem:[#allocation8 + $0x39]]
        %v1957 = vstv %s1956
        %v1958 = vmul.f32 %v1954, %v1957
        %v1959 = vmul.f32 %v1955, %v1957
        %v1960 = vadd.f32 %v1952, %v1958
        %v1961 = vadd.f32 %v1953, %v1959
        %s1962 = sld [smem:[#allocation8 + $0x3a]]
        %v1963 = vstv %s1962
        %v1964 = vmul.f32 %v1946, %v1963
        %v1965 = vmul.f32 %v1947, %v1963
        %1968 = vrot.lane.b32.xlu0 %v1964, 127
        %v1969 = vpop.permute.xlu0 %1968
        %1970 = vrot.lane.b32.xlu0 %v1965, 127
        %v1971 = vpop.permute.xlu0 %1970
        %v1974 = vadd.f32 %v1960, %v1969
        %v1975 = vadd.f32 %v1961, %v1971
        %s1976 = sld [smem:[#allocation8 + $0x3b]]
        %v1977 = vstv %s1976
        %v1978 = vmul.f32 %v1954, %v1977
        %v1979 = vmul.f32 %v1955, %v1977
        %1982 = vrot.lane.b32.xlu0 %v1978, 127
        %v1983 = vpop.permute.xlu0 %1982
        %1984 = vrot.lane.b32.xlu0 %v1979, 127
        %v1985 = vpop.permute.xlu0 %1984
        %v1988 = vadd.f32 %v1974, %v1983
        %v1989 = vadd.f32 %v1975, %v1985
        %s1990 = sld [smem:[#allocation8 + $0x3c]]
        %v1991 = vstv %s1990
        %v1992 = vmul.f32 %v1946, %v1991
        %v1993 = vmul.f32 %v1947, %v1991
        %1996 = vrot.lane.b32.xlu0 %v1992, 126
        %v1997 = vpop.permute.xlu0 %1996
        %1998 = vrot.lane.b32.xlu0 %v1993, 126
        %v1999 = vpop.permute.xlu0 %1998
        %v2002 = vadd.f32 %v1988, %v1997
        %v2003 = vadd.f32 %v1989, %v1999
        %s2004 = sld [smem:[#allocation8 + $0x3d]]
        %v2005 = vstv %s2004
        %v2006 = vmul.f32 %v1954, %v2005
        %v2007 = vmul.f32 %v1955, %v2005
        %2010 = vrot.lane.b32.xlu0 %v2006, 126
        %v2011 = vpop.permute.xlu0 %2010
        %2012 = vrot.lane.b32.xlu0 %v2007, 126
        %v2013 = vpop.permute.xlu0 %2012
        %v2016 = vadd.f32 %v2002, %v2011
        %v2017 = vadd.f32 %v2003, %v2013
        %s2018 = sld [smem:[#allocation8 + $0x3e]]
        %v2019 = vstv %s2018
        %v2020 = vmul.f32 %v1946, %v2019
        %v2021 = vmul.f32 %v1947, %v2019
        %2024 = vrot.lane.b32.xlu0 %v2020, 125
        %v2025 = vpop.permute.xlu0 %2024
        %2026 = vrot.lane.b32.xlu0 %v2021, 125
        %v2027 = vpop.permute.xlu0 %2026
        %v2030 = vadd.f32 %v2016, %v2025
        %v2031 = vadd.f32 %v2017, %v2027
        %s2032 = sld [smem:[#allocation8 + $0x3f]]
        %v2033 = vstv %s2032
        %v2034 = vmul.f32 %v1954, %v2033
        %v2035 = vmul.f32 %v1955, %v2033
        %2038 = vrot.lane.b32.xlu0 %v2034, 125
        %v2039 = vpop.permute.xlu0 %2038
        %2040 = vrot.lane.b32.xlu0 %v2035, 125
        %v2041 = vpop.permute.xlu0 %2040
        %v2044 = vadd.f32 %v2030, %v2039
        %v2045 = vadd.f32 %v2031, %v2041
        %s2046 = sld [smem:[#allocation8 + $0x40]]
        %v2047 = vstv %s2046
        %v2048 = vmul.f32 %v1946, %v2047
        %v2049 = vmul.f32 %v1947, %v2047
        %2052 = vrot.lane.b32.xlu0 %v2048, 124
        %v2053 = vpop.permute.xlu0 %2052
        %2054 = vrot.lane.b32.xlu0 %v2049, 124
        %v2055 = vpop.permute.xlu0 %2054
        %v2058 = vadd.f32 %v2044, %v2053
        %v2059 = vadd.f32 %v2045, %v2055
        %s2060 = sld [smem:[#allocation8 + $0x41]]
        %v2061 = vstv %s2060
        %v2062 = vmul.f32 %v1954, %v2061
        %v2063 = vmul.f32 %v1955, %v2061
        %2066 = vrot.lane.b32.xlu0 %v2062, 124
        %v2067 = vpop.permute.xlu0 %2066
        %2068 = vrot.lane.b32.xlu0 %v2063, 124
        %v2069 = vpop.permute.xlu0 %2068
        %v2072 = vadd.f32 %v2058, %v2067
        %v2073 = vadd.f32 %v2059, %v2069
        %s2074 = sld [smem:[#allocation8 + $0x42]]
        %v2075 = vstv %s2074
        %v2076 = vmul.f32 %v1946, %v2075
        %v2077 = vmul.f32 %v1947, %v2075
        %2080 = vrot.lane.b32.xlu0 %v2076, 123
        %v2081 = vpop.permute.xlu0 %2080
        %2082 = vrot.lane.b32.xlu0 %v2077, 123
        %v2083 = vpop.permute.xlu0 %2082
        %v2086 = vadd.f32 %v2072, %v2081
        %v2087 = vadd.f32 %v2073, %v2083
        %s2088 = sld [smem:[#allocation8 + $0x43]]
        %v2089 = vstv %s2088
        %v2090 = vmul.f32 %v1954, %v2089
        %v2091 = vmul.f32 %v1955, %v2089
        %2094 = vrot.lane.b32.xlu0 %v2090, 123
        %v2095 = vpop.permute.xlu0 %2094
        %2096 = vrot.lane.b32.xlu0 %v2091, 123
        %v2097 = vpop.permute.xlu0 %2096
        %v2100 = vadd.f32 %v2086, %v2095
        %v2101 = vadd.f32 %v2087, %v2097
        %s2102 = sld [smem:[#allocation8 + $0x44]]
        %v2103 = vstv %s2102
        %v2104 = vmul.f32 %v1946, %v2103
        %v2105 = vmul.f32 %v1947, %v2103
        %2108 = vrot.lane.b32.xlu0 %v2104, 122
        %v2109 = vpop.permute.xlu0 %2108
        %2110 = vrot.lane.b32.xlu0 %v2105, 122
        %v2111 = vpop.permute.xlu0 %2110
        %v2114 = vadd.f32 %v2100, %v2109
        %v2115 = vadd.f32 %v2101, %v2111
        %s2116 = sld [smem:[#allocation8 + $0x45]]
        %v2117 = vstv %s2116
        %v2118 = vmul.f32 %v1954, %v2117
        %v2119 = vmul.f32 %v1955, %v2117
        %2122 = vrot.lane.b32.xlu0 %v2118, 122
        %v2123 = vpop.permute.xlu0 %2122
        %2124 = vrot.lane.b32.xlu0 %v2119, 122
        %v2125 = vpop.permute.xlu0 %2124
        %v2128 = vadd.f32 %v2114, %v2123
        %v2129 = vadd.f32 %v2115, %v2125
        %v2130 = vld [vmem:[#allocation2 + $0x5] sm:$0xff]
        %v2131 = vld [vmem:[#allocation2 + $0xd] sm:$0xff]
        %s2132 = sld [smem:[#allocation8 + $0x46]]
        %v2133 = vstv %s2132
        %v2134 = vmul.f32 %v2130, %v2133
        %v2135 = vmul.f32 %v2131, %v2133
        %v2136 = vadd.f32 %v2128, %v2134
        %v2137 = vadd.f32 %v2129, %v2135
        %v2138 = vld [vmem:[%s1207 + $0x5] sm:$0xff]
        %v2139 = vld [vmem:[%s1207 + $0xd] sm:$0xff]
        %s2140 = sld [smem:[#allocation8 + $0x47]]
        %v2141 = vstv %s2140
        %v2142 = vmul.f32 %v2138, %v2141
        %v2143 = vmul.f32 %v2139, %v2141
        %v2144 = vadd.f32 %v2136, %v2142
        %v2145 = vadd.f32 %v2137, %v2143
        %s2146 = sld [smem:[#allocation8 + $0x48]]
        %v2147 = vstv %s2146
        %v2148 = vmul.f32 %v2130, %v2147
        %v2149 = vmul.f32 %v2131, %v2147
        %2152 = vrot.lane.b32.xlu0 %v2148, 127
        %v2153 = vpop.permute.xlu0 %2152
        %2154 = vrot.lane.b32.xlu0 %v2149, 127
        %v2155 = vpop.permute.xlu0 %2154
        %v2158 = vadd.f32 %v2144, %v2153
        %v2159 = vadd.f32 %v2145, %v2155
        %s2160 = sld [smem:[#allocation8 + $0x49]]
        %v2161 = vstv %s2160
        %v2162 = vmul.f32 %v2138, %v2161
        %v2163 = vmul.f32 %v2139, %v2161
        %2166 = vrot.lane.b32.xlu0 %v2162, 127
        %v2167 = vpop.permute.xlu0 %2166
        %2168 = vrot.lane.b32.xlu0 %v2163, 127
        %v2169 = vpop.permute.xlu0 %2168
        %v2172 = vadd.f32 %v2158, %v2167
        %v2173 = vadd.f32 %v2159, %v2169
        %s2174 = sld [smem:[#allocation8 + $0x4a]]
        %v2175 = vstv %s2174
        %v2176 = vmul.f32 %v2130, %v2175
        %v2177 = vmul.f32 %v2131, %v2175
        %2180 = vrot.lane.b32.xlu0 %v2176, 126
        %v2181 = vpop.permute.xlu0 %2180
        %2182 = vrot.lane.b32.xlu0 %v2177, 126
        %v2183 = vpop.permute.xlu0 %2182
        %v2186 = vadd.f32 %v2172, %v2181
        %v2187 = vadd.f32 %v2173, %v2183
        %s2188 = sld [smem:[#allocation8 + $0x4b]]
        %v2189 = vstv %s2188
        %v2190 = vmul.f32 %v2138, %v2189
        %v2191 = vmul.f32 %v2139, %v2189
        %2194 = vrot.lane.b32.xlu0 %v2190, 126
        %v2195 = vpop.permute.xlu0 %2194
        %2196 = vrot.lane.b32.xlu0 %v2191, 126
        %v2197 = vpop.permute.xlu0 %2196
        %v2200 = vadd.f32 %v2186, %v2195
        %v2201 = vadd.f32 %v2187, %v2197
        %s2202 = sld [smem:[#allocation8 + $0x4c]]
        %v2203 = vstv %s2202
        %v2204 = vmul.f32 %v2130, %v2203
        %v2205 = vmul.f32 %v2131, %v2203
        %2208 = vrot.lane.b32.xlu0 %v2204, 125
        %v2209 = vpop.permute.xlu0 %2208
        %2210 = vrot.lane.b32.xlu0 %v2205, 125
        %v2211 = vpop.permute.xlu0 %2210
        %v2214 = vadd.f32 %v2200, %v2209
        %v2215 = vadd.f32 %v2201, %v2211
        %s2216 = sld [smem:[#allocation8 + $0x4d]]
        %v2217 = vstv %s2216
        %v2218 = vmul.f32 %v2138, %v2217
        %v2219 = vmul.f32 %v2139, %v2217
        %2222 = vrot.lane.b32.xlu0 %v2218, 125
        %v2223 = vpop.permute.xlu0 %2222
        %2224 = vrot.lane.b32.xlu0 %v2219, 125
        %v2225 = vpop.permute.xlu0 %2224
        %v2228 = vadd.f32 %v2214, %v2223
        %v2229 = vadd.f32 %v2215, %v2225
        %s2230 = sld [smem:[#allocation8 + $0x4e]]
        %v2231 = vstv %s2230
        %v2232 = vmul.f32 %v2130, %v2231
        %v2233 = vmul.f32 %v2131, %v2231
        %2236 = vrot.lane.b32.xlu0 %v2232, 124
        %v2237 = vpop.permute.xlu0 %2236
        %2238 = vrot.lane.b32.xlu0 %v2233, 124
        %v2239 = vpop.permute.xlu0 %2238
        %v2242 = vadd.f32 %v2228, %v2237
        %v2243 = vadd.f32 %v2229, %v2239
        %s2244 = sld [smem:[#allocation8 + $0x4f]]
        %v2245 = vstv %s2244
        %v2246 = vmul.f32 %v2138, %v2245
        %v2247 = vmul.f32 %v2139, %v2245
        %2250 = vrot.lane.b32.xlu0 %v2246, 124
        %v2251 = vpop.permute.xlu0 %2250
        %2252 = vrot.lane.b32.xlu0 %v2247, 124
        %v2253 = vpop.permute.xlu0 %2252
        %v2256 = vadd.f32 %v2242, %v2251
        %v2257 = vadd.f32 %v2243, %v2253
        %s2258 = sld [smem:[#allocation8 + $0x50]]
        %v2259 = vstv %s2258
        %v2260 = vmul.f32 %v2130, %v2259
        %v2261 = vmul.f32 %v2131, %v2259
        %2264 = vrot.lane.b32.xlu0 %v2260, 123
        %v2265 = vpop.permute.xlu0 %2264
        %2266 = vrot.lane.b32.xlu0 %v2261, 123
        %v2267 = vpop.permute.xlu0 %2266
        %v2270 = vadd.f32 %v2256, %v2265
        %v2271 = vadd.f32 %v2257, %v2267
        %s2272 = sld [smem:[#allocation8 + $0x51]]
        %v2273 = vstv %s2272
        %v2274 = vmul.f32 %v2138, %v2273
        %v2275 = vmul.f32 %v2139, %v2273
        %2278 = vrot.lane.b32.xlu0 %v2274, 123
        %v2279 = vpop.permute.xlu0 %2278
        %2280 = vrot.lane.b32.xlu0 %v2275, 123
        %v2281 = vpop.permute.xlu0 %2280
        %v2284 = vadd.f32 %v2270, %v2279
        %v2285 = vadd.f32 %v2271, %v2281
        %s2286 = sld [smem:[#allocation8 + $0x52]]
        %v2287 = vstv %s2286
        %v2288 = vmul.f32 %v2130, %v2287
        %v2289 = vmul.f32 %v2131, %v2287
        %2292 = vrot.lane.b32.xlu0 %v2288, 122
        %v2293 = vpop.permute.xlu0 %2292
        %2294 = vrot.lane.b32.xlu0 %v2289, 122
        %v2295 = vpop.permute.xlu0 %2294
        %v2298 = vadd.f32 %v2284, %v2293
        %v2299 = vadd.f32 %v2285, %v2295
        %s2300 = sld [smem:[#allocation8 + $0x53]]
        %v2301 = vstv %s2300
        %v2302 = vmul.f32 %v2138, %v2301
        %v2303 = vmul.f32 %v2139, %v2301
        %2306 = vrot.lane.b32.xlu0 %v2302, 122
        %v2307 = vpop.permute.xlu0 %2306
        %2308 = vrot.lane.b32.xlu0 %v2303, 122
        %v2309 = vpop.permute.xlu0 %2308
        %v2312 = vadd.f32 %v2298, %v2307
        %v2313 = vadd.f32 %v2299, %v2309
        %v2314 = vld [vmem:[#allocation2 + $0x6] sm:$0xff]
        %v2315 = vld [vmem:[#allocation2 + $0xe] sm:$0xff]
        %s2316 = sld [smem:[#allocation8 + $0x54]]
        %v2317 = vstv %s2316
        %v2318 = vmul.f32 %v2314, %v2317
        %v2319 = vmul.f32 %v2315, %v2317
        %v2320 = vadd.f32 %v2312, %v2318
        %v2321 = vadd.f32 %v2313, %v2319
        %v2322 = vld [vmem:[%s1207 + $0x6] sm:$0xff]
        %v2323 = vld [vmem:[%s1207 + $0xe] sm:$0xff]
        %s2324 = sld [smem:[#allocation8 + $0x55]]
        %v2325 = vstv %s2324
        %v2326 = vmul.f32 %v2322, %v2325
        %v2327 = vmul.f32 %v2323, %v2325
        %v2328 = vadd.f32 %v2320, %v2326
        %v2329 = vadd.f32 %v2321, %v2327
        %s2330 = sld [smem:[#allocation8 + $0x56]]
        %v2331 = vstv %s2330
        %v2332 = vmul.f32 %v2314, %v2331
        %v2333 = vmul.f32 %v2315, %v2331
        %2336 = vrot.lane.b32.xlu0 %v2332, 127
        %v2337 = vpop.permute.xlu0 %2336
        %2338 = vrot.lane.b32.xlu0 %v2333, 127
        %v2339 = vpop.permute.xlu0 %2338
        %v2342 = vadd.f32 %v2328, %v2337
        %v2343 = vadd.f32 %v2329, %v2339
        %s2344 = sld [smem:[#allocation8 + $0x57]]
        %v2345 = vstv %s2344
        %v2346 = vmul.f32 %v2322, %v2345
        %v2347 = vmul.f32 %v2323, %v2345
        %2350 = vrot.lane.b32.xlu0 %v2346, 127
        %v2351 = vpop.permute.xlu0 %2350
        %2352 = vrot.lane.b32.xlu0 %v2347, 127
        %v2353 = vpop.permute.xlu0 %2352
        %v2356 = vadd.f32 %v2342, %v2351
        %v2357 = vadd.f32 %v2343, %v2353
        %s2358 = sld [smem:[#allocation8 + $0x58]]
        %v2359 = vstv %s2358
        %v2360 = vmul.f32 %v2314, %v2359
        %v2361 = vmul.f32 %v2315, %v2359
        %2364 = vrot.lane.b32.xlu0 %v2360, 126
        %v2365 = vpop.permute.xlu0 %2364
        %2366 = vrot.lane.b32.xlu0 %v2361, 126
        %v2367 = vpop.permute.xlu0 %2366
        %v2370 = vadd.f32 %v2356, %v2365
        %v2371 = vadd.f32 %v2357, %v2367
        %s2372 = sld [smem:[#allocation8 + $0x59]]
        %v2373 = vstv %s2372
        %v2374 = vmul.f32 %v2322, %v2373
        %v2375 = vmul.f32 %v2323, %v2373
        %2378 = vrot.lane.b32.xlu0 %v2374, 126
        %v2379 = vpop.permute.xlu0 %2378
        %2380 = vrot.lane.b32.xlu0 %v2375, 126
        %v2381 = vpop.permute.xlu0 %2380
        %v2384 = vadd.f32 %v2370, %v2379
        %v2385 = vadd.f32 %v2371, %v2381
        %s2386 = sld [smem:[#allocation8 + $0x5a]]
        %v2387 = vstv %s2386
        %v2388 = vmul.f32 %v2314, %v2387
        %v2389 = vmul.f32 %v2315, %v2387
        %2392 = vrot.lane.b32.xlu0 %v2388, 125
        %v2393 = vpop.permute.xlu0 %2392
        %2394 = vrot.lane.b32.xlu0 %v2389, 125
        %v2395 = vpop.permute.xlu0 %2394
        %v2398 = vadd.f32 %v2384, %v2393
        %v2399 = vadd.f32 %v2385, %v2395
        %s2400 = sld [smem:[#allocation8 + $0x5b]]
        %v2401 = vstv %s2400
        %v2402 = vmul.f32 %v2322, %v2401
        %v2403 = vmul.f32 %v2323, %v2401
        %2406 = vrot.lane.b32.xlu0 %v2402, 125
        %v2407 = vpop.permute.xlu0 %2406
        %2408 = vrot.lane.b32.xlu0 %v2403, 125
        %v2409 = vpop.permute.xlu0 %2408
        %v2412 = vadd.f32 %v2398, %v2407
        %v2413 = vadd.f32 %v2399, %v2409
        %s2414 = sld [smem:[#allocation8 + $0x5c]]
        %v2415 = vstv %s2414
        %v2416 = vmul.f32 %v2314, %v2415
        %v2417 = vmul.f32 %v2315, %v2415
        %2420 = vrot.lane.b32.xlu0 %v2416, 124
        %v2421 = vpop.permute.xlu0 %2420
        %2422 = vrot.lane.b32.xlu0 %v2417, 124
        %v2423 = vpop.permute.xlu0 %2422
        %v2426 = vadd.f32 %v2412, %v2421
        %v2427 = vadd.f32 %v2413, %v2423
        %s2428 = sld [smem:[#allocation8 + $0x5d]]
        %v2429 = vstv %s2428
        %v2430 = vmul.f32 %v2322, %v2429
        %v2431 = vmul.f32 %v2323, %v2429
        %2434 = vrot.lane.b32.xlu0 %v2430, 124
        %v2435 = vpop.permute.xlu0 %2434
        %2436 = vrot.lane.b32.xlu0 %v2431, 124
        %v2437 = vpop.permute.xlu0 %2436
        %v2440 = vadd.f32 %v2426, %v2435
        %v2441 = vadd.f32 %v2427, %v2437
        %s2442 = sld [smem:[#allocation8 + $0x5e]]
        %v2443 = vstv %s2442
        %v2444 = vmul.f32 %v2314, %v2443
        %v2445 = vmul.f32 %v2315, %v2443
        %2448 = vrot.lane.b32.xlu0 %v2444, 123
        %v2449 = vpop.permute.xlu0 %2448
        %2450 = vrot.lane.b32.xlu0 %v2445, 123
        %v2451 = vpop.permute.xlu0 %2450
        %v2454 = vadd.f32 %v2440, %v2449
        %v2455 = vadd.f32 %v2441, %v2451
        %s2456 = sld [smem:[#allocation8 + $0x5f]]
        %v2457 = vstv %s2456
        %v2458 = vmul.f32 %v2322, %v2457
        %v2459 = vmul.f32 %v2323, %v2457
        %2462 = vrot.lane.b32.xlu0 %v2458, 123
        %v2463 = vpop.permute.xlu0 %2462
        %2464 = vrot.lane.b32.xlu0 %v2459, 123
        %v2465 = vpop.permute.xlu0 %2464
        %v2468 = vadd.f32 %v2454, %v2463
        %v2469 = vadd.f32 %v2455, %v2465
        %s2470 = sld [smem:[#allocation8 + $0x60]]
        %v2471 = vstv %s2470
        %v2472 = vmul.f32 %v2314, %v2471
        %v2473 = vmul.f32 %v2315, %v2471
        %2476 = vrot.lane.b32.xlu0 %v2472, 122
        %v2477 = vpop.permute.xlu0 %2476
        %2478 = vrot.lane.b32.xlu0 %v2473, 122
        %v2479 = vpop.permute.xlu0 %2478
        %v2482 = vadd.f32 %v2468, %v2477
        %v2483 = vadd.f32 %v2469, %v2479
        %s2484 = sld [smem:[#allocation8 + $0x61]]
        %v2485 = vstv %s2484
        %v2486 = vmul.f32 %v2322, %v2485
        %v2487 = vmul.f32 %v2323, %v2485
        %2490 = vrot.lane.b32.xlu0 %v2486, 122
        %v2491 = vpop.permute.xlu0 %2490
        %2492 = vrot.lane.b32.xlu0 %v2487, 122
        %v2493 = vpop.permute.xlu0 %2492
        %v2496 = vadd.f32 %v2482, %v2491
        %v2497 = vadd.f32 %v2483, %v2493
        %s2498 = sld [smem:[#allocation3]]
        %v2499 = vstv %s2498
        %v2500 = vadd.f32 %v2496, %v2499
        %v2501 = vadd.f32 %v2497, %v2499
        %v2502 = vxor.u32 %v2500, 2147483648
        %v2503 = vxor.u32 %v2501, 2147483648
        %v2504 = vmul.f32 %v2502, 1.442695
        %v2505 = vpow.pop %v2504
        %v2506 = vmul.f32 %v2503, 1.442695
        %v2507 = vpow.pop %v2506
        %v2508 = vadd.f32 %v2505, 1.0
        %v2509 = vadd.f32 %v2507, 1.0
        %v2510 = vrcp.pop %v2508
        %v2511 = vmul.f32 1.0, %v2510
        %v2512 = vrcp.pop %v2509
        %v2513 = vmul.f32 1.0, %v2512
        %v2514 = vlaneseq
        %v2515 = vshrl.u32 %v2514, 7
        %v2516 = vsub.s32 0, %v2515
        %v2517 = vrot.slane %v2511, %v2516
        %2519 = vbcast.lane.b32.xlu0 %v2517, 256
        %v2520 = vpop.permute.xlu0 %2519
        %s2522 = sor.u32 256, 8
        %2523 = vbcast.lane.b32.xlu0 %v2517, %s2522
        %v2524 = vpop.permute.xlu0 %2523
        %v2525 = vlaneseq
        %v2526 = vshrl.u32 %v2525, 7
        %v2527 = vsub.s32 1, %v2526
        %v2528 = vrot.slane %v2511, %v2527
        %2530 = vbcast.lane.b32.xlu0 %v2528, 256
        %v2531 = vpop.permute.xlu0 %2530
        %s2533 = sor.u32 256, 8
        %2534 = vbcast.lane.b32.xlu0 %v2528, %s2533
        %v2535 = vpop.permute.xlu0 %2534
        %v2536 = vlaneseq
        %v2537 = vshrl.u32 %v2536, 7
        %v2538 = vsub.s32 2, %v2537
        %v2539 = vrot.slane %v2511, %v2538
        %2541 = vbcast.lane.b32.xlu0 %v2539, 256
        %v2542 = vpop.permute.xlu0 %2541
        %s2544 = sor.u32 256, 8
        %2545 = vbcast.lane.b32.xlu0 %v2539, %s2544
        %v2546 = vpop.permute.xlu0 %2545
        %v2547 = vlaneseq
        %v2548 = vshrl.u32 %v2547, 7
        %v2549 = vsub.s32 3, %v2548
        %v2550 = vrot.slane %v2511, %v2549
        %2552 = vbcast.lane.b32.xlu0 %v2550, 256
        %v2553 = vpop.permute.xlu0 %2552
        %s2555 = sor.u32 256, 8
        %2556 = vbcast.lane.b32.xlu0 %v2550, %s2555
        %v2557 = vpop.permute.xlu0 %2556
        %v2558 = vlaneseq
        %v2559 = vshrl.u32 %v2558, 7
        %v2560 = vsub.s32 4, %v2559
        %v2561 = vrot.slane %v2511, %v2560
        %2563 = vbcast.lane.b32.xlu0 %v2561, 256
        %v2564 = vpop.permute.xlu0 %2563
        %s2566 = sor.u32 256, 8
        %2567 = vbcast.lane.b32.xlu0 %v2561, %s2566
        %v2568 = vpop.permute.xlu0 %2567
        %v2569 = vlaneseq
        %v2570 = vshrl.u32 %v2569, 7
        %v2571 = vsub.s32 5, %v2570
        %v2572 = vrot.slane %v2511, %v2571
        %2574 = vbcast.lane.b32.xlu0 %v2572, 256
        %v2575 = vpop.permute.xlu0 %2574
        %s2577 = sor.u32 256, 8
        %2578 = vbcast.lane.b32.xlu0 %v2572, %s2577
        %v2579 = vpop.permute.xlu0 %2578
        %v2580 = vlaneseq
        %v2581 = vshrl.u32 %v2580, 7
        %v2582 = vsub.s32 6, %v2581
        %v2583 = vrot.slane %v2511, %v2582
        %2585 = vbcast.lane.b32.xlu0 %v2583, 256
        %v2586 = vpop.permute.xlu0 %2585
        %s2588 = sor.u32 256, 8
        %2589 = vbcast.lane.b32.xlu0 %v2583, %s2588
        %v2590 = vpop.permute.xlu0 %2589
        %v2591 = vlaneseq
        %v2592 = vshrl.u32 %v2591, 7
        %v2593 = vsub.s32 7, %v2592
        %v2594 = vrot.slane %v2511, %v2593
        %2596 = vbcast.lane.b32.xlu0 %v2594, 256
        %v2597 = vpop.permute.xlu0 %2596
        %s2599 = sor.u32 256, 8
        %2600 = vbcast.lane.b32.xlu0 %v2594, %s2599
        %v2601 = vpop.permute.xlu0 %2600
        %v2602 = vlaneseq
        %v2603 = vshrl.u32 %v2602, 7
        %v2604 = vsub.s32 0, %v2603
        %v2605 = vrot.slane %v2513, %v2604
        %2607 = vbcast.lane.b32.xlu0 %v2605, 256
        %v2608 = vpop.permute.xlu0 %2607
        %s2610 = sor.u32 256, 8
        %2611 = vbcast.lane.b32.xlu0 %v2605, %s2610
        %v2612 = vpop.permute.xlu0 %2611
        %v2613 = vlaneseq
        %v2614 = vshrl.u32 %v2613, 7
        %v2615 = vsub.s32 1, %v2614
        %v2616 = vrot.slane %v2513, %v2615
        %2618 = vbcast.lane.b32.xlu0 %v2616, 256
        %v2619 = vpop.permute.xlu0 %2618
        %s2621 = sor.u32 256, 8
        %2622 = vbcast.lane.b32.xlu0 %v2616, %s2621
        %v2623 = vpop.permute.xlu0 %2622
        %v2624 = vlaneseq
        %v2625 = vshrl.u32 %v2624, 7
        %v2626 = vsub.s32 2, %v2625
        %v2627 = vrot.slane %v2513, %v2626
        %2629 = vbcast.lane.b32.xlu0 %v2627, 256
        %v2630 = vpop.permute.xlu0 %2629
        %s2632 = sor.u32 256, 8
        %2633 = vbcast.lane.b32.xlu0 %v2627, %s2632
        %v2634 = vpop.permute.xlu0 %2633
        %v2635 = vlaneseq
        %v2636 = vshrl.u32 %v2635, 7
        %v2637 = vsub.s32 3, %v2636
        %v2638 = vrot.slane %v2513, %v2637
        %2640 = vbcast.lane.b32.xlu0 %v2638, 256
        %v2641 = vpop.permute.xlu0 %2640
        %s2643 = sor.u32 256, 8
        %2644 = vbcast.lane.b32.xlu0 %v2638, %s2643
        %v2645 = vpop.permute.xlu0 %2644
        %v2646 = vlaneseq
        %v2647 = vshrl.u32 %v2646, 7
        %v2648 = vsub.s32 4, %v2647
        %v2649 = vrot.slane %v2513, %v2648
        %2651 = vbcast.lane.b32.xlu0 %v2649, 256
        %v2652 = vpop.permute.xlu0 %2651
        %s2654 = sor.u32 256, 8
        %2655 = vbcast.lane.b32.xlu0 %v2649, %s2654
        %v2656 = vpop.permute.xlu0 %2655
        %v2657 = vlaneseq
        %v2658 = vshrl.u32 %v2657, 7
        %v2659 = vsub.s32 5, %v2658
        %v2660 = vrot.slane %v2513, %v2659
        %2662 = vbcast.lane.b32.xlu0 %v2660, 256
        %v2663 = vpop.permute.xlu0 %2662
        %s2665 = sor.u32 256, 8
        %2666 = vbcast.lane.b32.xlu0 %v2660, %s2665
        %v2667 = vpop.permute.xlu0 %2666
        %v2668 = vlaneseq
        %v2669 = vshrl.u32 %v2668, 7
        %v2670 = vsub.s32 6, %v2669
        %v2671 = vrot.slane %v2513, %v2670
        %2673 = vbcast.lane.b32.xlu0 %v2671, 256
        %v2674 = vpop.permute.xlu0 %2673
        %s2676 = sor.u32 256, 8
        %2677 = vbcast.lane.b32.xlu0 %v2671, %s2676
        %v2678 = vpop.permute.xlu0 %2677
        %v2679 = vlaneseq
        %v2680 = vshrl.u32 %v2679, 7
        %v2681 = vsub.s32 7, %v2680
        %v2682 = vrot.slane %v2513, %v2681
        %2684 = vbcast.lane.b32.xlu0 %v2682, 256
        %v2685 = vpop.permute.xlu0 %2684
        %s2687 = sor.u32 256, 8
        %2688 = vbcast.lane.b32.xlu0 %v2682, %s2687
        %v2689 = vpop.permute.xlu0 %2688
        %v2690 = vmul.f32 %v607, %v2520
        %v2691 = vmul.f32 %v608, %v2524
        %v2692 = vmul.f32 %v609, %v2531
        %v2693 = vmul.f32 %v610, %v2535
        %v2694 = vmul.f32 %v611, %v2542
        %v2695 = vmul.f32 %v612, %v2546
        %v2696 = vmul.f32 %v613, %v2553
        %v2697 = vmul.f32 %v614, %v2557
        %v2698 = vmul.f32 %v615, %v2564
        %v2699 = vmul.f32 %v616, %v2568
        %v2700 = vmul.f32 %v617, %v2575
        %v2701 = vmul.f32 %v618, %v2579
        %v2702 = vmul.f32 %v619, %v2586
        %v2703 = vmul.f32 %v620, %v2590
        %v2704 = vmul.f32 %v621, %v2597
        %v2705 = vmul.f32 %v622, %v2601
        %v2706 = vmul.f32 %v623, %v2608
        %v2707 = vmul.f32 %v624, %v2612
        %v2708 = vmul.f32 %v625, %v2619
        %v2709 = vmul.f32 %v626, %v2623
        %v2710 = vmul.f32 %v627, %v2630
        %v2711 = vmul.f32 %v628, %v2634
        %v2712 = vmul.f32 %v629, %v2641
        %v2713 = vmul.f32 %v630, %v2645
        %v2714 = vmul.f32 %v631, %v2652
        %v2715 = vmul.f32 %v632, %v2656
        %v2716 = vmul.f32 %v633, %v2663
        %v2717 = vmul.f32 %v634, %v2667
        %v2718 = vmul.f32 %v635, %v2674
        %v2719 = vmul.f32 %v636, %v2678
        %v2720 = vmul.f32 %v637, %v2685
        %v2721 = vmul.f32 %v638, %v2689
        %2722 = vst [vmem:[%s311] sm:$0xff] %v2690
        %2723 = vst [vmem:[%s311 + $0x8] sm:$0xff] %v2691
        %2724 = vst [vmem:[%s311 + $0x10] sm:$0xff] %v2692
        %2725 = vst [vmem:[%s311 + $0x18] sm:$0xff] %v2693
        %2726 = vst [vmem:[%s311 + $0x20] sm:$0xff] %v2694
        %2727 = vst [vmem:[%s311 + $0x28] sm:$0xff] %v2695
        %2728 = vst [vmem:[%s311 + $0x30] sm:$0xff] %v2696
        %2729 = vst [vmem:[%s311 + $0x38] sm:$0xff] %v2697
        %2730 = vst [vmem:[%s311 + $0x40] sm:$0xff] %v2698
        %2731 = vst [vmem:[%s311 + $0x48] sm:$0xff] %v2699
        %2732 = vst [vmem:[%s311 + $0x50] sm:$0xff] %v2700
        %2733 = vst [vmem:[%s311 + $0x58] sm:$0xff] %v2701
        %2734 = vst [vmem:[%s311 + $0x60] sm:$0xff] %v2702
        %2735 = vst [vmem:[%s311 + $0x68] sm:$0xff] %v2703
        %2736 = vst [vmem:[%s311 + $0x70] sm:$0xff] %v2704
        %2737 = vst [vmem:[%s311 + $0x78] sm:$0xff] %v2705
        %2738 = vst [vmem:[%s311 + $0x80] sm:$0xff] %v2706
        %2739 = vst [vmem:[%s311 + $0x88] sm:$0xff] %v2707
        %2740 = vst [vmem:[%s311 + $0x90] sm:$0xff] %v2708
        %2741 = vst [vmem:[%s311 + $0x98] sm:$0xff] %v2709
        %2742 = vst [vmem:[%s311 + $0xa0] sm:$0xff] %v2710
        %2743 = vst [vmem:[%s311 + $0xa8] sm:$0xff] %v2711
        %2744 = vst [vmem:[%s311 + $0xb0] sm:$0xff] %v2712
        %2745 = vst [vmem:[%s311 + $0xb8] sm:$0xff] %v2713
        %2746 = vst [vmem:[%s311 + $0xc0] sm:$0xff] %v2714
        %2747 = vst [vmem:[%s311 + $0xc8] sm:$0xff] %v2715
        %2748 = vst [vmem:[%s311 + $0xd0] sm:$0xff] %v2716
        %2749 = vst [vmem:[%s311 + $0xd8] sm:$0xff] %v2717
        %2750 = vst [vmem:[%s311 + $0xe0] sm:$0xff] %v2718
        %2751 = vst [vmem:[%s311 + $0xe8] sm:$0xff] %v2719
        %2752 = vst [vmem:[%s311 + $0xf0] sm:$0xff] %v2720
        %2753 = vst [vmem:[%s311 + $0xf8] sm:$0xff] %v2721
        %s2754 = sand.u32 %s186, 1
        %s2755 = scalar_lea.sflag [#allocation6], %s2754
        %s2756 = sand.u32 %s186, 1
        %s2757 = smul.addr %s2756, 256
        %s2758 = scalar_lea.vmem [#allocation9], %s2757
        // Predicated region
        $region57: #{tpu_custom_call.1} parent=47 // pred_check
          %p2759 = pneg %p196
        $region58: #{tpu_custom_call.1} parent=47 // pred_check_branch
          %2761 = sbr.rel (%p2759) target = $region60
        $region59: #{tpu_custom_call.1} parent=47 // pred_region
          %s2763 = ssub.s32 4096, 4096
          %2764 = vsyncadd %s2755, %s2763
          %s2765 = smul.addr %s26, 32
          %s2766 = smul.addr %s2765, 128
          %s2767 = scalar_lea.hbm %s7, %s2766
          %s2768 = sshll.u32 %s2758, 4
          %s2769 = int_to_ptr.vmem [resolvable:$true] %s2768
          %2774 = dma.vmem_to_hbm [thread:$0]  %s2769, 4096, %s2767, %s2755, 128, 128, 8
        $region60: #{tpu_custom_call.1} parent=47 // pred_fallthru
          _
      $region48: #{tpu_custom_call.1} parent=5 // pred_fallthru
        _
      %p2775 = scmp.le.s32.totalorder 2, %s21
      // Predicated region
      $region61: #{tpu_custom_call.1} parent=5 // pred_check
        %p2776 = pneg %p2775
      $region62: #{tpu_custom_call.1} parent=5 // pred_check_branch
        %2778 = sbr.rel (%p2776) target = $region64
      $region63: #{tpu_custom_call.1} parent=5 // pred_region
        %s2779 = ssub.s32 %s21, 2
        // Predicated region
        $region65: #{tpu_custom_call.1} parent=63 // pred_check
          %p2780 = pneg %p202
        $region66: #{tpu_custom_call.1} parent=63 // pred_check_branch
          %2782 = sbr.rel (%p2780) target = $region68
        $region67: #{tpu_custom_call.1} parent=63 // pred_region
          %s2783 = sand.u32 %s187, 1
          %s2784 = scalar_lea.sflag [#allocation6], %s2783
          %s2785 = sand.u32 %s187, 1
          %s2786 = smul.addr %s2785, 256
          %s2787 = scalar_lea.vmem [#allocation9], %s2786
          %2788 = dma.done %s2784, 4096
        $region68: #{tpu_custom_call.1} parent=63 // pred_fallthru
          _
      $region64: #{tpu_custom_call.1} parent=5 // pred_fallthru
        _
    $region6: #{tpu_custom_call.1} parent=1 // loop_footer
      %s25 = sadd.s32 1, %s21
    $region7: #{tpu_custom_call.1} parent=1 // loop_footer_branch
      %20 = sbr.rel target = $region3
    $region8: #{tpu_custom_call.1} parent=1 // loop_exit
      _
    %2789 = vsyncpa [#allocation5], 1
    %s2790 = scalar_lea.sflag [#allocation5], 1
    %2791 = vsyncpa %s2790, 1
    %2792 = vsyncpa [#allocation6], 1
    %s2793 = scalar_lea.sflag [#allocation6], 1
    %2794 = vsyncpa %s2793, 1
    %2795 = vsyncpa [#allocation7], 1
    %s2796 = scalar_lea.sflag [#allocation7], 1
    %2797 = vsyncpa %s2796, 1

</llo_original>
